<compile_context>
chip_gen: v5e
topology: v5e:2x2
jax: 0.10.0
libtpu: 0.0.40
codegen_flags: <defaults>
</compile_context>

<pallas_src>
import functools
import math

import jax
import jax.numpy as jnp
from jax.experimental import pallas as pl
from jax.experimental.pallas import tpu as pltpu

_LN_EPS = 1e-5  # PyTorch default eps (both F.layer_norm and nn.LayerNorm)


# ----------------------------------------------------------------------------- helpers
def _erf_poly(x):
    # Abramowitz & Stegun 7.1.26 rational approximation, |err| <= 1.5e-7.
    # Avoids relying on an erf lowering inside Mosaic; error far below test tolerance.
    p = 0.3275911
    a1, a2, a3, a4, a5 = 0.254829592, -0.284496736, 1.421413741, -1.453152027, 1.061405429
    sgn = jnp.where(x >= 0.0, 1.0, -1.0)
    ax = jnp.abs(x)
    # Exact divide kept here (8K elements; accuracy of the dominant activation path).
    t = 1.0 / (1.0 + p * ax)
    poly = ((((a5 * t + a4) * t + a3) * t + a2) * t + a1) * t
    return sgn * (1.0 - poly * jnp.exp(-ax * ax))


def _gelu_exact(x):
    # nn.GELU() default ("exact" erf formulation).
    return 0.5 * x * (1.0 + _erf_poly(x * 0.7071067811865476))


# ----------------------------------------------------------------------------- fused kernel
def _fused_kernel(x_ref, wqkv_ref, bqkv_ref, wo_ref, bo_ref,
                  local_ref, fcw_ref, fcm_ref, dw_ref, o_ref,
                  *, num_heads, width):
    # x_ref   : (1, N, C)   input block for one batch element
    # wqkv_ref: (C, 3C)     fused q/k/v projection (q part pre-scaled by 1/sqrt(hd))
    # bqkv_ref: (1, 3C)     fused q/k/v bias       (q part pre-scaled)
    # wo_ref  : (C, C)      attention output projection
    # bo_ref  : (1, C)      attention output bias
    # local_ref: (4, C)     rows 0..2 = depthwise conv1d taps, row 3 = its bias
    # fcw_ref : (2C, C)     fc weight (x @ w convention); rows [0,C) local, [C,2C) global
    # fcm_ref : (3, C)      row 0 = fc bias, row 1 = LN gamma, row 2 = LN beta
    # dw_ref  : (10, C)     rows 0..8 = 3x3 depthwise taps (kh*3+kw), row 9 = conv bias
    # o_ref   : (1, N, C)   output block
    f32 = jnp.float32
    x = x_ref[0].astype(f32)                                   # (N, C)
    N, C = x.shape
    hd = C // num_heads
    W = width

    # ---------------- global branch: multi-head self-attention ----------------
    qkv = (jnp.dot(x, wqkv_ref[...].astype(f32), preferred_element_type=f32)
           + bqkv_ref[0:1, :].astype(f32))                     # (N, 3C)
    q = qkv[:, 0:C]                                            # already scaled by 1/sqrt(hd)
    k = qkv[:, C:2 * C]
    v = qkv[:, 2 * C:3 * C]

    col = jax.lax.broadcasted_iota(jnp.int32, (1, C), 1)

    def head_body(h, acc):
        lo = h * hd
        mask = jnp.logical_and(col >= lo, col < lo + hd)       # (1, C) channels of head h
        qh = jnp.where(mask, q, 0.0)
        s = jax.lax.dot_general(qh, k, (((1,), (1,)), ((), ())),
                                preferred_element_type=f32)    # (N, N) == q_h @ k_h^T
        s = s - jnp.max(s, axis=-1, keepdims=True)
        p = jnp.exp(s)
        inv = pl.reciprocal(jnp.sum(p, axis=-1, keepdims=True), approx=True)   # (N, 1)
        oh = jnp.dot(p, v, preferred_element_type=f32) * inv   # deferred normalisation
        return acc + jnp.where(mask, oh, 0.0)

    attn = jax.lax.fori_loop(0, num_heads, head_body, jnp.zeros_like(q))
    x_global = (jnp.dot(attn, wo_ref[...].astype(f32), preferred_element_type=f32)
                + bo_ref[0:1, :].astype(f32))                  # (N, C)

    # ------------- local branch: depthwise Conv1d(k=3, pad=1, groups=C) -------------
    zrow = jnp.zeros((1, C), f32)
    x_prev = jnp.concatenate([zrow, x[:N - 1, :]], axis=0)     # x[n-1], zero at n=0
    x_next = jnp.concatenate([x[1:, :], zrow], axis=0)         # x[n+1], zero at n=N-1
    x_local = (local_ref[0:1, :].astype(f32) * x_prev
               + local_ref[1:2, :].astype(f32) * x
               + local_ref[2:3, :].astype(f32) * x_next
               + local_ref[3:4, :].astype(f32))

    # ------------- fc(cat[local, global]) via split weight (no lane concat) ----------
    z = (jnp.dot(x_local, fcw_ref[0:C, :].astype(f32), preferred_element_type=f32)
         + jnp.dot(x_global, fcw_ref[C:2 * C, :].astype(f32), preferred_element_type=f32)
         + fcm_ref[0:1, :].astype(f32))

    # ------------- LayerNorm over C (affine) + exact GELU ----------------------------
    m = jnp.mean(z, axis=-1, keepdims=True)
    d = z - m
    var = jnp.mean(d * d, axis=-1, keepdims=True)
    zn = (d * jax.lax.rsqrt(var + _LN_EPS) * fcm_ref[1:2, :].astype(f32)
          + fcm_ref[2:3, :].astype(f32))
    y = _gelu_exact(zn)                                        # (N, C)

    # ------------- DepthwiseConvolution: spatial LN (no affine) + 3x3 depthwise conv -
    mu = jnp.mean(y, axis=0, keepdims=True)                    # (1, C) per-(B, C) spatial mean
    dy = y - mu
    var2 = jnp.mean(dy * dy, axis=0, keepdims=True)
    yn = dy * jax.lax.rsqrt(var2 + _LN_EPS)

    row = jax.lax.broadcasted_iota(jnp.int32, (N, 1), 0)
    if W & (W - 1) == 0:                                       # static Python branch
        wcol = jnp.bitwise_and(row, W - 1)                     # n % W (W power of two)
    else:
        wcol = row % W

    left = jnp.where(wcol >= 1,
                     jnp.concatenate([zrow, yn[:N - 1, :]], axis=0), 0.0)   # yn[h, w-1]
    right = jnp.where(wcol < W - 1,
                      jnp.concatenate([yn[1:, :], zrow], axis=0), 0.0)      # yn[h, w+1]

    def tap(i):
        return dw_ref[i:i + 1, :].astype(f32)                  # (1, C) sublane-broadcast

    p_top = tap(0) * left + tap(1) * yn + tap(2) * right       # read at row h-1 (kh=0)
    p_mid = tap(3) * left + tap(4) * yn + tap(5) * right       # kh=1
    p_bot = tap(6) * left + tap(7) * yn + tap(8) * right       # read at row h+1 (kh=2)

    zW = jnp.zeros((W, C), f32)
    acc = p_mid + tap(9)                                       # accumulator starts at bias
    acc = acc + jnp.concatenate([zW, p_top[:N - W, :]], axis=0)   # += p_top[n - W], h>=1
    acc = acc + jnp.concatenate([p_bot[W:, :], zW], axis=0)       # += p_bot[n + W], h<=H-2

    o_ref[0] = acc.astype(o_ref.dtype)


# ----------------------------------------------------------------------------- param prep
def prepare_params(params, num_heads):
    """One-time packing of module parameters into kernel-friendly operands.

    Parameter layout notes (PyTorch -> here):
      local_conv.weight (C,1,3)      -> local_w[t, c] = weight[c, 0, t]
      attn.in_proj_weight (3C, C)    -> attn_w_in[i]  = in_proj_weight[i*C:(i+1)*C].T
      attn.out_proj.weight (C, C)    -> attn_w_out    = weight.T
      fc.weight (C, 2C)              -> fc_w          = weight.T
      dwconv.dwconv.weight (C,1,3,3) -> dw_w[kh, kw, c] = weight[c, 0, kh, kw]
    """
    C = params["local_b"].shape[0]
    hd = C // num_heads
    qscale = 1.0 / math.sqrt(hd)
    w_in = params["attn_w_in"]                                  # (3, C, C)
    b_in = params["attn_b_in"]                                  # (3, C)
    w_qkv = jnp.concatenate([w_in[0] * qscale, w_in[1], w_in[2]], axis=1)           # (C, 3C)
    b_qkv = jnp.concatenate([b_in[0] * qscale, b_in[1], b_in[2]], axis=0)[None, :]  # (1, 3C)
    local = jnp.concatenate([params["local_w"], params["local_b"][None, :]], axis=0)   # (4, C)
    fc_misc = jnp.stack([params["fc_b"], params["ln_gamma"], params["ln_beta"]], axis=0)  # (3, C)
    dw = jnp.concatenate([params["dw_w"].reshape(9, C),
                          params["dw_b"][None, :]], axis=0)     # (10, C)
    return {
        "w_qkv": w_qkv, "b_qkv": b_qkv,
        "w_out": params["attn_w_out"], "b_out": params["attn_b_out"][None, :],
        "local": local, "fc_w": params["fc_w"], "fc_misc": fc_misc, "dw": dw,
    }


# ----------------------------------------------------------------------------- forward
@functools.partial(jax.jit, static_argnames=("num_heads",))
def local_global_feature_mixing(x, prepped, num_heads=8):
    """x: (B, N, C), N = H*W with H == W. Returns (B, N, C)."""
    B, N, C = x.shape
    H = W = math.isqrt(N)
    if H * W != N:
        raise ValueError(f"Feature map is not square: N={N}")
    if C % num_heads != 0:
        raise ValueError("input_dim must be divisible by num_heads")

    kernel = functools.partial(_fused_kernel, num_heads=num_heads, width=W)
    return pl.pallas_call(
        kernel,
        out_shape=jax.ShapeDtypeStruct((B, N, C), x.dtype),
        grid_spec=pltpu.PrefetchScalarGridSpec(
            num_scalar_prefetch=0,
            grid=(B,),
            in_specs=[
                pl.BlockSpec((1, N, C), lambda b: (b, 0, 0)),
                pl.BlockSpec((C, 3 * C), lambda b: (0, 0)),
                pl.BlockSpec((1, 3 * C), lambda b: (0, 0)),
                pl.BlockSpec((C, C), lambda b: (0, 0)),
                pl.BlockSpec((1, C), lambda b: (0, 0)),
                pl.BlockSpec((4, C), lambda b: (0, 0)),
                pl.BlockSpec((2 * C, C), lambda b: (0, 0)),
                pl.BlockSpec((3, C), lambda b: (0, 0)),
                pl.BlockSpec((10, C), lambda b: (0, 0)),
            ],
            out_specs=pl.BlockSpec((1, N, C), lambda b: (b, 0, 0)),
        ),
        compiler_params=pltpu.CompilerParams(
            dimension_semantics=("parallel",),   # megacore over batch; default VMEM limits
        ),
    )(x, prepped["w_qkv"], prepped["b_qkv"], prepped["w_out"], prepped["b_out"],
      prepped["local"], prepped["fc_w"], prepped["fc_misc"], prepped["dw"])


# ----------------------------------------------------------------------------- reference
def _reference_forward(x, params, num_heads):
    """Pure-JAX reference matching the PyTorch module (f32, HIGHEST-precision matmuls)."""
    hp = jax.lax.Precision.HIGHEST
    B, N, C = x.shape
    H = W = math.isqrt(N)
    hd = C // num_heads
    xf = x.astype(jnp.float32)

    # local depthwise conv1d
    lw, lb = params["local_w"], params["local_b"]
    xp = jnp.pad(xf, ((0, 0), (1, 1), (0, 0)))
    x_local = lw[0] * xp[:, 0:N] + lw[1] * xp[:, 1:N + 1] + lw[2] * xp[:, 2:N + 2] + lb

    # multi-head self-attention
    w_in, b_in = params["attn_w_in"], params["attn_b_in"]
    q = jnp.einsum("bnc,cd->bnd", xf, w_in[0], precision=hp) + b_in[0]
    k = jnp.einsum("bnc,cd->bnd", xf, w_in[1], precision=hp) + b_in[1]
    v = jnp.einsum("bnc,cd->bnd", xf, w_in[2], precision=hp) + b_in[2]
    q = q.reshape(B, N, num_heads, hd).transpose(0, 2, 1, 3)
    k = k.reshape(B, N, num_heads, hd).transpose(0, 2, 1, 3)
    v = v.reshape(B, N, num_heads, hd).transpose(0, 2, 1, 3)
    s = jnp.einsum("bhnd,bhmd->bhnm", q, k, precision=hp) / math.sqrt(hd)
    p = jax.nn.softmax(s, axis=-1)
    o = jnp.einsum("bhnm,bhmd->bhnd", p, v, precision=hp)
    o = o.transpose(0, 2, 1, 3).reshape(B, N, C)
    x_global = jnp.einsum("bnc,cd->bnd", o, params["attn_w_out"], precision=hp) + params["attn_b_out"]

    # concat + fc + LayerNorm + GELU
    cat = jnp.concatenate([x_local, x_global], axis=-1)
    z = jnp.einsum("bnc,cd->bnd", cat, params["fc_w"], precision=hp) + params["fc_b"]
    m = jnp.mean(z, axis=-1, keepdims=True)
    var = jnp.mean((z - m) ** 2, axis=-1, keepdims=True)
    zn = (z - m) / jnp.sqrt(var + _LN_EPS) * params["ln_gamma"] + params["ln_beta"]
    y = jax.nn.gelu(zn, approximate=False)

    # DepthwiseConvolution: spatial layer_norm (no affine) + depthwise 3x3 conv
    yhw = y.reshape(B, H, W, C)
    m2 = jnp.mean(yhw, axis=(1, 2), keepdims=True)
    v2 = jnp.mean((yhw - m2) ** 2, axis=(1, 2), keepdims=True)
    yn = (yhw - m2) / jnp.sqrt(v2 + _LN_EPS)
    ypad = jnp.pad(yn, ((0, 0), (1, 1), (1, 1), (0, 0)))
    acc = jnp.zeros_like(yn)
    for dh in range(3):
        for dw in range(3):
            acc = acc + ypad[:, dh:dh + H, dw:dw + W, :] * params["dw_w"][dh, dw]
    acc = acc + params["dw_b"]
    return acc.reshape(B, N, C).astype(x.dtype)


# ----------------------------------------------------------------------------- test
if __name__ == "__main__":
    B, C, num_heads = 2, 32, 8
    H = W = 16
    N = H * W

    key = jax.random.PRNGKey(0)
    keys = jax.random.split(key, 16)

    x = jax.random.normal(keys[0], (B, N, C), dtype=jnp.float32)

    params = {
        "local_w": 0.3 * jax.random.normal(keys[1], (3, C), jnp.float32),
        "local_b": 0.1 * jax.random.normal(keys[2], (C,), jnp.float32),
        "attn_w_in": (C ** -0.5) * jax.random.normal(keys[3], (3, C, C), jnp.float32),
        "attn_b_in": 0.05 * jax.random.normal(keys[4], (3, C), jnp.float32),
        "attn_w_out": (C ** -0.5) * jax.random.normal(keys[5], (C, C), jnp.float32),
        "attn_b_out": 0.05 * jax.random.normal(keys[6], (C,), jnp.float32),
        "fc_w": ((2 * C) ** -0.5) * jax.random.normal(keys[7], (2 * C, C), jnp.float32),
        "fc_b": 0.05 * jax.random.normal(keys[8], (C,), jnp.float32),
        "ln_gamma": 1.0 + 0.1 * jax.random.normal(keys[9], (C,), jnp.float32),
        "ln_beta": 0.1 * jax.random.normal(keys[10], (C,), jnp.float32),
        "dw_w": 0.2 * jax.random.normal(keys[11], (3, 3, C), jnp.float32),
        "dw_b": 0.1 * jax.random.normal(keys[12], (C,), jnp.float32),
    }

    # one-time parameter packing (hoisted out of the per-call jit)
    prepped = jax.tree_util.tree_map(jnp.asarray, prepare_params(params, num_heads))

    out = local_global_feature_mixing(x, prepped, num_heads=num_heads)
    out = jax.block_until_ready(out)

    ref = _reference_forward(x, params, num_heads)
    assert out.shape == (B, N, C)
    max_err = float(jnp.max(jnp.abs(out.astype(jnp.float32) - ref.astype(jnp.float32))))
    assert max_err < 3e-3, f"max abs error {max_err}"

    print("KERNEL_OK")
</pallas_src>

<mosaic_0001>
module attributes {stable_mosaic.version = 11 : i64} {
  func.func @_fused_kernel(%arg0: i32, %arg1: memref<1x256x32xf32, #tpu.memory_space<vmem>>, %arg2: memref<32x96xf32, #tpu.memory_space<vmem>>, %arg3: memref<1x96xf32, #tpu.memory_space<vmem>>, %arg4: memref<32x32xf32, #tpu.memory_space<vmem>>, %arg5: memref<1x32xf32, #tpu.memory_space<vmem>>, %arg6: memref<4x32xf32, #tpu.memory_space<vmem>>, %arg7: memref<64x32xf32, #tpu.memory_space<vmem>>, %arg8: memref<3x32xf32, #tpu.memory_space<vmem>>, %arg9: memref<10x32xf32, #tpu.memory_space<vmem>>, %arg10: memref<1x256x32xf32, #tpu.memory_space<vmem>>) attributes {dimension_semantics = [#tpu.dimension_semantics<parallel>], iteration_bounds = array<i64: 2>, scalar_prefetch = 0 : i64, scratch_operands = 0 : i64, tpu.core_type = #tpu.core_type<tc>, window_params = [{transform_indices = @transform_0, window_bounds = array<i64: 1, 256, 32>}, {pipeline_mode = #tpu.pipeline_mode<synchronous>, transform_indices = @transform_1, window_bounds = array<i64: 32, 96>}, {pipeline_mode = #tpu.pipeline_mode<synchronous>, transform_indices = @transform_2, window_bounds = array<i64: 1, 96>}, {pipeline_mode = #tpu.pipeline_mode<synchronous>, transform_indices = @transform_3, window_bounds = array<i64: 32, 32>}, {pipeline_mode = #tpu.pipeline_mode<synchronous>, transform_indices = @transform_4, window_bounds = array<i64: 1, 32>}, {pipeline_mode = #tpu.pipeline_mode<synchronous>, transform_indices = @transform_5, window_bounds = array<i64: 4, 32>}, {pipeline_mode = #tpu.pipeline_mode<synchronous>, transform_indices = @transform_6, window_bounds = array<i64: 64, 32>}, {pipeline_mode = #tpu.pipeline_mode<synchronous>, transform_indices = @transform_7, window_bounds = array<i64: 3, 32>}, {pipeline_mode = #tpu.pipeline_mode<synchronous>, transform_indices = @transform_8, window_bounds = array<i64: 10, 32>}, {transform_indices = @transform_9, window_bounds = array<i64: 1, 256, 32>}]} {
    %c0 = arith.constant 0 : index
    %c0_0 = arith.constant 0 : index
    %c0_1 = arith.constant 0 : index
    %0 = vector.load %arg1[%c0, %c0_0, %c0_1] : memref<1x256x32xf32, #tpu.memory_space<vmem>>, vector<1x256x32xf32>
    %1 = vector.shape_cast %0 : vector<1x256x32xf32> to vector<256x32xf32>
    %c0_2 = arith.constant 0 : index
    %c0_3 = arith.constant 0 : index
    %2 = vector.load %arg2[%c0_2, %c0_3] : memref<32x96xf32, #tpu.memory_space<vmem>>, vector<32x96xf32>
    %cst = arith.constant dense<0.000000e+00> : vector<256x96xf32>
    %3 = tpu.matmul %1, %2, %cst {dimension_numbers = #tpu.dot_dimension_numbers<[1], [0], [0], [1], [0, 0, 1, 1], [], []>} : vector<256x32xf32>, vector<32x96xf32>, vector<256x96xf32> -> vector<256x96xf32>
    %c0_4 = arith.constant 0 : index
    %c0_5 = arith.constant 0 : index
    %4 = vector.load %arg3[%c0_4, %c0_5] : memref<1x96xf32, #tpu.memory_space<vmem>>, vector<1x96xf32>
    %5 = vector.broadcast %4 : vector<1x96xf32> to vector<256x96xf32>
    %6 = arith.addf %3, %5 : vector<256x96xf32>
    %7 = vector.extract_strided_slice %6 {offsets = [0, 0], sizes = [256, 32], strides = [1, 1]} : vector<256x96xf32> to vector<256x32xf32>
    %8 = vector.extract_strided_slice %6 {offsets = [0, 32], sizes = [256, 32], strides = [1, 1]} : vector<256x96xf32> to vector<256x32xf32>
    %9 = vector.extract_strided_slice %6 {offsets = [0, 64], sizes = [256, 32], strides = [1, 1]} : vector<256x96xf32> to vector<256x32xf32>
    %10 = tpu.iota {dimensions = array<i32: 1>} : vector<1x32xi32>
    %cst_6 = arith.constant 0.000000e+00 : f32
    %11 = vector.broadcast %cst_6 : f32 to vector<256x32xf32>
    %c0_i32 = arith.constant 0 : i32
    %c8_i32 = arith.constant 8 : i32
    %12 = arith.addi %c0_i32, %c8_i32 : i32
    %c1_i32 = arith.constant 1 : i32
    %13 = scf.for %arg11 = %c0_i32 to %12 step %c1_i32 iter_args(%arg12 = %11) -> (vector<256x32xf32>)  : i32 {
      %c4_i32 = arith.constant 4 : i32
      %190 = arith.muli %arg11, %c4_i32 : i32
      %191 = vector.broadcast %190 : i32 to vector<1x32xi32>
      %192 = arith.cmpi sge, %10, %191 : vector<1x32xi32>
      %c4_i32_78 = arith.constant 4 : i32
      %193 = arith.addi %190, %c4_i32_78 : i32
      %194 = vector.broadcast %193 : i32 to vector<1x32xi32>
      %195 = arith.cmpi slt, %10, %194 : vector<1x32xi32>
      %196 = arith.andi %192, %195 : vector<1x32xi1>
      %cst_79 = arith.constant 0.000000e+00 : f32
      %197 = vector.shape_cast %196 : vector<1x32xi1> to vector<1x32xi1>
      %198 = vector.broadcast %197 : vector<1x32xi1> to vector<256x32xi1>
      %199 = vector.broadcast %cst_79 : f32 to vector<256x32xf32>
      %200 = arith.select %198, %7, %199 : vector<256x32xi1>, vector<256x32xf32>
      %cst_80 = arith.constant dense<0.000000e+00> : vector<256x256xf32>
      %201 = tpu.matmul %200, %8, %cst_80 {dimension_numbers = #tpu.dot_dimension_numbers<[1], [1], [0], [0], [0, 0, 1, 0], [], []>} : vector<256x32xf32>, vector<256x32xf32>, vector<256x256xf32> -> vector<256x256xf32>
      %cst_81 = arith.constant dense<0xFF800000> : vector<256xf32>
      %202 = vector.multi_reduction <maximumf>, %201, %cst_81 [1] : vector<256x256xf32> to vector<256xf32>
      %203 = vector.shape_cast %202 : vector<256xf32> to vector<256x1xf32>
      %204 = vector.broadcast %203 : vector<256x1xf32> to vector<256x256xf32>
      %205 = arith.subf %201, %204 : vector<256x256xf32>
      %206 = math.exp %205 : vector<256x256xf32>
      %cst_82 = arith.constant dense<0.000000e+00> : vector<256xf32>
      %207 = vector.multi_reduction <add>, %206, %cst_82 [1] : vector<256x256xf32> to vector<256xf32>
      %208 = vector.shape_cast %207 : vector<256xf32> to vector<256x1xf32>
      %209 = tpu.reciprocal %208 {approx = true} : vector<256x1xf32> -> vector<256x1xf32>
      %cst_83 = arith.constant dense<0.000000e+00> : vector<256x32xf32>
      %210 = tpu.matmul %206, %9, %cst_83 {dimension_numbers = #tpu.dot_dimension_numbers<[1], [0], [0], [1], [0, 0, 1, 1], [], []>} : vector<256x256xf32>, vector<256x32xf32>, vector<256x32xf32> -> vector<256x32xf32>
      %211 = vector.broadcast %209 : vector<256x1xf32> to vector<256x32xf32>
      %212 = arith.mulf %210, %211 : vector<256x32xf32>
      %cst_84 = arith.constant 0.000000e+00 : f32
      %213 = vector.shape_cast %196 : vector<1x32xi1> to vector<1x32xi1>
      %214 = vector.broadcast %213 : vector<1x32xi1> to vector<256x32xi1>
      %215 = vector.broadcast %cst_84 : f32 to vector<256x32xf32>
      %216 = arith.select %214, %212, %215 : vector<256x32xi1>, vector<256x32xf32>
      %217 = arith.addf %arg12, %216 : vector<256x32xf32>
      scf.yield %217 : vector<256x32xf32>
    }
    %c8_i32_7 = arith.constant 8 : i32
    %c0_8 = arith.constant 0 : index
    %c0_9 = arith.constant 0 : index
    %14 = vector.load %arg4[%c0_8, %c0_9] : memref<32x32xf32, #tpu.memory_space<vmem>>, vector<32x32xf32>
    %cst_10 = arith.constant dense<0.000000e+00> : vector<256x32xf32>
    %15 = tpu.matmul %13, %14, %cst_10 {dimension_numbers = #tpu.dot_dimension_numbers<[1], [0], [0], [1], [0, 0, 1, 1], [], []>} : vector<256x32xf32>, vector<32x32xf32>, vector<256x32xf32> -> vector<256x32xf32>
    %c0_11 = arith.constant 0 : index
    %c0_12 = arith.constant 0 : index
    %16 = vector.load %arg5[%c0_11, %c0_12] : memref<1x32xf32, #tpu.memory_space<vmem>>, vector<1x32xf32>
    %17 = vector.broadcast %16 : vector<1x32xf32> to vector<256x32xf32>
    %18 = arith.addf %15, %17 : vector<256x32xf32>
    %cst_13 = arith.constant 0.000000e+00 : f32
    %19 = vector.broadcast %cst_13 : f32 to vector<1x32xf32>
    %20 = vector.extract_strided_slice %1 {offsets = [0, 0], sizes = [255, 32], strides = [1, 1]} : vector<256x32xf32> to vector<255x32xf32>
    %21 = tpu.concatenate %19, %20 in 0 : vector<1x32xf32>, vector<255x32xf32> -> vector<256x32xf32>
    %22 = vector.extract_strided_slice %1 {offsets = [1, 0], sizes = [255, 32], strides = [1, 1]} : vector<256x32xf32> to vector<255x32xf32>
    %23 = tpu.concatenate %22, %19 in 0 : vector<255x32xf32>, vector<1x32xf32> -> vector<256x32xf32>
    %c0_14 = arith.constant 0 : index
    %c0_15 = arith.constant 0 : index
    %24 = vector.load %arg6[%c0_14, %c0_15] : memref<4x32xf32, #tpu.memory_space<vmem>>, vector<1x32xf32>
    %25 = vector.broadcast %24 : vector<1x32xf32> to vector<256x32xf32>
    %26 = arith.mulf %25, %21 : vector<256x32xf32>
    %c1 = arith.constant 1 : index
    %c0_16 = arith.constant 0 : index
    %27 = vector.load %arg6[%c1, %c0_16] : memref<4x32xf32, #tpu.memory_space<vmem>>, vector<1x32xf32>
    %28 = vector.broadcast %27 : vector<1x32xf32> to vector<256x32xf32>
    %29 = arith.mulf %28, %1 : vector<256x32xf32>
    %30 = arith.addf %26, %29 : vector<256x32xf32>
    %c2 = arith.constant 2 : index
    %c0_17 = arith.constant 0 : index
    %31 = vector.load %arg6[%c2, %c0_17] : memref<4x32xf32, #tpu.memory_space<vmem>>, vector<1x32xf32>
    %32 = vector.broadcast %31 : vector<1x32xf32> to vector<256x32xf32>
    %33 = arith.mulf %32, %23 : vector<256x32xf32>
    %34 = arith.addf %30, %33 : vector<256x32xf32>
    %c3 = arith.constant 3 : index
    %c0_18 = arith.constant 0 : index
    %35 = vector.load %arg6[%c3, %c0_18] : memref<4x32xf32, #tpu.memory_space<vmem>>, vector<1x32xf32>
    %36 = vector.broadcast %35 : vector<1x32xf32> to vector<256x32xf32>
    %37 = arith.addf %34, %36 : vector<256x32xf32>
    %c0_19 = arith.constant 0 : index
    %c0_20 = arith.constant 0 : index
    %38 = vector.load %arg7[%c0_19, %c0_20] : memref<64x32xf32, #tpu.memory_space<vmem>>, vector<32x32xf32>
    %cst_21 = arith.constant dense<0.000000e+00> : vector<256x32xf32>
    %39 = tpu.matmul %37, %38, %cst_21 {dimension_numbers = #tpu.dot_dimension_numbers<[1], [0], [0], [1], [0, 0, 1, 1], [], []>} : vector<256x32xf32>, vector<32x32xf32>, vector<256x32xf32> -> vector<256x32xf32>
    %c32 = arith.constant 32 : index
    %c0_22 = arith.constant 0 : index
    %40 = vector.load %arg7[%c32, %c0_22] : memref<64x32xf32, #tpu.memory_space<vmem>>, vector<32x32xf32>
    %cst_23 = arith.constant dense<0.000000e+00> : vector<256x32xf32>
    %41 = tpu.matmul %18, %40, %cst_23 {dimension_numbers = #tpu.dot_dimension_numbers<[1], [0], [0], [1], [0, 0, 1, 1], [], []>} : vector<256x32xf32>, vector<32x32xf32>, vector<256x32xf32> -> vector<256x32xf32>
    %42 = arith.addf %39, %41 : vector<256x32xf32>
    %c0_24 = arith.constant 0 : index
    %c0_25 = arith.constant 0 : index
    %43 = vector.load %arg8[%c0_24, %c0_25] : memref<3x32xf32, #tpu.memory_space<vmem>>, vector<1x32xf32>
    %44 = vector.broadcast %43 : vector<1x32xf32> to vector<256x32xf32>
    %45 = arith.addf %42, %44 : vector<256x32xf32>
    %cst_26 = arith.constant dense<0.000000e+00> : vector<256xf32>
    %46 = vector.multi_reduction <add>, %45, %cst_26 [1] : vector<256x32xf32> to vector<256xf32>
    %47 = vector.shape_cast %46 : vector<256xf32> to vector<256x1xf32>
    %cst_27 = arith.constant 3.200000e+01 : f32
    %48 = vector.broadcast %cst_27 : f32 to vector<256x1xf32>
    %49 = arith.divf %47, %48 : vector<256x1xf32>
    %50 = vector.broadcast %49 : vector<256x1xf32> to vector<256x32xf32>
    %51 = arith.subf %45, %50 : vector<256x32xf32>
    %52 = arith.mulf %51, %51 : vector<256x32xf32>
    %cst_28 = arith.constant dense<0.000000e+00> : vector<256xf32>
    %53 = vector.multi_reduction <add>, %52, %cst_28 [1] : vector<256x32xf32> to vector<256xf32>
    %54 = vector.shape_cast %53 : vector<256xf32> to vector<256x1xf32>
    %cst_29 = arith.constant 3.200000e+01 : f32
    %55 = vector.broadcast %cst_29 : f32 to vector<256x1xf32>
    %56 = arith.divf %54, %55 : vector<256x1xf32>
    %cst_30 = arith.constant 9.99999974E-6 : f32
    %57 = vector.broadcast %cst_30 : f32 to vector<256x1xf32>
    %58 = arith.addf %56, %57 : vector<256x1xf32>
    %59 = math.rsqrt %58 : vector<256x1xf32>
    %60 = vector.broadcast %59 : vector<256x1xf32> to vector<256x32xf32>
    %61 = arith.mulf %51, %60 : vector<256x32xf32>
    %c1_31 = arith.constant 1 : index
    %c0_32 = arith.constant 0 : index
    %62 = vector.load %arg8[%c1_31, %c0_32] : memref<3x32xf32, #tpu.memory_space<vmem>>, vector<1x32xf32>
    %63 = vector.broadcast %62 : vector<1x32xf32> to vector<256x32xf32>
    %64 = arith.mulf %61, %63 : vector<256x32xf32>
    %c2_33 = arith.constant 2 : index
    %c0_34 = arith.constant 0 : index
    %65 = vector.load %arg8[%c2_33, %c0_34] : memref<3x32xf32, #tpu.memory_space<vmem>>, vector<1x32xf32>
    %66 = vector.broadcast %65 : vector<1x32xf32> to vector<256x32xf32>
    %67 = arith.addf %64, %66 : vector<256x32xf32>
    %cst_35 = arith.constant 5.000000e-01 : f32
    %68 = vector.broadcast %cst_35 : f32 to vector<256x32xf32>
    %69 = arith.mulf %68, %67 : vector<256x32xf32>
    %cst_36 = arith.constant 0.707106769 : f32
    %70 = vector.broadcast %cst_36 : f32 to vector<256x32xf32>
    %71 = arith.mulf %67, %70 : vector<256x32xf32>
    %cst_37 = arith.constant 0.000000e+00 : f32
    %72 = vector.broadcast %cst_37 : f32 to vector<256x32xf32>
    %73 = arith.cmpf oge, %71, %72 : vector<256x32xf32>
    %cst_38 = arith.constant 1.000000e+00 : f32
    %cst_39 = arith.constant -1.000000e+00 : f32
    %74 = vector.broadcast %cst_38 : f32 to vector<256x32xf32>
    %75 = vector.broadcast %cst_39 : f32 to vector<256x32xf32>
    %76 = arith.select %73, %74, %75 : vector<256x32xi1>, vector<256x32xf32>
    %77 = math.absf %71 : vector<256x32xf32>
    %cst_40 = arith.constant 0.327591091 : f32
    %78 = vector.broadcast %cst_40 : f32 to vector<256x32xf32>
    %79 = arith.mulf %78, %77 : vector<256x32xf32>
    %cst_41 = arith.constant 1.000000e+00 : f32
    %80 = vector.broadcast %cst_41 : f32 to vector<256x32xf32>
    %81 = arith.addf %80, %79 : vector<256x32xf32>
    %cst_42 = arith.constant 1.000000e+00 : f32
    %82 = vector.broadcast %cst_42 : f32 to vector<256x32xf32>
    %83 = arith.divf %82, %81 : vector<256x32xf32>
    %cst_43 = arith.constant 1.06140542 : f32
    %84 = vector.broadcast %cst_43 : f32 to vector<256x32xf32>
    %85 = arith.mulf %84, %83 : vector<256x32xf32>
    %cst_44 = arith.constant -1.45315206 : f32
    %86 = vector.broadcast %cst_44 : f32 to vector<256x32xf32>
    %87 = arith.addf %85, %86 : vector<256x32xf32>
    %88 = arith.mulf %87, %83 : vector<256x32xf32>
    %cst_45 = arith.constant 1.42141378 : f32
    %89 = vector.broadcast %cst_45 : f32 to vector<256x32xf32>
    %90 = arith.addf %88, %89 : vector<256x32xf32>
    %91 = arith.mulf %90, %83 : vector<256x32xf32>
    %cst_46 = arith.constant -0.284496725 : f32
    %92 = vector.broadcast %cst_46 : f32 to vector<256x32xf32>
    %93 = arith.addf %91, %92 : vector<256x32xf32>
    %94 = arith.mulf %93, %83 : vector<256x32xf32>
    %cst_47 = arith.constant 0.254829586 : f32
    %95 = vector.broadcast %cst_47 : f32 to vector<256x32xf32>
    %96 = arith.addf %94, %95 : vector<256x32xf32>
    %97 = arith.mulf %96, %83 : vector<256x32xf32>
    %cst_48 = arith.constant 0.000000e+00 : f32
    %98 = vector.broadcast %cst_48 : f32 to vector<256x32xf32>
    %99 = arith.subf %98, %77 : vector<256x32xf32>
    %100 = arith.mulf %99, %77 : vector<256x32xf32>
    %101 = math.exp %100 : vector<256x32xf32>
    %102 = arith.mulf %97, %101 : vector<256x32xf32>
    %cst_49 = arith.constant 1.000000e+00 : f32
    %103 = vector.broadcast %cst_49 : f32 to vector<256x32xf32>
    %104 = arith.subf %103, %102 : vector<256x32xf32>
    %105 = arith.mulf %76, %104 : vector<256x32xf32>
    %cst_50 = arith.constant 1.000000e+00 : f32
    %106 = vector.broadcast %cst_50 : f32 to vector<256x32xf32>
    %107 = arith.addf %106, %105 : vector<256x32xf32>
    %108 = arith.mulf %69, %107 : vector<256x32xf32>
    %cst_51 = arith.constant dense<0.000000e+00> : vector<32xf32>
    %109 = vector.multi_reduction <add>, %108, %cst_51 [0] : vector<256x32xf32> to vector<32xf32>
    %110 = vector.shape_cast %109 : vector<32xf32> to vector<1x32xf32>
    %cst_52 = arith.constant 2.560000e+02 : f32
    %111 = vector.broadcast %cst_52 : f32 to vector<1x32xf32>
    %112 = arith.divf %110, %111 : vector<1x32xf32>
    %113 = vector.broadcast %112 : vector<1x32xf32> to vector<256x32xf32>
    %114 = arith.subf %108, %113 : vector<256x32xf32>
    %115 = arith.mulf %114, %114 : vector<256x32xf32>
    %cst_53 = arith.constant dense<0.000000e+00> : vector<32xf32>
    %116 = vector.multi_reduction <add>, %115, %cst_53 [0] : vector<256x32xf32> to vector<32xf32>
    %117 = vector.shape_cast %116 : vector<32xf32> to vector<1x32xf32>
    %cst_54 = arith.constant 2.560000e+02 : f32
    %118 = vector.broadcast %cst_54 : f32 to vector<1x32xf32>
    %119 = arith.divf %117, %118 : vector<1x32xf32>
    %cst_55 = arith.constant 9.99999974E-6 : f32
    %120 = vector.broadcast %cst_55 : f32 to vector<1x32xf32>
    %121 = arith.addf %119, %120 : vector<1x32xf32>
    %122 = math.rsqrt %121 : vector<1x32xf32>
    %123 = vector.broadcast %122 : vector<1x32xf32> to vector<256x32xf32>
    %124 = arith.mulf %114, %123 : vector<256x32xf32>
    %125 = tpu.iota {dimensions = array<i32: 0>} : vector<256x1xi32>
    %c15_i32 = arith.constant 15 : i32
    %126 = vector.broadcast %c15_i32 : i32 to vector<256x1xi32>
    %127 = arith.andi %125, %126 : vector<256x1xi32>
    %c1_i32_56 = arith.constant 1 : i32
    %128 = vector.broadcast %c1_i32_56 : i32 to vector<256x1xi32>
    %129 = arith.cmpi sge, %127, %128 : vector<256x1xi32>
    %130 = vector.extract_strided_slice %124 {offsets = [0, 0], sizes = [255, 32], strides = [1, 1]} : vector<256x32xf32> to vector<255x32xf32>
    %131 = tpu.concatenate %19, %130 in 0 : vector<1x32xf32>, vector<255x32xf32> -> vector<256x32xf32>
    %cst_57 = arith.constant 0.000000e+00 : f32
    %132 = vector.shape_cast %129 : vector<256x1xi1> to vector<256x1xi1>
    %133 = vector.broadcast %132 : vector<256x1xi1> to vector<256x32xi1>
    %134 = vector.broadcast %cst_57 : f32 to vector<256x32xf32>
    %135 = arith.select %133, %131, %134 : vector<256x32xi1>, vector<256x32xf32>
    %c15_i32_58 = arith.constant 15 : i32
    %136 = vector.broadcast %c15_i32_58 : i32 to vector<256x1xi32>
    %137 = arith.cmpi slt, %127, %136 : vector<256x1xi32>
    %138 = vector.extract_strided_slice %124 {offsets = [1, 0], sizes = [255, 32], strides = [1, 1]} : vector<256x32xf32> to vector<255x32xf32>
    %139 = tpu.concatenate %138, %19 in 0 : vector<255x32xf32>, vector<1x32xf32> -> vector<256x32xf32>
    %cst_59 = arith.constant 0.000000e+00 : f32
    %140 = vector.shape_cast %137 : vector<256x1xi1> to vector<256x1xi1>
    %141 = vector.broadcast %140 : vector<256x1xi1> to vector<256x32xi1>
    %142 = vector.broadcast %cst_59 : f32 to vector<256x32xf32>
    %143 = arith.select %141, %139, %142 : vector<256x32xi1>, vector<256x32xf32>
    %c0_60 = arith.constant 0 : index
    %c0_61 = arith.constant 0 : index
    %144 = vector.load %arg9[%c0_60, %c0_61] : memref<10x32xf32, #tpu.memory_space<vmem>>, vector<1x32xf32>
    %145 = vector.broadcast %144 : vector<1x32xf32> to vector<256x32xf32>
    %146 = arith.mulf %145, %135 : vector<256x32xf32>
    %c1_62 = arith.constant 1 : index
    %c0_63 = arith.constant 0 : index
    %147 = vector.load %arg9[%c1_62, %c0_63] : memref<10x32xf32, #tpu.memory_space<vmem>>, vector<1x32xf32>
    %148 = vector.broadcast %147 : vector<1x32xf32> to vector<256x32xf32>
    %149 = arith.mulf %148, %124 : vector<256x32xf32>
    %150 = arith.addf %146, %149 : vector<256x32xf32>
    %c2_64 = arith.constant 2 : index
    %c0_65 = arith.constant 0 : index
    %151 = vector.load %arg9[%c2_64, %c0_65] : memref<10x32xf32, #tpu.memory_space<vmem>>, vector<1x32xf32>
    %152 = vector.broadcast %151 : vector<1x32xf32> to vector<256x32xf32>
    %153 = arith.mulf %152, %143 : vector<256x32xf32>
    %154 = arith.addf %150, %153 : vector<256x32xf32>
    %c3_66 = arith.constant 3 : index
    %c0_67 = arith.constant 0 : index
    %155 = vector.load %arg9[%c3_66, %c0_67] : memref<10x32xf32, #tpu.memory_space<vmem>>, vector<1x32xf32>
    %156 = vector.broadcast %155 : vector<1x32xf32> to vector<256x32xf32>
    %157 = arith.mulf %156, %135 : vector<256x32xf32>
    %c4 = arith.constant 4 : index
    %c0_68 = arith.constant 0 : index
    %158 = vector.load %arg9[%c4, %c0_68] : memref<10x32xf32, #tpu.memory_space<vmem>>, vector<1x32xf32>
    %159 = vector.broadcast %158 : vector<1x32xf32> to vector<256x32xf32>
    %160 = arith.mulf %159, %124 : vector<256x32xf32>
    %161 = arith.addf %157, %160 : vector<256x32xf32>
    %c5 = arith.constant 5 : index
    %c0_69 = arith.constant 0 : index
    %162 = vector.load %arg9[%c5, %c0_69] : memref<10x32xf32, #tpu.memory_space<vmem>>, vector<1x32xf32>
    %163 = vector.broadcast %162 : vector<1x32xf32> to vector<256x32xf32>
    %164 = arith.mulf %163, %143 : vector<256x32xf32>
    %165 = arith.addf %161, %164 : vector<256x32xf32>
    %c6 = arith.constant 6 : index
    %c0_70 = arith.constant 0 : index
    %166 = vector.load %arg9[%c6, %c0_70] : memref<10x32xf32, #tpu.memory_space<vmem>>, vector<1x32xf32>
    %167 = vector.broadcast %166 : vector<1x32xf32> to vector<256x32xf32>
    %168 = arith.mulf %167, %135 : vector<256x32xf32>
    %c7 = arith.constant 7 : index
    %c0_71 = arith.constant 0 : index
    %169 = vector.load %arg9[%c7, %c0_71] : memref<10x32xf32, #tpu.memory_space<vmem>>, vector<1x32xf32>
    %170 = vector.broadcast %169 : vector<1x32xf32> to vector<256x32xf32>
    %171 = arith.mulf %170, %124 : vector<256x32xf32>
    %172 = arith.addf %168, %171 : vector<256x32xf32>
    %c8 = arith.constant 8 : index
    %c0_72 = arith.constant 0 : index
    %173 = vector.load %arg9[%c8, %c0_72] : memref<10x32xf32, #tpu.memory_space<vmem>>, vector<1x32xf32>
    %174 = vector.broadcast %173 : vector<1x32xf32> to vector<256x32xf32>
    %175 = arith.mulf %174, %143 : vector<256x32xf32>
    %176 = arith.addf %172, %175 : vector<256x32xf32>
    %cst_73 = arith.constant 0.000000e+00 : f32
    %177 = vector.broadcast %cst_73 : f32 to vector<16x32xf32>
    %c9 = arith.constant 9 : index
    %c0_74 = arith.constant 0 : index
    %178 = vector.load %arg9[%c9, %c0_74] : memref<10x32xf32, #tpu.memory_space<vmem>>, vector<1x32xf32>
    %179 = vector.broadcast %178 : vector<1x32xf32> to vector<256x32xf32>
    %180 = arith.addf %165, %179 : vector<256x32xf32>
    %181 = vector.extract_strided_slice %154 {offsets = [0, 0], sizes = [240, 32], strides = [1, 1]} : vector<256x32xf32> to vector<240x32xf32>
    %182 = tpu.concatenate %177, %181 in 0 : vector<16x32xf32>, vector<240x32xf32> -> vector<256x32xf32>
    %183 = arith.addf %180, %182 : vector<256x32xf32>
    %184 = vector.extract_strided_slice %176 {offsets = [16, 0], sizes = [240, 32], strides = [1, 1]} : vector<256x32xf32> to vector<240x32xf32>
    %185 = tpu.concatenate %184, %177 in 0 : vector<240x32xf32>, vector<16x32xf32> -> vector<256x32xf32>
    %186 = arith.addf %183, %185 : vector<256x32xf32>
    %c0_75 = arith.constant 0 : index
    %c0_76 = arith.constant 0 : index
    %c0_77 = arith.constant 0 : index
    %187 = vector.load %arg10[%c0_75, %c0_76, %c0_77] : memref<1x256x32xf32, #tpu.memory_space<vmem>>, vector<1x256x32xf32>
    %188 = vector.shape_cast %187 : vector<1x256x32xf32> to vector<256x32xf32>
    %189 = vector.shape_cast %186 : vector<256x32xf32> to vector<1x256x32xf32>
    tpu.vector_store %arg10[%c0_75, %c0_76, %c0_77], %189 {strides = array<i32>} : memref<1x256x32xf32, #tpu.memory_space<vmem>>, vector<1x256x32xf32>,
    return
  }
  func.func @transform_0(%arg0: i32) -> (i32, i32, i32) {
    %c0_i32 = arith.constant 0 : i32
    %c0_i32_0 = arith.constant 0 : i32
    %c0_i32_1 = arith.constant 0 : i32
    return %arg0, %c0_i32, %c0_i32_0 : i32, i32, i32
  }
  func.func @transform_1(%arg0: i32) -> (i32, i32) {
    %c0_i32 = arith.constant 0 : i32
    %c0_i32_0 = arith.constant 0 : i32
    %c0_i32_1 = arith.constant 0 : i32
    return %c0_i32, %c0_i32_0 : i32, i32
  }
  func.func @transform_2(%arg0: i32) -> (i32, i32) {
    %c0_i32 = arith.constant 0 : i32
    %c0_i32_0 = arith.constant 0 : i32
    %c0_i32_1 = arith.constant 0 : i32
    return %c0_i32, %c0_i32_0 : i32, i32
  }
  func.func @transform_3(%arg0: i32) -> (i32, i32) {
    %c0_i32 = arith.constant 0 : i32
    %c0_i32_0 = arith.constant 0 : i32
    %c0_i32_1 = arith.constant 0 : i32
    return %c0_i32, %c0_i32_0 : i32, i32
  }
  func.func @transform_4(%arg0: i32) -> (i32, i32) {
    %c0_i32 = arith.constant 0 : i32
    %c0_i32_0 = arith.constant 0 : i32
    %c0_i32_1 = arith.constant 0 : i32
    return %c0_i32, %c0_i32_0 : i32, i32
  }
  func.func @transform_5(%arg0: i32) -> (i32, i32) {
    %c0_i32 = arith.constant 0 : i32
    %c0_i32_0 = arith.constant 0 : i32
    %c0_i32_1 = arith.constant 0 : i32
    return %c0_i32, %c0_i32_0 : i32, i32
  }
  func.func @transform_6(%arg0: i32) -> (i32, i32) {
    %c0_i32 = arith.constant 0 : i32
    %c0_i32_0 = arith.constant 0 : i32
    %c0_i32_1 = arith.constant 0 : i32
    return %c0_i32, %c0_i32_0 : i32, i32
  }
  func.func @transform_7(%arg0: i32) -> (i32, i32) {
    %c0_i32 = arith.constant 0 : i32
    %c0_i32_0 = arith.constant 0 : i32
    %c0_i32_1 = arith.constant 0 : i32
    return %c0_i32, %c0_i32_0 : i32, i32
  }
  func.func @transform_8(%arg0: i32) -> (i32, i32) {
    %c0_i32 = arith.constant 0 : i32
    %c0_i32_0 = arith.constant 0 : i32
    %c0_i32_1 = arith.constant 0 : i32
    return %c0_i32, %c0_i32_0 : i32, i32
  }
  func.func @transform_9(%arg0: i32) -> (i32, i32, i32) {
    %c0_i32 = arith.constant 0 : i32
    %c0_i32_0 = arith.constant 0 : i32
    %c0_i32_1 = arith.constant 0 : i32
    return %arg0, %c0_i32, %c0_i32_0 : i32, i32, i32
  }
}

</mosaic_0001>

<llo_original>
// kernel: local_global_feature_mixing.1
$region0: #{local_global_feature_mixing.1}
  #allocation0 [shape = 'u32[]', space=smem, size = 0x4, offset = 0x4, fixed_abs, tag = 'smem constant byte address 0x4 - core index']
  #allocation1 [shape = 'u32[72,128]{1,0:T(1,128)}', space=vmem, size = 0x9000, scoped, tag = 'internal scratch']
  %s0 = inlined_call_operand.vmem [shape: f32[2,256,32], index: 0, kind: input, shape index: {}]
  %s1 = inlined_call_operand.vmem [shape: f32[32,96], index: 1, kind: input, shape index: {}]
  %s2 = inlined_call_operand.vmem [shape: f32[1,96], index: 2, kind: input, shape index: {}]
  %s3 = inlined_call_operand.vmem [shape: f32[32,32], index: 3, kind: input, shape index: {}]
  %s4 = inlined_call_operand.vmem [shape: f32[1,32], index: 4, kind: input, shape index: {}]
  %s5 = inlined_call_operand.vmem [shape: f32[4,32], index: 5, kind: input, shape index: {}]
  %s6 = inlined_call_operand.vmem [shape: f32[64,32], index: 6, kind: input, shape index: {}]
  %s7 = inlined_call_operand.vmem [shape: f32[3,32], index: 7, kind: input, shape index: {}]
  %s8 = inlined_call_operand.vmem [shape: f32[10,32], index: 8, kind: input, shape index: {}]
  %s9 = inlined_call_operand.vmem [shape: f32[2,256,32], index: 9, kind: output, shape index: {}]
  %s10 = sld [smem:[#allocation0]]
  $region76: #{local_global_feature_mixing.1} parent=0
    _
  %s12 = ssub.s32 1, %s10
  %s13 = scalar_select 0, %s12, %s10
  loop: start=0, step=1, limit=4
  $region2: #{local_global_feature_mixing.1} parent=0 // loop_pre_header
    _
  $region3: #{local_global_feature_mixing.1} parent=0 // loop_header
    %s15 = sphi 0, %s19
    %p16 = scmp.ge.s32.totalorder %s15, 4
    %s25 = sphi 0, %s27
    %s28 = sphi 0, %s25
    %s29 = sphi 0, %s28
    %s45 = sphi 0, %s29
    %s49 = sphi 0, %s49
    %s51 = sphi 0, %s49
    %s52 = sphi 0, %s51
    %s66 = sphi 0, %s52
    %s70 = sphi 0, %s70
    %s72 = sphi 0, %s70
    %s73 = sphi 0, %s72
    %s87 = sphi 0, %s73
    %s91 = sphi 0, %s91
    %s93 = sphi 0, %s91
    %s94 = sphi 0, %s93
    %s108 = sphi 0, %s94
    %s112 = sphi 0, %s112
    %s114 = sphi 0, %s112
    %s115 = sphi 0, %s114
    %s129 = sphi 0, %s115
    %s133 = sphi 0, %s133
    %s135 = sphi 0, %s133
    %s136 = sphi 0, %s135
    %s150 = sphi 0, %s136
    %s154 = sphi 0, %s154
    %s156 = sphi 0, %s154
    %s157 = sphi 0, %s156
    %s171 = sphi 0, %s157
    %s175 = sphi 0, %s175
    %s177 = sphi 0, %s175
    %s178 = sphi 0, %s177
    %s192 = sphi 0, %s178
    %s196 = sphi 0, %s196
    %s198 = sphi 0, %s196
    %s199 = sphi 0, %s198
    %s213 = sphi 0, %s199
    %s219 = sphi 0, %s221
    %s222 = sphi 0, %s219
    %s223 = sphi 0, %s222
    %s239 = sphi 0, %s223
  $region4: #{local_global_feature_mixing.1} parent=0 // loop_header_branch
    %18 = sbr.rel (%p16) target = $region8
  $region5: #{local_global_feature_mixing.1} parent=0 // loop_body
    %s20 = ssub.s32 %s15, 1
    %s21 = ssub.s32 %s15, 2
    %s22 = sadd.s32 %s15, 1
    %s23 = ssub.s32 %s15, %s22
    %p24 = scmp.eq.s32.totalorder %s23, 0
    %s26 = sadd.s32 %s25, 1
    %s27 = scalar_select %p24, %s25, %s26
    %p30 = pneg %p24
    %p31 = scmp.eq.s32.totalorder %s15, 1
    %p32 = por %p30, %p31
    %p33 = scmp.ne.s32.totalorder %s25, %s28
    %p34 = scmp.eq.s32.totalorder %s15, 0
    %p35 = por %p33, %p34
    %p36 = scmp.ne.s32.totalorder %s25, %s28
    %p37 = scmp.eq.s32.totalorder %s20, 1
    %p38 = por %p36, %p37
    %p39 = scmp.ne.s32.totalorder %s28, %s29
    %p40 = scmp.eq.s32.totalorder %s20, 0
    %p41 = por %p39, %p40
    %p42 = scmp.ne.s32.totalorder %s28, %s29
    %p43 = scmp.eq.s32.totalorder %s21, 1
    %p44 = por %p42, %p43
    %p46 = scmp.ne.s32.totalorder %s29, %s45
    %p47 = scmp.eq.s32.totalorder %s21, 0
    %p48 = por %p46, %p47
    %s50 = sadd.s32 %s49, 1
    %p53 = scmp.eq.s32.totalorder %s15, 1
    %p54 = scmp.ne.s32.totalorder %s49, %s51
    %p55 = scmp.eq.s32.totalorder %s15, 0
    %p56 = por %p54, %p55
    %p57 = scmp.ne.s32.totalorder %s49, %s51
    %p58 = scmp.eq.s32.totalorder %s20, 1
    %p59 = por %p57, %p58
    %p60 = scmp.ne.s32.totalorder %s51, %s52
    %p61 = scmp.eq.s32.totalorder %s20, 0
    %p62 = por %p60, %p61
    %p63 = scmp.ne.s32.totalorder %s51, %s52
    %p64 = scmp.eq.s32.totalorder %s21, 1
    %p65 = por %p63, %p64
    %p67 = scmp.ne.s32.totalorder %s52, %s66
    %p68 = scmp.eq.s32.totalorder %s21, 0
    %p69 = por %p67, %p68
    %s71 = sadd.s32 %s70, 1
    %p74 = scmp.eq.s32.totalorder %s15, 1
    %p75 = scmp.ne.s32.totalorder %s70, %s72
    %p76 = scmp.eq.s32.totalorder %s15, 0
    %p77 = por %p75, %p76
    %p78 = scmp.ne.s32.totalorder %s70, %s72
    %p79 = scmp.eq.s32.totalorder %s20, 1
    %p80 = por %p78, %p79
    %p81 = scmp.ne.s32.totalorder %s72, %s73
    %p82 = scmp.eq.s32.totalorder %s20, 0
    %p83 = por %p81, %p82
    %p84 = scmp.ne.s32.totalorder %s72, %s73
    %p85 = scmp.eq.s32.totalorder %s21, 1
    %p86 = por %p84, %p85
    %p88 = scmp.ne.s32.totalorder %s73, %s87
    %p89 = scmp.eq.s32.totalorder %s21, 0
    %p90 = por %p88, %p89
    %s92 = sadd.s32 %s91, 1
    %p95 = scmp.eq.s32.totalorder %s15, 1
    %p96 = scmp.ne.s32.totalorder %s91, %s93
    %p97 = scmp.eq.s32.totalorder %s15, 0
    %p98 = por %p96, %p97
    %p99 = scmp.ne.s32.totalorder %s91, %s93
    %p100 = scmp.eq.s32.totalorder %s20, 1
    %p101 = por %p99, %p100
    %p102 = scmp.ne.s32.totalorder %s93, %s94
    %p103 = scmp.eq.s32.totalorder %s20, 0
    %p104 = por %p102, %p103
    %p105 = scmp.ne.s32.totalorder %s93, %s94
    %p106 = scmp.eq.s32.totalorder %s21, 1
    %p107 = por %p105, %p106
    %p109 = scmp.ne.s32.totalorder %s94, %s108
    %p110 = scmp.eq.s32.totalorder %s21, 0
    %p111 = por %p109, %p110
    %s113 = sadd.s32 %s112, 1
    %p116 = scmp.eq.s32.totalorder %s15, 1
    %p117 = scmp.ne.s32.totalorder %s112, %s114
    %p118 = scmp.eq.s32.totalorder %s15, 0
    %p119 = por %p117, %p118
    %p120 = scmp.ne.s32.totalorder %s112, %s114
    %p121 = scmp.eq.s32.totalorder %s20, 1
    %p122 = por %p120, %p121
    %p123 = scmp.ne.s32.totalorder %s114, %s115
    %p124 = scmp.eq.s32.totalorder %s20, 0
    %p125 = por %p123, %p124
    %p126 = scmp.ne.s32.totalorder %s114, %s115
    %p127 = scmp.eq.s32.totalorder %s21, 1
    %p128 = por %p126, %p127
    %p130 = scmp.ne.s32.totalorder %s115, %s129
    %p131 = scmp.eq.s32.totalorder %s21, 0
    %p132 = por %p130, %p131
    %s134 = sadd.s32 %s133, 1
    %p137 = scmp.eq.s32.totalorder %s15, 1
    %p138 = scmp.ne.s32.totalorder %s133, %s135
    %p139 = scmp.eq.s32.totalorder %s15, 0
    %p140 = por %p138, %p139
    %p141 = scmp.ne.s32.totalorder %s133, %s135
    %p142 = scmp.eq.s32.totalorder %s20, 1
    %p143 = por %p141, %p142
    %p144 = scmp.ne.s32.totalorder %s135, %s136
    %p145 = scmp.eq.s32.totalorder %s20, 0
    %p146 = por %p144, %p145
    %p147 = scmp.ne.s32.totalorder %s135, %s136
    %p148 = scmp.eq.s32.totalorder %s21, 1
    %p149 = por %p147, %p148
    %p151 = scmp.ne.s32.totalorder %s136, %s150
    %p152 = scmp.eq.s32.totalorder %s21, 0
    %p153 = por %p151, %p152
    %s155 = sadd.s32 %s154, 1
    %p158 = scmp.eq.s32.totalorder %s15, 1
    %p159 = scmp.ne.s32.totalorder %s154, %s156
    %p160 = scmp.eq.s32.totalorder %s15, 0
    %p161 = por %p159, %p160
    %p162 = scmp.ne.s32.totalorder %s154, %s156
    %p163 = scmp.eq.s32.totalorder %s20, 1
    %p164 = por %p162, %p163
    %p165 = scmp.ne.s32.totalorder %s156, %s157
    %p166 = scmp.eq.s32.totalorder %s20, 0
    %p167 = por %p165, %p166
    %p168 = scmp.ne.s32.totalorder %s156, %s157
    %p169 = scmp.eq.s32.totalorder %s21, 1
    %p170 = por %p168, %p169
    %p172 = scmp.ne.s32.totalorder %s157, %s171
    %p173 = scmp.eq.s32.totalorder %s21, 0
    %p174 = por %p172, %p173
    %s176 = sadd.s32 %s175, 1
    %p179 = scmp.eq.s32.totalorder %s15, 1
    %p180 = scmp.ne.s32.totalorder %s175, %s177
    %p181 = scmp.eq.s32.totalorder %s15, 0
    %p182 = por %p180, %p181
    %p183 = scmp.ne.s32.totalorder %s175, %s177
    %p184 = scmp.eq.s32.totalorder %s20, 1
    %p185 = por %p183, %p184
    %p186 = scmp.ne.s32.totalorder %s177, %s178
    %p187 = scmp.eq.s32.totalorder %s20, 0
    %p188 = por %p186, %p187
    %p189 = scmp.ne.s32.totalorder %s177, %s178
    %p190 = scmp.eq.s32.totalorder %s21, 1
    %p191 = por %p189, %p190
    %p193 = scmp.ne.s32.totalorder %s178, %s192
    %p194 = scmp.eq.s32.totalorder %s21, 0
    %p195 = por %p193, %p194
    %s197 = sadd.s32 %s196, 1
    %p200 = scmp.eq.s32.totalorder %s15, 1
    %p201 = scmp.ne.s32.totalorder %s196, %s198
    %p202 = scmp.eq.s32.totalorder %s15, 0
    %p203 = por %p201, %p202
    %p204 = scmp.ne.s32.totalorder %s196, %s198
    %p205 = scmp.eq.s32.totalorder %s20, 1
    %p206 = por %p204, %p205
    %p207 = scmp.ne.s32.totalorder %s198, %s199
    %p208 = scmp.eq.s32.totalorder %s20, 0
    %p209 = por %p207, %p208
    %p210 = scmp.ne.s32.totalorder %s198, %s199
    %p211 = scmp.eq.s32.totalorder %s21, 1
    %p212 = por %p210, %p211
    %p214 = scmp.ne.s32.totalorder %s199, %s213
    %p215 = scmp.eq.s32.totalorder %s21, 0
    %p216 = por %p214, %p215
    %s217 = ssub.s32 %s15, %s22
    %p218 = scmp.eq.s32.totalorder %s217, 0
    %s220 = sadd.s32 %s219, 1
    %s221 = scalar_select %p218, %s219, %s220
    %p224 = pneg %p218
    %p225 = scmp.eq.s32.totalorder %s15, 1
    %p226 = por %p224, %p225
    %p227 = scmp.ne.s32.totalorder %s219, %s222
    %p228 = scmp.eq.s32.totalorder %s15, 0
    %p229 = por %p227, %p228
    %p230 = scmp.ne.s32.totalorder %s219, %s222
    %p231 = scmp.eq.s32.totalorder %s20, 1
    %p232 = por %p230, %p231
    %p233 = scmp.ne.s32.totalorder %s222, %s223
    %p234 = scmp.eq.s32.totalorder %s20, 0
    %p235 = por %p233, %p234
    %p236 = scmp.ne.s32.totalorder %s222, %s223
    %p237 = scmp.eq.s32.totalorder %s21, 1
    %p238 = por %p236, %p237
    %p240 = scmp.ne.s32.totalorder %s223, %s239
    %p241 = scmp.eq.s32.totalorder %s21, 0
    %p242 = por %p240, %p241
    %p243 = scmp.le.s32.totalorder 1, %s15
    %p244 = scmp.lt.s32.totalorder %s15, 3
    %p245 = pnand %p243, %p244
    %p246 = pneg %p245
    // Predicated region
    $region9: #{local_global_feature_mixing.1} parent=5 // pred_check
      _
    $region10: #{local_global_feature_mixing.1} parent=5 // pred_check_branch
      %248 = sbr.rel (%p245) target = $region12
    $region11: #{local_global_feature_mixing.1} parent=5 // pred_region
      %s249 = ssub.s32 %s15, 1
      // Predicated region
      $region13: #{local_global_feature_mixing.1} parent=11 // pred_check
        %p250 = pneg %p62
      $region14: #{local_global_feature_mixing.1} parent=11 // pred_check_branch
        %252 = sbr.rel (%p250) target = $region16
      $region15: #{local_global_feature_mixing.1} parent=11 // pred_region
        _
      $region16: #{local_global_feature_mixing.1} parent=11 // pred_fallthru
        _
      // Predicated region
      $region17: #{local_global_feature_mixing.1} parent=11 // pred_check
        %p253 = pneg %p83
      $region18: #{local_global_feature_mixing.1} parent=11 // pred_check_branch
        %255 = sbr.rel (%p253) target = $region20
      $region19: #{local_global_feature_mixing.1} parent=11 // pred_region
        _
      $region20: #{local_global_feature_mixing.1} parent=11 // pred_fallthru
        _
      // Predicated region
      $region21: #{local_global_feature_mixing.1} parent=11 // pred_check
        %p256 = pneg %p104
      $region22: #{local_global_feature_mixing.1} parent=11 // pred_check_branch
        %258 = sbr.rel (%p256) target = $region24
      $region23: #{local_global_feature_mixing.1} parent=11 // pred_region
        _
      $region24: #{local_global_feature_mixing.1} parent=11 // pred_fallthru
        _
      // Predicated region
      $region25: #{local_global_feature_mixing.1} parent=11 // pred_check
        %p259 = pneg %p125
      $region26: #{local_global_feature_mixing.1} parent=11 // pred_check_branch
        %261 = sbr.rel (%p259) target = $region28
      $region27: #{local_global_feature_mixing.1} parent=11 // pred_region
        _
      $region28: #{local_global_feature_mixing.1} parent=11 // pred_fallthru
        _
      // Predicated region
      $region29: #{local_global_feature_mixing.1} parent=11 // pred_check
        %p262 = pneg %p146
      $region30: #{local_global_feature_mixing.1} parent=11 // pred_check_branch
        %264 = sbr.rel (%p262) target = $region32
      $region31: #{local_global_feature_mixing.1} parent=11 // pred_region
        _
      $region32: #{local_global_feature_mixing.1} parent=11 // pred_fallthru
        _
      // Predicated region
      $region33: #{local_global_feature_mixing.1} parent=11 // pred_check
        %p265 = pneg %p167
      $region34: #{local_global_feature_mixing.1} parent=11 // pred_check_branch
        %267 = sbr.rel (%p265) target = $region36
      $region35: #{local_global_feature_mixing.1} parent=11 // pred_region
        _
      $region36: #{local_global_feature_mixing.1} parent=11 // pred_fallthru
        _
      // Predicated region
      $region37: #{local_global_feature_mixing.1} parent=11 // pred_check
        %p268 = pneg %p188
      $region38: #{local_global_feature_mixing.1} parent=11 // pred_check_branch
        %270 = sbr.rel (%p268) target = $region40
      $region39: #{local_global_feature_mixing.1} parent=11 // pred_region
        _
      $region40: #{local_global_feature_mixing.1} parent=11 // pred_fallthru
        _
      // Predicated region
      $region41: #{local_global_feature_mixing.1} parent=11 // pred_check
        %p271 = pneg %p209
      $region42: #{local_global_feature_mixing.1} parent=11 // pred_check_branch
        %273 = sbr.rel (%p271) target = $region44
      $region43: #{local_global_feature_mixing.1} parent=11 // pred_region
        _
      $region44: #{local_global_feature_mixing.1} parent=11 // pred_fallthru
        _
    $region12: #{local_global_feature_mixing.1} parent=5 // pred_fallthru
      _
    %p274 = scmp.lt.s32.totalorder %s15, 2
    // Predicated region
    $region45: #{local_global_feature_mixing.1} parent=5 // pred_check
      %p275 = pneg %p274
    $region46: #{local_global_feature_mixing.1} parent=5 // pred_check_branch
      %277 = sbr.rel (%p275) target = $region48
    $region47: #{local_global_feature_mixing.1} parent=5 // pred_region
      // Predicated region
      $region49: #{local_global_feature_mixing.1} parent=47 // pred_check
        %p278 = pneg %p35
      $region50: #{local_global_feature_mixing.1} parent=47 // pred_check_branch
        %280 = sbr.rel (%p278) target = $region52
      $region51: #{local_global_feature_mixing.1} parent=47 // pred_region
        %p281 = scmp.lt.s32.totalorder %s15, 1
        %s282 = scalar_select %p281, %s15, 1
        %s283 = smul.addr %s282, 32
        %s284 = smul.addr %s283, 8
        %s285 = scalar_lea.vmem %s0, %s284
      $region52: #{local_global_feature_mixing.1} parent=47 // pred_fallthru
        _
    $region48: #{local_global_feature_mixing.1} parent=5 // pred_fallthru
      _
    %p286 = scmp.le.s32.totalorder 1, %s15
    %p287 = scmp.lt.s32.totalorder %s15, 3
    %p288 = pnand %p286, %p287
    %p289 = pneg %p288
    // Predicated region
    $region53: #{local_global_feature_mixing.1} parent=5 // pred_check
      _
    $region54: #{local_global_feature_mixing.1} parent=5 // pred_check_branch
      %291 = sbr.rel (%p288) target = $region56
    $region55: #{local_global_feature_mixing.1} parent=5 // pred_region
      %s292 = ssub.s32 %s15, 1
      %p293 = scmp.lt.s32.totalorder %s20, 1
      %s294 = scalar_select %p293, %s20, 1
      %s295 = smul.addr %s294, 32
      %s296 = smul.addr %s295, 8
      %s297 = scalar_lea.vmem %s0, %s296
      %p298 = pneg %p41
      %p299 = pneg %p38
      %p300 = pneg %p62
      %p301 = pneg %p59
      %p302 = pneg %p83
      %p303 = pneg %p80
      %p304 = pneg %p104
      %p305 = pneg %p101
      %p306 = pneg %p125
      %p307 = pneg %p122
      %p308 = pneg %p146
      %p309 = pneg %p143
      %p310 = pneg %p167
      %p311 = pneg %p164
      %p312 = pneg %p188
      %p313 = pneg %p185
      %p314 = pneg %p209
      %p315 = pneg %p206
      %p316 = pneg %p235
      %p317 = pneg %p232
      %p318 = scmp.lt.s32.totalorder %s20, 1
      %s319 = scalar_select %p318, %s20, 1
      %s320 = smul.addr %s319, 32
      %s321 = smul.addr %s320, 8
      %s322 = scalar_lea.vmem %s9, %s321
      %p323 = scmp.lt.s32.totalorder %s20, 1
      %s324 = scalar_select %p323, %s20, 1
      %s325 = smul.addr %s324, 32
      %s326 = smul.addr %s325, 8
      %s327 = scalar_lea.vmem %s0, %s326
      %p328 = scmp.lt.s32.totalorder %s20, 1
      %s329 = scalar_select %p328, %s20, 1
      %s330 = smul.addr %s329, 32
      %s331 = smul.addr %s330, 8
      %s332 = scalar_lea.vmem %s9, %s331
      %v333 = vld [vmem:[%s327] sm:$0xff]
      %v334 = vld [vmem:[%s327 + $0x8] sm:$0xff]
      %v335 = vld [vmem:[%s327 + $0x10] sm:$0xff]
      %v336 = vld [vmem:[%s327 + $0x18] sm:$0xff]
      %v337 = vld [vmem:[%s327 + $0x20] sm:$0xff]
      %v338 = vld [vmem:[%s327 + $0x28] sm:$0xff]
      %v339 = vld [vmem:[%s327 + $0x30] sm:$0xff]
      %v340 = vld [vmem:[%s327 + $0x38] sm:$0xff]
      %v341 = vld [vmem:[%s327 + $0x40] sm:$0xff]
      %v342 = vld [vmem:[%s327 + $0x48] sm:$0xff]
      %v343 = vld [vmem:[%s327 + $0x50] sm:$0xff]
      %v344 = vld [vmem:[%s327 + $0x58] sm:$0xff]
      %v345 = vld [vmem:[%s327 + $0x60] sm:$0xff]
      %v346 = vld [vmem:[%s327 + $0x68] sm:$0xff]
      %v347 = vld [vmem:[%s327 + $0x70] sm:$0xff]
      %v348 = vld [vmem:[%s327 + $0x78] sm:$0xff]
      %v349 = vld [vmem:[%s327 + $0x80] sm:$0xff]
      %v350 = vld [vmem:[%s327 + $0x88] sm:$0xff]
      %v351 = vld [vmem:[%s327 + $0x90] sm:$0xff]
      %v352 = vld [vmem:[%s327 + $0x98] sm:$0xff]
      %v353 = vld [vmem:[%s327 + $0xa0] sm:$0xff]
      %v354 = vld [vmem:[%s327 + $0xa8] sm:$0xff]
      %v355 = vld [vmem:[%s327 + $0xb0] sm:$0xff]
      %v356 = vld [vmem:[%s327 + $0xb8] sm:$0xff]
      %v357 = vld [vmem:[%s327 + $0xc0] sm:$0xff]
      %v358 = vld [vmem:[%s327 + $0xc8] sm:$0xff]
      %v359 = vld [vmem:[%s327 + $0xd0] sm:$0xff]
      %v360 = vld [vmem:[%s327 + $0xd8] sm:$0xff]
      %v361 = vld [vmem:[%s327 + $0xe0] sm:$0xff]
      %v362 = vld [vmem:[%s327 + $0xe8] sm:$0xff]
      %v363 = vld [vmem:[%s327 + $0xf0] sm:$0xff]
      %v364 = vld [vmem:[%s327 + $0xf8] sm:$0xff]
      %v365 = vld [vmem:[%s1] sm:$0xff]
      %v366 = vld [vmem:[%s1 + $0x8] sm:$0xff]
      %v367 = vld [vmem:[%s1 + $0x10] sm:$0xff]
      %v368 = vld [vmem:[%s1 + $0x18] sm:$0xff]
      %v369 = vld [vmem:[%s2] sm:$0x1]
      %v371 = vperm.slane %v369, 0
      %vm373 = vcmask 261120
      %v375 = vsel %vm373, %v333, 0
      %v378 = vsel %vm373, %v334, 0
      %v381 = vsel %vm373, %v335, 0
      %v384 = vsel %vm373, %v336, 0
      %v387 = vsel %vm373, %v337, 0
      %v390 = vsel %vm373, %v338, 0
      %v393 = vsel %vm373, %v339, 0
      %v396 = vsel %vm373, %v340, 0
      %v399 = vsel %vm373, %v341, 0
      %v402 = vsel %vm373, %v342, 0
      %v405 = vsel %vm373, %v343, 0
      %v408 = vsel %vm373, %v344, 0
      %v411 = vsel %vm373, %v345, 0
      %v414 = vsel %vm373, %v346, 0
      %v417 = vsel %vm373, %v347, 0
      %v420 = vsel %vm373, %v348, 0
      %v423 = vsel %vm373, %v349, 0
      %v426 = vsel %vm373, %v350, 0
      %v429 = vsel %vm373, %v351, 0
      %v432 = vsel %vm373, %v352, 0
      %v435 = vsel %vm373, %v353, 0
      %v438 = vsel %vm373, %v354, 0
      %v441 = vsel %vm373, %v355, 0
      %v444 = vsel %vm373, %v356, 0
      %v447 = vsel %vm373, %v357, 0
      %v450 = vsel %vm373, %v358, 0
      %v453 = vsel %vm373, %v359, 0
      %v456 = vsel %vm373, %v360, 0
      %v459 = vsel %vm373, %v361, 0
      %v462 = vsel %vm373, %v362, 0
      %v465 = vsel %vm373, %v363, 0
      %v468 = vsel %vm373, %v364, 0
      %470 = vmatpush.msra.mxu0 0.0
      %471 = vmatpush.msra.mxu0 0.0
      %472 = vmatpush.msra.mxu0 0.0
      %473 = vmatpush.msra.mxu0 0.0
      %474 = vmatpush.msra.mxu0 0.0
      %475 = vmatpush.msra.mxu0 0.0
      %476 = vmatpush.msra.mxu0 0.0
      %477 = vmatpush.msra.mxu0 0.0
      %478 = vmatpush.msra.mxu0 0.0
      %479 = vmatpush.msra.mxu0 0.0
      %480 = vmatpush.msra.mxu0 0.0
      %481 = vmatpush.msra.mxu0 0.0
      %482 = vmatpush.msra.mxu0 %v368
      %483 = vmatpush.msra.mxu0 %v367
      %484 = vmatpush.msra.mxu0 %v366
      %485 = vmatpush.msra.mxu0 %v365
      %486 = vmatmul.f32.gmra.mxu0 %v375
      %v487 = vpop.f32.mrf.mxu0
      %v488 = vadd.f32 %v371, %v487
      %489 = vmatmul.f32.gmra.mxu0 %v378
      %v490 = vpop.f32.mrf.mxu0
      %v491 = vadd.f32 %v371, %v490
      %492 = vmatmul.f32.gmra.mxu0 %v381
      %v493 = vpop.f32.mrf.mxu0
      %v494 = vadd.f32 %v371, %v493
      %495 = vmatmul.f32.gmra.mxu0 %v384
      %v496 = vpop.f32.mrf.mxu0
      %v497 = vadd.f32 %v371, %v496
      %498 = vmatmul.f32.gmra.mxu0 %v387
      %v499 = vpop.f32.mrf.mxu0
      %v500 = vadd.f32 %v371, %v499
      %501 = vmatmul.f32.gmra.mxu0 %v390
      %v502 = vpop.f32.mrf.mxu0
      %v503 = vadd.f32 %v371, %v502
      %504 = vmatmul.f32.gmra.mxu0 %v393
      %v505 = vpop.f32.mrf.mxu0
      %v506 = vadd.f32 %v371, %v505
      %507 = vmatmul.f32.gmra.mxu0 %v396
      %v508 = vpop.f32.mrf.mxu0
      %v509 = vadd.f32 %v371, %v508
      %510 = vmatmul.f32.gmra.mxu0 %v399
      %v511 = vpop.f32.mrf.mxu0
      %v512 = vadd.f32 %v371, %v511
      %513 = vmatmul.f32.gmra.mxu0 %v402
      %v514 = vpop.f32.mrf.mxu0
      %v515 = vadd.f32 %v371, %v514
      %516 = vmatmul.f32.gmra.mxu0 %v405
      %v517 = vpop.f32.mrf.mxu0
      %v518 = vadd.f32 %v371, %v517
      %519 = vmatmul.f32.gmra.mxu0 %v408
      %v520 = vpop.f32.mrf.mxu0
      %v521 = vadd.f32 %v371, %v520
      %522 = vmatmul.f32.gmra.mxu0 %v411
      %v523 = vpop.f32.mrf.mxu0
      %v524 = vadd.f32 %v371, %v523
      %525 = vmatmul.f32.gmra.mxu0 %v414
      %v526 = vpop.f32.mrf.mxu0
      %v527 = vadd.f32 %v371, %v526
      %528 = vmatmul.f32.gmra.mxu0 %v417
      %v529 = vpop.f32.mrf.mxu0
      %v530 = vadd.f32 %v371, %v529
      %531 = vmatmul.f32.gmra.mxu0 %v420
      %v532 = vpop.f32.mrf.mxu0
      %v533 = vadd.f32 %v371, %v532
      %534 = vmatmul.f32.gmra.mxu0 %v423
      %v535 = vpop.f32.mrf.mxu0
      %v536 = vadd.f32 %v371, %v535
      %537 = vmatmul.f32.gmra.mxu0 %v426
      %v538 = vpop.f32.mrf.mxu0
      %v539 = vadd.f32 %v371, %v538
      %540 = vmatmul.f32.gmra.mxu0 %v429
      %v541 = vpop.f32.mrf.mxu0
      %v542 = vadd.f32 %v371, %v541
      %543 = vmatmul.f32.gmra.mxu0 %v432
      %v544 = vpop.f32.mrf.mxu0
      %v545 = vadd.f32 %v371, %v544
      %546 = vmatmul.f32.gmra.mxu0 %v435
      %v547 = vpop.f32.mrf.mxu0
      %v548 = vadd.f32 %v371, %v547
      %549 = vmatmul.f32.gmra.mxu0 %v438
      %v550 = vpop.f32.mrf.mxu0
      %v551 = vadd.f32 %v371, %v550
      %552 = vmatmul.f32.gmra.mxu0 %v441
      %v553 = vpop.f32.mrf.mxu0
      %v554 = vadd.f32 %v371, %v553
      %555 = vmatmul.f32.gmra.mxu0 %v444
      %v556 = vpop.f32.mrf.mxu0
      %v557 = vadd.f32 %v371, %v556
      %558 = vmatmul.f32.gmra.mxu0 %v447
      %v559 = vpop.f32.mrf.mxu0
      %v560 = vadd.f32 %v371, %v559
      %561 = vmatmul.f32.gmra.mxu0 %v450
      %v562 = vpop.f32.mrf.mxu0
      %v563 = vadd.f32 %v371, %v562
      %564 = vmatmul.f32.gmra.mxu0 %v453
      %v565 = vpop.f32.mrf.mxu0
      %v566 = vadd.f32 %v371, %v565
      %567 = vmatmul.f32.gmra.mxu0 %v456
      %v568 = vpop.f32.mrf.mxu0
      %v569 = vadd.f32 %v371, %v568
      %570 = vmatmul.f32.gmra.mxu0 %v459
      %v571 = vpop.f32.mrf.mxu0
      %v572 = vadd.f32 %v371, %v571
      %573 = vmatmul.f32.gmra.mxu0 %v462
      %v574 = vpop.f32.mrf.mxu0
      %v575 = vadd.f32 %v371, %v574
      %576 = vmatmul.f32.gmra.mxu0 %v465
      %v577 = vpop.f32.mrf.mxu0
      %v578 = vadd.f32 %v371, %v577
      %579 = vmatmul.f32.gmra.mxu0 %v468
      %v580 = vpop.f32.mrf.mxu0
      %v581 = vadd.f32 %v371, %v580
      %582 = vdwg.mxu0
      %v583 = vlaneseq
      %v584 = vand.u32 %v583, 127
      loop: start=0, step=1, limit=8
      $region57: #{local_global_feature_mixing.1} parent=55 // loop_pre_header
        _
      $region58: #{local_global_feature_mixing.1} parent=55 // loop_header
        %s586 = sphi 0, %s590
        %p587 = scmp.ge.s32.totalorder %s586, 8
        %v591 = vphi 0.0, %v1948
        %v592 = vphi 0.0, %v1949
        %v593 = vphi 0.0, %v1950
        %v594 = vphi 0.0, %v1951
        %v595 = vphi 0.0, %v1952
        %v596 = vphi 0.0, %v1953
        %v597 = vphi 0.0, %v1954
        %v598 = vphi 0.0, %v1955
        %v599 = vphi 0.0, %v1956
        %v600 = vphi 0.0, %v1957
        %v601 = vphi 0.0, %v1958
        %v602 = vphi 0.0, %v1959
        %v603 = vphi 0.0, %v1960
        %v604 = vphi 0.0, %v1961
        %v605 = vphi 0.0, %v1962
        %v606 = vphi 0.0, %v1963
        %v607 = vphi 0.0, %v1964
        %v608 = vphi 0.0, %v1965
        %v609 = vphi 0.0, %v1966
        %v610 = vphi 0.0, %v1967
        %v611 = vphi 0.0, %v1968
        %v612 = vphi 0.0, %v1969
        %v613 = vphi 0.0, %v1970
        %v614 = vphi 0.0, %v1971
        %v615 = vphi 0.0, %v1972
        %v616 = vphi 0.0, %v1973
        %v617 = vphi 0.0, %v1974
        %v618 = vphi 0.0, %v1975
        %v619 = vphi 0.0, %v1976
        %v620 = vphi 0.0, %v1977
        %v621 = vphi 0.0, %v1978
        %v622 = vphi 0.0, %v1979
      $region59: #{local_global_feature_mixing.1} parent=55 // loop_header_branch
        %589 = sbr.rel (%p587) target = $region63
      $region60: #{local_global_feature_mixing.1} parent=55 // loop_body
        %s623 = smul.u32 %s586, 4
        %v624 = vstv %s623
        %vm625 = vcmp.ge.s32.totalorder %v584, %v624
        %s626 = sadd.s32 %s623, 4
        %v627 = vstv %s626
        %vm628 = vcmp.lt.s32.totalorder %v584, %v627
        %vm629 = vmand %vm625, %vm628
        %v630 = vsel %vm629, 1, 0
        %vm631 = vcmp.eq.s32.totalorder %v630, 1
        %v632 = vsel %vm631, %v488, 0.0
        %v633 = vsel %vm631, %v491, 0.0
        %v634 = vsel %vm631, %v494, 0.0
        %v635 = vsel %vm631, %v497, 0.0
        %v636 = vsel %vm631, %v500, 0.0
        %v637 = vsel %vm631, %v503, 0.0
        %v638 = vsel %vm631, %v506, 0.0
        %v639 = vsel %vm631, %v509, 0.0
        %v640 = vsel %vm631, %v512, 0.0
        %v641 = vsel %vm631, %v515, 0.0
        %v642 = vsel %vm631, %v518, 0.0
        %v643 = vsel %vm631, %v521, 0.0
        %v644 = vsel %vm631, %v524, 0.0
        %v645 = vsel %vm631, %v527, 0.0
        %v646 = vsel %vm631, %v530, 0.0
        %v647 = vsel %vm631, %v533, 0.0
        %v648 = vsel %vm631, %v536, 0.0
        %v649 = vsel %vm631, %v539, 0.0
        %v650 = vsel %vm631, %v542, 0.0
        %v651 = vsel %vm631, %v545, 0.0
        %v652 = vsel %vm631, %v548, 0.0
        %v653 = vsel %vm631, %v551, 0.0
        %v654 = vsel %vm631, %v554, 0.0
        %v655 = vsel %vm631, %v557, 0.0
        %v656 = vsel %vm631, %v560, 0.0
        %v657 = vsel %vm631, %v563, 0.0
        %v658 = vsel %vm631, %v566, 0.0
        %v659 = vsel %vm631, %v569, 0.0
        %v660 = vsel %vm631, %v572, 0.0
        %v661 = vsel %vm631, %v575, 0.0
        %v662 = vsel %vm631, %v578, 0.0
        %v663 = vsel %vm631, %v581, 0.0
        %696 = vrot.lane.b32.xlu0 %v488, 96
        %v697 = vpop.permute.xlu0 %696
        %698 = vrot.lane.b32.xlu0 %v491, 96
        %v699 = vpop.permute.xlu0 %698
        %700 = vrot.lane.b32.xlu0 %v494, 96
        %v701 = vpop.permute.xlu0 %700
        %702 = vrot.lane.b32.xlu0 %v497, 96
        %v703 = vpop.permute.xlu0 %702
        %704 = vrot.lane.b32.xlu0 %v500, 96
        %v705 = vpop.permute.xlu0 %704
        %706 = vrot.lane.b32.xlu0 %v503, 96
        %v707 = vpop.permute.xlu0 %706
        %708 = vrot.lane.b32.xlu0 %v506, 96
        %v709 = vpop.permute.xlu0 %708
        %710 = vrot.lane.b32.xlu0 %v509, 96
        %v711 = vpop.permute.xlu0 %710
        %712 = vrot.lane.b32.xlu0 %v512, 96
        %v713 = vpop.permute.xlu0 %712
        %714 = vrot.lane.b32.xlu0 %v515, 96
        %v715 = vpop.permute.xlu0 %714
        %716 = vrot.lane.b32.xlu0 %v518, 96
        %v717 = vpop.permute.xlu0 %716
        %718 = vrot.lane.b32.xlu0 %v521, 96
        %v719 = vpop.permute.xlu0 %718
        %720 = vrot.lane.b32.xlu0 %v524, 96
        %v721 = vpop.permute.xlu0 %720
        %722 = vrot.lane.b32.xlu0 %v527, 96
        %v723 = vpop.permute.xlu0 %722
        %724 = vrot.lane.b32.xlu0 %v530, 96
        %v725 = vpop.permute.xlu0 %724
        %726 = vrot.lane.b32.xlu0 %v533, 96
        %v727 = vpop.permute.xlu0 %726
        %728 = vrot.lane.b32.xlu0 %v536, 96
        %v729 = vpop.permute.xlu0 %728
        %730 = vrot.lane.b32.xlu0 %v539, 96
        %v731 = vpop.permute.xlu0 %730
        %732 = vrot.lane.b32.xlu0 %v542, 96
        %v733 = vpop.permute.xlu0 %732
        %734 = vrot.lane.b32.xlu0 %v545, 96
        %v735 = vpop.permute.xlu0 %734
        %736 = vrot.lane.b32.xlu0 %v548, 96
        %v737 = vpop.permute.xlu0 %736
        %738 = vrot.lane.b32.xlu0 %v551, 96
        %v739 = vpop.permute.xlu0 %738
        %740 = vrot.lane.b32.xlu0 %v554, 96
        %v741 = vpop.permute.xlu0 %740
        %742 = vrot.lane.b32.xlu0 %v557, 96
        %v743 = vpop.permute.xlu0 %742
        %744 = vrot.lane.b32.xlu0 %v560, 96
        %v745 = vpop.permute.xlu0 %744
        %746 = vrot.lane.b32.xlu0 %v563, 96
        %v747 = vpop.permute.xlu0 %746
        %748 = vrot.lane.b32.xlu0 %v566, 96
        %v749 = vpop.permute.xlu0 %748
        %750 = vrot.lane.b32.xlu0 %v569, 96
        %v751 = vpop.permute.xlu0 %750
        %752 = vrot.lane.b32.xlu0 %v572, 96
        %v753 = vpop.permute.xlu0 %752
        %754 = vrot.lane.b32.xlu0 %v575, 96
        %v755 = vpop.permute.xlu0 %754
        %756 = vrot.lane.b32.xlu0 %v578, 96
        %v757 = vpop.permute.xlu0 %756
        %758 = vrot.lane.b32.xlu0 %v581, 96
        %v759 = vpop.permute.xlu0 %758
        %v761 = vsel %vm373, %v632, 0
        %v764 = vsel %vm373, %v633, 0
        %v767 = vsel %vm373, %v634, 0
        %v770 = vsel %vm373, %v635, 0
        %v773 = vsel %vm373, %v636, 0
        %v776 = vsel %vm373, %v637, 0
        %v779 = vsel %vm373, %v638, 0
        %v782 = vsel %vm373, %v639, 0
        %v785 = vsel %vm373, %v640, 0
        %v788 = vsel %vm373, %v641, 0
        %v791 = vsel %vm373, %v642, 0
        %v794 = vsel %vm373, %v643, 0
        %v797 = vsel %vm373, %v644, 0
        %v800 = vsel %vm373, %v645, 0
        %v803 = vsel %vm373, %v646, 0
        %v806 = vsel %vm373, %v647, 0
        %v809 = vsel %vm373, %v648, 0
        %v812 = vsel %vm373, %v649, 0
        %v815 = vsel %vm373, %v650, 0
        %v818 = vsel %vm373, %v651, 0
        %v821 = vsel %vm373, %v652, 0
        %v824 = vsel %vm373, %v653, 0
        %v827 = vsel %vm373, %v654, 0
        %v830 = vsel %vm373, %v655, 0
        %v833 = vsel %vm373, %v656, 0
        %v836 = vsel %vm373, %v657, 0
        %v839 = vsel %vm373, %v658, 0
        %v842 = vsel %vm373, %v659, 0
        %v845 = vsel %vm373, %v660, 0
        %v848 = vsel %vm373, %v661, 0
        %v851 = vsel %vm373, %v662, 0
        %v854 = vsel %vm373, %v663, 0
        %v856 = vsel %vm373, %v697, 0
        %v858 = vsel %vm373, %v699, 0
        %v860 = vsel %vm373, %v701, 0
        %v862 = vsel %vm373, %v703, 0
        %v864 = vsel %vm373, %v705, 0
        %v866 = vsel %vm373, %v707, 0
        %v868 = vsel %vm373, %v709, 0
        %v870 = vsel %vm373, %v711, 0
        %v872 = vsel %vm373, %v713, 0
        %v874 = vsel %vm373, %v715, 0
        %v876 = vsel %vm373, %v717, 0
        %v878 = vsel %vm373, %v719, 0
        %v880 = vsel %vm373, %v721, 0
        %v882 = vsel %vm373, %v723, 0
        %v884 = vsel %vm373, %v725, 0
        %v886 = vsel %vm373, %v727, 0
        %v888 = vsel %vm373, %v729, 0
        %v890 = vsel %vm373, %v731, 0
        %v892 = vsel %vm373, %v733, 0
        %v894 = vsel %vm373, %v735, 0
        %v896 = vsel %vm373, %v737, 0
        %v898 = vsel %vm373, %v739, 0
        %v900 = vsel %vm373, %v741, 0
        %v902 = vsel %vm373, %v743, 0
        %v904 = vsel %vm373, %v745, 0
        %v906 = vsel %vm373, %v747, 0
        %v908 = vsel %vm373, %v749, 0
        %v910 = vsel %vm373, %v751, 0
        %v912 = vsel %vm373, %v753, 0
        %v914 = vsel %vm373, %v755, 0
        %v916 = vsel %vm373, %v757, 0
        %v918 = vsel %vm373, %v759, 0
        %920 = vmatpush.xpose.msra.mxu0 %v886
        %921 = vmatpush.xpose.msra.mxu0 %v884
        %922 = vmatpush.xpose.msra.mxu0 %v882
        %923 = vmatpush.xpose.msra.mxu0 %v880
        %924 = vmatpush.xpose.msra.mxu0 %v878
        %925 = vmatpush.xpose.msra.mxu0 %v876
        %926 = vmatpush.xpose.msra.mxu0 %v874
        %927 = vmatpush.xpose.msra.mxu0 %v872
        %928 = vmatpush.xpose.msra.mxu0 %v870
        %929 = vmatpush.xpose.msra.mxu0 %v868
        %930 = vmatpush.xpose.msra.mxu0 %v866
        %931 = vmatpush.xpose.msra.mxu0 %v864
        %932 = vmatpush.xpose.msra.mxu0 %v862
        %933 = vmatpush.xpose.msra.mxu0 %v860
        %934 = vmatpush.xpose.msra.mxu0 %v858
        %935 = vmatpush.xpose.msra.mxu0 %v856
        %936 = vmatmul.f32.gmra.mxu0 %v761
        %v937 = vpop.f32.mrf.mxu0
        %v938 = vadd.f32 0.0, %v937
        %939 = vmatmul.f32.gmra.mxu0 %v764
        %v940 = vpop.f32.mrf.mxu0
        %v941 = vadd.f32 0.0, %v940
        %942 = vmatmul.f32.gmra.mxu0 %v767
        %v943 = vpop.f32.mrf.mxu0
        %v944 = vadd.f32 0.0, %v943
        %945 = vmatmul.f32.gmra.mxu0 %v770
        %v946 = vpop.f32.mrf.mxu0
        %v947 = vadd.f32 0.0, %v946
        %948 = vmatmul.f32.gmra.mxu0 %v773
        %v949 = vpop.f32.mrf.mxu0
        %v950 = vadd.f32 0.0, %v949
        %951 = vmatmul.f32.gmra.mxu0 %v776
        %v952 = vpop.f32.mrf.mxu0
        %v953 = vadd.f32 0.0, %v952
        %954 = vmatmul.f32.gmra.mxu0 %v779
        %v955 = vpop.f32.mrf.mxu0
        %v956 = vadd.f32 0.0, %v955
        %957 = vmatmul.f32.gmra.mxu0 %v782
        %v958 = vpop.f32.mrf.mxu0
        %v959 = vadd.f32 0.0, %v958
        %960 = vmatmul.f32.gmra.mxu0 %v785
        %v961 = vpop.f32.mrf.mxu0
        %v962 = vadd.f32 0.0, %v961
        %963 = vmatmul.f32.gmra.mxu0 %v788
        %v964 = vpop.f32.mrf.mxu0
        %v965 = vadd.f32 0.0, %v964
        %966 = vmatmul.f32.gmra.mxu0 %v791
        %v967 = vpop.f32.mrf.mxu0
        %v968 = vadd.f32 0.0, %v967
        %969 = vmatmul.f32.gmra.mxu0 %v794
        %v970 = vpop.f32.mrf.mxu0
        %v971 = vadd.f32 0.0, %v970
        %972 = vmatmul.f32.gmra.mxu0 %v797
        %v973 = vpop.f32.mrf.mxu0
        %v974 = vadd.f32 0.0, %v973
        %975 = vmatmul.f32.gmra.mxu0 %v800
        %v976 = vpop.f32.mrf.mxu0
        %v977 = vadd.f32 0.0, %v976
        %978 = vmatmul.f32.gmra.mxu0 %v803
        %v979 = vpop.f32.mrf.mxu0
        %v980 = vadd.f32 0.0, %v979
        %981 = vmatmul.f32.gmra.mxu0 %v806
        %v982 = vpop.f32.mrf.mxu0
        %v983 = vadd.f32 0.0, %v982
        %984 = vmatmul.f32.gmra.mxu0 %v809
        %v985 = vpop.f32.mrf.mxu0
        %v986 = vadd.f32 0.0, %v985
        %987 = vmatmul.f32.gmra.mxu0 %v812
        %v988 = vpop.f32.mrf.mxu0
        %v989 = vadd.f32 0.0, %v988
        %990 = vmatmul.f32.gmra.mxu0 %v815
        %v991 = vpop.f32.mrf.mxu0
        %v992 = vadd.f32 0.0, %v991
        %993 = vmatmul.f32.gmra.mxu0 %v818
        %v994 = vpop.f32.mrf.mxu0
        %v995 = vadd.f32 0.0, %v994
        %996 = vmatmul.f32.gmra.mxu0 %v821
        %v997 = vpop.f32.mrf.mxu0
        %v998 = vadd.f32 0.0, %v997
        %999 = vmatmul.f32.gmra.mxu0 %v824
        %v1000 = vpop.f32.mrf.mxu0
        %v1001 = vadd.f32 0.0, %v1000
        %1002 = vmatmul.f32.gmra.mxu0 %v827
        %v1003 = vpop.f32.mrf.mxu0
        %v1004 = vadd.f32 0.0, %v1003
        %1005 = vmatmul.f32.gmra.mxu0 %v830
        %v1006 = vpop.f32.mrf.mxu0
        %v1007 = vadd.f32 0.0, %v1006
        %1008 = vmatmul.f32.gmra.mxu0 %v833
        %v1009 = vpop.f32.mrf.mxu0
        %v1010 = vadd.f32 0.0, %v1009
        %1011 = vmatmul.f32.gmra.mxu0 %v836
        %v1012 = vpop.f32.mrf.mxu0
        %v1013 = vadd.f32 0.0, %v1012
        %1014 = vmatmul.f32.gmra.mxu0 %v839
        %v1015 = vpop.f32.mrf.mxu0
        %v1016 = vadd.f32 0.0, %v1015
        %1017 = vmatmul.f32.gmra.mxu0 %v842
        %v1018 = vpop.f32.mrf.mxu0
        %v1019 = vadd.f32 0.0, %v1018
        %1020 = vmatmul.f32.gmra.mxu0 %v845
        %v1021 = vpop.f32.mrf.mxu0
        %v1022 = vadd.f32 0.0, %v1021
        %1023 = vmatmul.f32.gmra.mxu0 %v848
        %v1024 = vpop.f32.mrf.mxu0
        %v1025 = vadd.f32 0.0, %v1024
        %1026 = vmatmul.f32.gmra.mxu0 %v851
        %v1027 = vpop.f32.mrf.mxu0
        %v1028 = vadd.f32 0.0, %v1027
        %1029 = vmatmul.f32.gmra.mxu0 %v854
        %v1030 = vpop.f32.mrf.mxu0
        %v1031 = vadd.f32 0.0, %v1030
        %1032 = vdwg.mxu0
        %1033 = vmatpush.xpose.msra.mxu0 %v918
        %1034 = vmatpush.xpose.msra.mxu0 %v916
        %1035 = vmatpush.xpose.msra.mxu0 %v914
        %1036 = vmatpush.xpose.msra.mxu0 %v912
        %1037 = vmatpush.xpose.msra.mxu0 %v910
        %1038 = vmatpush.xpose.msra.mxu0 %v908
        %1039 = vmatpush.xpose.msra.mxu0 %v906
        %1040 = vmatpush.xpose.msra.mxu0 %v904
        %1041 = vmatpush.xpose.msra.mxu0 %v902
        %1042 = vmatpush.xpose.msra.mxu0 %v900
        %1043 = vmatpush.xpose.msra.mxu0 %v898
        %1044 = vmatpush.xpose.msra.mxu0 %v896
        %1045 = vmatpush.xpose.msra.mxu0 %v894
        %1046 = vmatpush.xpose.msra.mxu0 %v892
        %1047 = vmatpush.xpose.msra.mxu0 %v890
        %1048 = vmatpush.xpose.msra.mxu0 %v888
        %1049 = vmatmul.f32.gmra.mxu0 %v761
        %v1050 = vpop.f32.mrf.mxu0
        %v1051 = vadd.f32 0.0, %v1050
        %1052 = vmatmul.f32.gmra.mxu0 %v764
        %v1053 = vpop.f32.mrf.mxu0
        %v1054 = vadd.f32 0.0, %v1053
        %1055 = vmatmul.f32.gmra.mxu0 %v767
        %v1056 = vpop.f32.mrf.mxu0
        %v1057 = vadd.f32 0.0, %v1056
        %1058 = vmatmul.f32.gmra.mxu0 %v770
        %v1059 = vpop.f32.mrf.mxu0
        %v1060 = vadd.f32 0.0, %v1059
        %1061 = vmatmul.f32.gmra.mxu0 %v773
        %v1062 = vpop.f32.mrf.mxu0
        %v1063 = vadd.f32 0.0, %v1062
        %1064 = vmatmul.f32.gmra.mxu0 %v776
        %v1065 = vpop.f32.mrf.mxu0
        %v1066 = vadd.f32 0.0, %v1065
        %1067 = vmatmul.f32.gmra.mxu0 %v779
        %v1068 = vpop.f32.mrf.mxu0
        %v1069 = vadd.f32 0.0, %v1068
        %1070 = vmatmul.f32.gmra.mxu0 %v782
        %v1071 = vpop.f32.mrf.mxu0
        %v1072 = vadd.f32 0.0, %v1071
        %1073 = vmatmul.f32.gmra.mxu0 %v785
        %v1074 = vpop.f32.mrf.mxu0
        %v1075 = vadd.f32 0.0, %v1074
        %1076 = vmatmul.f32.gmra.mxu0 %v788
        %v1077 = vpop.f32.mrf.mxu0
        %v1078 = vadd.f32 0.0, %v1077
        %1079 = vmatmul.f32.gmra.mxu0 %v791
        %v1080 = vpop.f32.mrf.mxu0
        %v1081 = vadd.f32 0.0, %v1080
        %1082 = vmatmul.f32.gmra.mxu0 %v794
        %v1083 = vpop.f32.mrf.mxu0
        %v1084 = vadd.f32 0.0, %v1083
        %1085 = vmatmul.f32.gmra.mxu0 %v797
        %v1086 = vpop.f32.mrf.mxu0
        %v1087 = vadd.f32 0.0, %v1086
        %1088 = vmatmul.f32.gmra.mxu0 %v800
        %v1089 = vpop.f32.mrf.mxu0
        %v1090 = vadd.f32 0.0, %v1089
        %1091 = vmatmul.f32.gmra.mxu0 %v803
        %v1092 = vpop.f32.mrf.mxu0
        %v1093 = vadd.f32 0.0, %v1092
        %1094 = vmatmul.f32.gmra.mxu0 %v806
        %v1095 = vpop.f32.mrf.mxu0
        %v1096 = vadd.f32 0.0, %v1095
        %1097 = vmatmul.f32.gmra.mxu0 %v809
        %v1098 = vpop.f32.mrf.mxu0
        %v1099 = vadd.f32 0.0, %v1098
        %1100 = vmatmul.f32.gmra.mxu0 %v812
        %v1101 = vpop.f32.mrf.mxu0
        %v1102 = vadd.f32 0.0, %v1101
        %1103 = vmatmul.f32.gmra.mxu0 %v815
        %v1104 = vpop.f32.mrf.mxu0
        %v1105 = vadd.f32 0.0, %v1104
        %1106 = vmatmul.f32.gmra.mxu0 %v818
        %v1107 = vpop.f32.mrf.mxu0
        %v1108 = vadd.f32 0.0, %v1107
        %1109 = vmatmul.f32.gmra.mxu0 %v821
        %v1110 = vpop.f32.mrf.mxu0
        %v1111 = vadd.f32 0.0, %v1110
        %1112 = vmatmul.f32.gmra.mxu0 %v824
        %v1113 = vpop.f32.mrf.mxu0
        %v1114 = vadd.f32 0.0, %v1113
        %1115 = vmatmul.f32.gmra.mxu0 %v827
        %v1116 = vpop.f32.mrf.mxu0
        %v1117 = vadd.f32 0.0, %v1116
        %1118 = vmatmul.f32.gmra.mxu0 %v830
        %v1119 = vpop.f32.mrf.mxu0
        %v1120 = vadd.f32 0.0, %v1119
        %1121 = vmatmul.f32.gmra.mxu0 %v833
        %v1122 = vpop.f32.mrf.mxu0
        %v1123 = vadd.f32 0.0, %v1122
        %1124 = vmatmul.f32.gmra.mxu0 %v836
        %v1125 = vpop.f32.mrf.mxu0
        %v1126 = vadd.f32 0.0, %v1125
        %1127 = vmatmul.f32.gmra.mxu0 %v839
        %v1128 = vpop.f32.mrf.mxu0
        %v1129 = vadd.f32 0.0, %v1128
        %1130 = vmatmul.f32.gmra.mxu0 %v842
        %v1131 = vpop.f32.mrf.mxu0
        %v1132 = vadd.f32 0.0, %v1131
        %1133 = vmatmul.f32.gmra.mxu0 %v845
        %v1134 = vpop.f32.mrf.mxu0
        %v1135 = vadd.f32 0.0, %v1134
        %1136 = vmatmul.f32.gmra.mxu0 %v848
        %v1137 = vpop.f32.mrf.mxu0
        %v1138 = vadd.f32 0.0, %v1137
        %1139 = vmatmul.f32.gmra.mxu0 %v851
        %v1140 = vpop.f32.mrf.mxu0
        %v1141 = vadd.f32 0.0, %v1140
        %1142 = vmatmul.f32.gmra.mxu0 %v854
        %v1143 = vpop.f32.mrf.mxu0
        %v1144 = vadd.f32 0.0, %v1143
        %1145 = vdwg.mxu0
        %v1146 = vmax.f32 %v938, %v1051
        %1147 = vmax.xlane.f32.xlu0 %v1146
        %v1148 = vpop.xlane.xlu0 %1147
        %v1149 = vmax.f32 %v941, %v1054
        %1150 = vmax.xlane.f32.xlu0 %v1149
        %v1151 = vpop.xlane.xlu0 %1150
        %v1152 = vmax.f32 %v944, %v1057
        %1153 = vmax.xlane.f32.xlu0 %v1152
        %v1154 = vpop.xlane.xlu0 %1153
        %v1155 = vmax.f32 %v947, %v1060
        %1156 = vmax.xlane.f32.xlu0 %v1155
        %v1157 = vpop.xlane.xlu0 %1156
        %v1158 = vmax.f32 %v950, %v1063
        %1159 = vmax.xlane.f32.xlu0 %v1158
        %v1160 = vpop.xlane.xlu0 %1159
        %v1161 = vmax.f32 %v953, %v1066
        %1162 = vmax.xlane.f32.xlu0 %v1161
        %v1163 = vpop.xlane.xlu0 %1162
        %v1164 = vmax.f32 %v956, %v1069
        %1165 = vmax.xlane.f32.xlu0 %v1164
        %v1166 = vpop.xlane.xlu0 %1165
        %v1167 = vmax.f32 %v959, %v1072
        %1168 = vmax.xlane.f32.xlu0 %v1167
        %v1169 = vpop.xlane.xlu0 %1168
        %v1170 = vmax.f32 %v962, %v1075
        %1171 = vmax.xlane.f32.xlu0 %v1170
        %v1172 = vpop.xlane.xlu0 %1171
        %v1173 = vmax.f32 %v965, %v1078
        %1174 = vmax.xlane.f32.xlu0 %v1173
        %v1175 = vpop.xlane.xlu0 %1174
        %v1176 = vmax.f32 %v968, %v1081
        %1177 = vmax.xlane.f32.xlu0 %v1176
        %v1178 = vpop.xlane.xlu0 %1177
        %v1179 = vmax.f32 %v971, %v1084
        %1180 = vmax.xlane.f32.xlu0 %v1179
        %v1181 = vpop.xlane.xlu0 %1180
        %v1182 = vmax.f32 %v974, %v1087
        %1183 = vmax.xlane.f32.xlu0 %v1182
        %v1184 = vpop.xlane.xlu0 %1183
        %v1185 = vmax.f32 %v977, %v1090
        %1186 = vmax.xlane.f32.xlu0 %v1185
        %v1187 = vpop.xlane.xlu0 %1186
        %v1188 = vmax.f32 %v980, %v1093
        %1189 = vmax.xlane.f32.xlu0 %v1188
        %v1190 = vpop.xlane.xlu0 %1189
        %v1191 = vmax.f32 %v983, %v1096
        %1192 = vmax.xlane.f32.xlu0 %v1191
        %v1193 = vpop.xlane.xlu0 %1192
        %v1194 = vmax.f32 %v986, %v1099
        %1195 = vmax.xlane.f32.xlu0 %v1194
        %v1196 = vpop.xlane.xlu0 %1195
        %v1197 = vmax.f32 %v989, %v1102
        %1198 = vmax.xlane.f32.xlu0 %v1197
        %v1199 = vpop.xlane.xlu0 %1198
        %v1200 = vmax.f32 %v992, %v1105
        %1201 = vmax.xlane.f32.xlu0 %v1200
        %v1202 = vpop.xlane.xlu0 %1201
        %v1203 = vmax.f32 %v995, %v1108
        %1204 = vmax.xlane.f32.xlu0 %v1203
        %v1205 = vpop.xlane.xlu0 %1204
        %v1206 = vmax.f32 %v998, %v1111
        %1207 = vmax.xlane.f32.xlu0 %v1206
        %v1208 = vpop.xlane.xlu0 %1207
        %v1209 = vmax.f32 %v1001, %v1114
        %1210 = vmax.xlane.f32.xlu0 %v1209
        %v1211 = vpop.xlane.xlu0 %1210
        %v1212 = vmax.f32 %v1004, %v1117
        %1213 = vmax.xlane.f32.xlu0 %v1212
        %v1214 = vpop.xlane.xlu0 %1213
        %v1215 = vmax.f32 %v1007, %v1120
        %1216 = vmax.xlane.f32.xlu0 %v1215
        %v1217 = vpop.xlane.xlu0 %1216
        %v1218 = vmax.f32 %v1010, %v1123
        %1219 = vmax.xlane.f32.xlu0 %v1218
        %v1220 = vpop.xlane.xlu0 %1219
        %v1221 = vmax.f32 %v1013, %v1126
        %1222 = vmax.xlane.f32.xlu0 %v1221
        %v1223 = vpop.xlane.xlu0 %1222
        %v1224 = vmax.f32 %v1016, %v1129
        %1225 = vmax.xlane.f32.xlu0 %v1224
        %v1226 = vpop.xlane.xlu0 %1225
        %v1227 = vmax.f32 %v1019, %v1132
        %1228 = vmax.xlane.f32.xlu0 %v1227
        %v1229 = vpop.xlane.xlu0 %1228
        %v1230 = vmax.f32 %v1022, %v1135
        %1231 = vmax.xlane.f32.xlu0 %v1230
        %v1232 = vpop.xlane.xlu0 %1231
        %v1233 = vmax.f32 %v1025, %v1138
        %1234 = vmax.xlane.f32.xlu0 %v1233
        %v1235 = vpop.xlane.xlu0 %1234
        %v1236 = vmax.f32 %v1028, %v1141
        %1237 = vmax.xlane.f32.xlu0 %v1236
        %v1238 = vpop.xlane.xlu0 %1237
        %v1239 = vmax.f32 %v1031, %v1144
        %1240 = vmax.xlane.f32.xlu0 %v1239
        %v1241 = vpop.xlane.xlu0 %1240
        %v1242 = vsub.f32 %v938, %v1148
        %v1243 = vsub.f32 %v1051, %v1148
        %v1244 = vsub.f32 %v941, %v1151
        %v1245 = vsub.f32 %v1054, %v1151
        %v1246 = vsub.f32 %v944, %v1154
        %v1247 = vsub.f32 %v1057, %v1154
        %v1248 = vsub.f32 %v947, %v1157
        %v1249 = vsub.f32 %v1060, %v1157
        %v1250 = vsub.f32 %v950, %v1160
        %v1251 = vsub.f32 %v1063, %v1160
        %v1252 = vsub.f32 %v953, %v1163
        %v1253 = vsub.f32 %v1066, %v1163
        %v1254 = vsub.f32 %v956, %v1166
        %v1255 = vsub.f32 %v1069, %v1166
        %v1256 = vsub.f32 %v959, %v1169
        %v1257 = vsub.f32 %v1072, %v1169
        %v1258 = vsub.f32 %v962, %v1172
        %v1259 = vsub.f32 %v1075, %v1172
        %v1260 = vsub.f32 %v965, %v1175
        %v1261 = vsub.f32 %v1078, %v1175
        %v1262 = vsub.f32 %v968, %v1178
        %v1263 = vsub.f32 %v1081, %v1178
        %v1264 = vsub.f32 %v971, %v1181
        %v1265 = vsub.f32 %v1084, %v1181
        %v1266 = vsub.f32 %v974, %v1184
        %v1267 = vsub.f32 %v1087, %v1184
        %v1268 = vsub.f32 %v977, %v1187
        %v1269 = vsub.f32 %v1090, %v1187
        %v1270 = vsub.f32 %v980, %v1190
        %v1271 = vsub.f32 %v1093, %v1190
        %v1272 = vsub.f32 %v983, %v1193
        %v1273 = vsub.f32 %v1096, %v1193
        %v1274 = vsub.f32 %v986, %v1196
        %v1275 = vsub.f32 %v1099, %v1196
        %v1276 = vsub.f32 %v989, %v1199
        %v1277 = vsub.f32 %v1102, %v1199
        %v1278 = vsub.f32 %v992, %v1202
        %v1279 = vsub.f32 %v1105, %v1202
        %v1280 = vsub.f32 %v995, %v1205
        %v1281 = vsub.f32 %v1108, %v1205
        %v1282 = vsub.f32 %v998, %v1208
        %v1283 = vsub.f32 %v1111, %v1208
        %v1284 = vsub.f32 %v1001, %v1211
        %v1285 = vsub.f32 %v1114, %v1211
        %v1286 = vsub.f32 %v1004, %v1214
        %v1287 = vsub.f32 %v1117, %v1214
        %v1288 = vsub.f32 %v1007, %v1217
        %v1289 = vsub.f32 %v1120, %v1217
        %v1290 = vsub.f32 %v1010, %v1220
        %v1291 = vsub.f32 %v1123, %v1220
        %v1292 = vsub.f32 %v1013, %v1223
        %v1293 = vsub.f32 %v1126, %v1223
        %v1294 = vsub.f32 %v1016, %v1226
        %v1295 = vsub.f32 %v1129, %v1226
        %v1296 = vsub.f32 %v1019, %v1229
        %v1297 = vsub.f32 %v1132, %v1229
        %v1298 = vsub.f32 %v1022, %v1232
        %v1299 = vsub.f32 %v1135, %v1232
        %v1300 = vsub.f32 %v1025, %v1235
        %v1301 = vsub.f32 %v1138, %v1235
        %v1302 = vsub.f32 %v1028, %v1238
        %v1303 = vsub.f32 %v1141, %v1238
        %v1304 = vsub.f32 %v1031, %v1241
        %v1305 = vsub.f32 %v1144, %v1241
        %v1306 = vmul.f32 %v1242, 1.442695
        %v1307 = vpow.pop %v1306
        %v1308 = vmul.f32 %v1243, 1.442695
        %v1309 = vpow.pop %v1308
        %v1310 = vmul.f32 %v1244, 1.442695
        %v1311 = vpow.pop %v1310
        %v1312 = vmul.f32 %v1245, 1.442695
        %v1313 = vpow.pop %v1312
        %v1314 = vmul.f32 %v1246, 1.442695
        %v1315 = vpow.pop %v1314
        %v1316 = vmul.f32 %v1247, 1.442695
        %v1317 = vpow.pop %v1316
        %v1318 = vmul.f32 %v1248, 1.442695
        %v1319 = vpow.pop %v1318
        %v1320 = vmul.f32 %v1249, 1.442695
        %v1321 = vpow.pop %v1320
        %v1322 = vmul.f32 %v1250, 1.442695
        %v1323 = vpow.pop %v1322
        %v1324 = vmul.f32 %v1251, 1.442695
        %v1325 = vpow.pop %v1324
        %v1326 = vmul.f32 %v1252, 1.442695
        %v1327 = vpow.pop %v1326
        %v1328 = vmul.f32 %v1253, 1.442695
        %v1329 = vpow.pop %v1328
        %v1330 = vmul.f32 %v1254, 1.442695
        %v1331 = vpow.pop %v1330
        %v1332 = vmul.f32 %v1255, 1.442695
        %v1333 = vpow.pop %v1332
        %v1334 = vmul.f32 %v1256, 1.442695
        %v1335 = vpow.pop %v1334
        %v1336 = vmul.f32 %v1257, 1.442695
        %v1337 = vpow.pop %v1336
        %v1338 = vmul.f32 %v1258, 1.442695
        %v1339 = vpow.pop %v1338
        %v1340 = vmul.f32 %v1259, 1.442695
        %v1341 = vpow.pop %v1340
        %v1342 = vmul.f32 %v1260, 1.442695
        %v1343 = vpow.pop %v1342
        %v1344 = vmul.f32 %v1261, 1.442695
        %v1345 = vpow.pop %v1344
        %v1346 = vmul.f32 %v1262, 1.442695
        %v1347 = vpow.pop %v1346
        %v1348 = vmul.f32 %v1263, 1.442695
        %v1349 = vpow.pop %v1348
        %v1350 = vmul.f32 %v1264, 1.442695
        %v1351 = vpow.pop %v1350
        %v1352 = vmul.f32 %v1265, 1.442695
        %v1353 = vpow.pop %v1352
        %v1354 = vmul.f32 %v1266, 1.442695
        %v1355 = vpow.pop %v1354
        %v1356 = vmul.f32 %v1267, 1.442695
        %v1357 = vpow.pop %v1356
        %v1358 = vmul.f32 %v1268, 1.442695
        %v1359 = vpow.pop %v1358
        %v1360 = vmul.f32 %v1269, 1.442695
        %v1361 = vpow.pop %v1360
        %v1362 = vmul.f32 %v1270, 1.442695
        %v1363 = vpow.pop %v1362
        %v1364 = vmul.f32 %v1271, 1.442695
        %v1365 = vpow.pop %v1364
        %v1366 = vmul.f32 %v1272, 1.442695
        %v1367 = vpow.pop %v1366
        %v1368 = vmul.f32 %v1273, 1.442695
        %v1369 = vpow.pop %v1368
        %v1370 = vmul.f32 %v1274, 1.442695
        %v1371 = vpow.pop %v1370
        %v1372 = vmul.f32 %v1275, 1.442695
        %v1373 = vpow.pop %v1372
        %v1374 = vmul.f32 %v1276, 1.442695
        %v1375 = vpow.pop %v1374
        %v1376 = vmul.f32 %v1277, 1.442695
        %v1377 = vpow.pop %v1376
        %v1378 = vmul.f32 %v1278, 1.442695
        %v1379 = vpow.pop %v1378
        %v1380 = vmul.f32 %v1279, 1.442695
        %v1381 = vpow.pop %v1380
        %v1382 = vmul.f32 %v1280, 1.442695
        %v1383 = vpow.pop %v1382
        %v1384 = vmul.f32 %v1281, 1.442695
        %v1385 = vpow.pop %v1384
        %v1386 = vmul.f32 %v1282, 1.442695
        %v1387 = vpow.pop %v1386
        %v1388 = vmul.f32 %v1283, 1.442695
        %v1389 = vpow.pop %v1388
        %v1390 = vmul.f32 %v1284, 1.442695
        %v1391 = vpow.pop %v1390
        %v1392 = vmul.f32 %v1285, 1.442695
        %v1393 = vpow.pop %v1392
        %v1394 = vmul.f32 %v1286, 1.442695
        %v1395 = vpow.pop %v1394
        %v1396 = vmul.f32 %v1287, 1.442695
        %v1397 = vpow.pop %v1396
        %v1398 = vmul.f32 %v1288, 1.442695
        %v1399 = vpow.pop %v1398
        %v1400 = vmul.f32 %v1289, 1.442695
        %v1401 = vpow.pop %v1400
        %v1402 = vmul.f32 %v1290, 1.442695
        %v1403 = vpow.pop %v1402
        %v1404 = vmul.f32 %v1291, 1.442695
        %v1405 = vpow.pop %v1404
        %v1406 = vmul.f32 %v1292, 1.442695
        %v1407 = vpow.pop %v1406
        %v1408 = vmul.f32 %v1293, 1.442695
        %v1409 = vpow.pop %v1408
        %v1410 = vmul.f32 %v1294, 1.442695
        %v1411 = vpow.pop %v1410
        %v1412 = vmul.f32 %v1295, 1.442695
        %v1413 = vpow.pop %v1412
        %v1414 = vmul.f32 %v1296, 1.442695
        %v1415 = vpow.pop %v1414
        %v1416 = vmul.f32 %v1297, 1.442695
        %v1417 = vpow.pop %v1416
        %v1418 = vmul.f32 %v1298, 1.442695
        %v1419 = vpow.pop %v1418
        %v1420 = vmul.f32 %v1299, 1.442695
        %v1421 = vpow.pop %v1420
        %v1422 = vmul.f32 %v1300, 1.442695
        %v1423 = vpow.pop %v1422
        %v1424 = vmul.f32 %v1301, 1.442695
        %v1425 = vpow.pop %v1424
        %v1426 = vmul.f32 %v1302, 1.442695
        %v1427 = vpow.pop %v1426
        %v1428 = vmul.f32 %v1303, 1.442695
        %v1429 = vpow.pop %v1428
        %v1430 = vmul.f32 %v1304, 1.442695
        %v1431 = vpow.pop %v1430
        %v1432 = vmul.f32 %v1305, 1.442695
        %v1433 = vpow.pop %v1432
        %v1434 = vadd.f32 %v1307, %v1309
        %1435 = vadd.xlane.f32.xlu0 %v1434
        %v1436 = vpop.xlane.xlu0 %1435
        %v1437 = vadd.f32 %v1311, %v1313
        %1438 = vadd.xlane.f32.xlu0 %v1437
        %v1439 = vpop.xlane.xlu0 %1438
        %v1440 = vadd.f32 %v1315, %v1317
        %1441 = vadd.xlane.f32.xlu0 %v1440
        %v1442 = vpop.xlane.xlu0 %1441
        %v1443 = vadd.f32 %v1319, %v1321
        %1444 = vadd.xlane.f32.xlu0 %v1443
        %v1445 = vpop.xlane.xlu0 %1444
        %v1446 = vadd.f32 %v1323, %v1325
        %1447 = vadd.xlane.f32.xlu0 %v1446
        %v1448 = vpop.xlane.xlu0 %1447
        %v1449 = vadd.f32 %v1327, %v1329
        %1450 = vadd.xlane.f32.xlu0 %v1449
        %v1451 = vpop.xlane.xlu0 %1450
        %v1452 = vadd.f32 %v1331, %v1333
        %1453 = vadd.xlane.f32.xlu0 %v1452
        %v1454 = vpop.xlane.xlu0 %1453
        %v1455 = vadd.f32 %v1335, %v1337
        %1456 = vadd.xlane.f32.xlu0 %v1455
        %v1457 = vpop.xlane.xlu0 %1456
        %v1458 = vadd.f32 %v1339, %v1341
        %1459 = vadd.xlane.f32.xlu0 %v1458
        %v1460 = vpop.xlane.xlu0 %1459
        %v1461 = vadd.f32 %v1343, %v1345
        %1462 = vadd.xlane.f32.xlu0 %v1461
        %v1463 = vpop.xlane.xlu0 %1462
        %v1464 = vadd.f32 %v1347, %v1349
        %1465 = vadd.xlane.f32.xlu0 %v1464
        %v1466 = vpop.xlane.xlu0 %1465
        %v1467 = vadd.f32 %v1351, %v1353
        %1468 = vadd.xlane.f32.xlu0 %v1467
        %v1469 = vpop.xlane.xlu0 %1468
        %v1470 = vadd.f32 %v1355, %v1357
        %1471 = vadd.xlane.f32.xlu0 %v1470
        %v1472 = vpop.xlane.xlu0 %1471
        %v1473 = vadd.f32 %v1359, %v1361
        %1474 = vadd.xlane.f32.xlu0 %v1473
        %v1475 = vpop.xlane.xlu0 %1474
        %v1476 = vadd.f32 %v1363, %v1365
        %1477 = vadd.xlane.f32.xlu0 %v1476
        %v1478 = vpop.xlane.xlu0 %1477
        %v1479 = vadd.f32 %v1367, %v1369
        %1480 = vadd.xlane.f32.xlu0 %v1479
        %v1481 = vpop.xlane.xlu0 %1480
        %v1482 = vadd.f32 %v1371, %v1373
        %1483 = vadd.xlane.f32.xlu0 %v1482
        %v1484 = vpop.xlane.xlu0 %1483
        %v1485 = vadd.f32 %v1375, %v1377
        %1486 = vadd.xlane.f32.xlu0 %v1485
        %v1487 = vpop.xlane.xlu0 %1486
        %v1488 = vadd.f32 %v1379, %v1381
        %1489 = vadd.xlane.f32.xlu0 %v1488
        %v1490 = vpop.xlane.xlu0 %1489
        %v1491 = vadd.f32 %v1383, %v1385
        %1492 = vadd.xlane.f32.xlu0 %v1491
        %v1493 = vpop.xlane.xlu0 %1492
        %v1494 = vadd.f32 %v1387, %v1389
        %1495 = vadd.xlane.f32.xlu0 %v1494
        %v1496 = vpop.xlane.xlu0 %1495
        %v1497 = vadd.f32 %v1391, %v1393
        %1498 = vadd.xlane.f32.xlu0 %v1497
        %v1499 = vpop.xlane.xlu0 %1498
        %v1500 = vadd.f32 %v1395, %v1397
        %1501 = vadd.xlane.f32.xlu0 %v1500
        %v1502 = vpop.xlane.xlu0 %1501
        %v1503 = vadd.f32 %v1399, %v1401
        %1504 = vadd.xlane.f32.xlu0 %v1503
        %v1505 = vpop.xlane.xlu0 %1504
        %v1506 = vadd.f32 %v1403, %v1405
        %1507 = vadd.xlane.f32.xlu0 %v1506
        %v1508 = vpop.xlane.xlu0 %1507
        %v1509 = vadd.f32 %v1407, %v1409
        %1510 = vadd.xlane.f32.xlu0 %v1509
        %v1511 = vpop.xlane.xlu0 %1510
        %v1512 = vadd.f32 %v1411, %v1413
        %1513 = vadd.xlane.f32.xlu0 %v1512
        %v1514 = vpop.xlane.xlu0 %1513
        %v1515 = vadd.f32 %v1415, %v1417
        %1516 = vadd.xlane.f32.xlu0 %v1515
        %v1517 = vpop.xlane.xlu0 %1516
        %v1518 = vadd.f32 %v1419, %v1421
        %1519 = vadd.xlane.f32.xlu0 %v1518
        %v1520 = vpop.xlane.xlu0 %1519
        %v1521 = vadd.f32 %v1423, %v1425
        %1522 = vadd.xlane.f32.xlu0 %v1521
        %v1523 = vpop.xlane.xlu0 %1522
        %v1524 = vadd.f32 %v1427, %v1429
        %1525 = vadd.xlane.f32.xlu0 %v1524
        %v1526 = vpop.xlane.xlu0 %1525
        %v1527 = vadd.f32 %v1431, %v1433
        %1528 = vadd.xlane.f32.xlu0 %v1527
        %v1529 = vpop.xlane.xlu0 %1528
        %v1530 = vrcp.pop %v1436
        %v1531 = vrcp.pop %v1439
        %v1532 = vrcp.pop %v1442
        %v1533 = vrcp.pop %v1445
        %v1534 = vrcp.pop %v1448
        %v1535 = vrcp.pop %v1451
        %v1536 = vrcp.pop %v1454
        %v1537 = vrcp.pop %v1457
        %v1538 = vrcp.pop %v1460
        %v1539 = vrcp.pop %v1463
        %v1540 = vrcp.pop %v1466
        %v1541 = vrcp.pop %v1469
        %v1542 = vrcp.pop %v1472
        %v1543 = vrcp.pop %v1475
        %v1544 = vrcp.pop %v1478
        %v1545 = vrcp.pop %v1481
        %v1546 = vrcp.pop %v1484
        %v1547 = vrcp.pop %v1487
        %v1548 = vrcp.pop %v1490
        %v1549 = vrcp.pop %v1493
        %v1550 = vrcp.pop %v1496
        %v1551 = vrcp.pop %v1499
        %v1552 = vrcp.pop %v1502
        %v1553 = vrcp.pop %v1505
        %v1554 = vrcp.pop %v1508
        %v1555 = vrcp.pop %v1511
        %v1556 = vrcp.pop %v1514
        %v1557 = vrcp.pop %v1517
        %v1558 = vrcp.pop %v1520
        %v1559 = vrcp.pop %v1523
        %v1560 = vrcp.pop %v1526
        %v1561 = vrcp.pop %v1529
        %1562 = vrot.lane.b32.xlu0 %v488, 64
        %v1563 = vpop.permute.xlu0 %1562
        %1564 = vrot.lane.b32.xlu0 %v491, 64
        %v1565 = vpop.permute.xlu0 %1564
        %1566 = vrot.lane.b32.xlu0 %v494, 64
        %v1567 = vpop.permute.xlu0 %1566
        %1568 = vrot.lane.b32.xlu0 %v497, 64
        %v1569 = vpop.permute.xlu0 %1568
        %1570 = vrot.lane.b32.xlu0 %v500, 64
        %v1571 = vpop.permute.xlu0 %1570
        %1572 = vrot.lane.b32.xlu0 %v503, 64
        %v1573 = vpop.permute.xlu0 %1572
        %1574 = vrot.lane.b32.xlu0 %v506, 64
        %v1575 = vpop.permute.xlu0 %1574
        %1576 = vrot.lane.b32.xlu0 %v509, 64
        %v1577 = vpop.permute.xlu0 %1576
        %1578 = vrot.lane.b32.xlu0 %v512, 64
        %v1579 = vpop.permute.xlu0 %1578
        %1580 = vrot.lane.b32.xlu0 %v515, 64
        %v1581 = vpop.permute.xlu0 %1580
        %1582 = vrot.lane.b32.xlu0 %v518, 64
        %v1583 = vpop.permute.xlu0 %1582
        %1584 = vrot.lane.b32.xlu0 %v521, 64
        %v1585 = vpop.permute.xlu0 %1584
        %1586 = vrot.lane.b32.xlu0 %v524, 64
        %v1587 = vpop.permute.xlu0 %1586
        %1588 = vrot.lane.b32.xlu0 %v527, 64
        %v1589 = vpop.permute.xlu0 %1588
        %1590 = vrot.lane.b32.xlu0 %v530, 64
        %v1591 = vpop.permute.xlu0 %1590
        %1592 = vrot.lane.b32.xlu0 %v533, 64
        %v1593 = vpop.permute.xlu0 %1592
        %1594 = vrot.lane.b32.xlu0 %v536, 64
        %v1595 = vpop.permute.xlu0 %1594
        %1596 = vrot.lane.b32.xlu0 %v539, 64
        %v1597 = vpop.permute.xlu0 %1596
        %1598 = vrot.lane.b32.xlu0 %v542, 64
        %v1599 = vpop.permute.xlu0 %1598
        %1600 = vrot.lane.b32.xlu0 %v545, 64
        %v1601 = vpop.permute.xlu0 %1600
        %1602 = vrot.lane.b32.xlu0 %v548, 64
        %v1603 = vpop.permute.xlu0 %1602
        %1604 = vrot.lane.b32.xlu0 %v551, 64
        %v1605 = vpop.permute.xlu0 %1604
        %1606 = vrot.lane.b32.xlu0 %v554, 64
        %v1607 = vpop.permute.xlu0 %1606
        %1608 = vrot.lane.b32.xlu0 %v557, 64
        %v1609 = vpop.permute.xlu0 %1608
        %1610 = vrot.lane.b32.xlu0 %v560, 64
        %v1611 = vpop.permute.xlu0 %1610
        %1612 = vrot.lane.b32.xlu0 %v563, 64
        %v1613 = vpop.permute.xlu0 %1612
        %1614 = vrot.lane.b32.xlu0 %v566, 64
        %v1615 = vpop.permute.xlu0 %1614
        %1616 = vrot.lane.b32.xlu0 %v569, 64
        %v1617 = vpop.permute.xlu0 %1616
        %1618 = vrot.lane.b32.xlu0 %v572, 64
        %v1619 = vpop.permute.xlu0 %1618
        %1620 = vrot.lane.b32.xlu0 %v575, 64
        %v1621 = vpop.permute.xlu0 %1620
        %1622 = vrot.lane.b32.xlu0 %v578, 64
        %v1623 = vpop.permute.xlu0 %1622
        %1624 = vrot.lane.b32.xlu0 %v581, 64
        %v1625 = vpop.permute.xlu0 %1624
        %1658 = vmatpush.msra.mxu0 %v1593
        %1659 = vmatpush.msra.mxu0 %v1591
        %1660 = vmatpush.msra.mxu0 %v1589
        %1661 = vmatpush.msra.mxu0 %v1587
        %1662 = vmatpush.msra.mxu0 %v1585
        %1663 = vmatpush.msra.mxu0 %v1583
        %1664 = vmatpush.msra.mxu0 %v1581
        %1665 = vmatpush.msra.mxu0 %v1579
        %1666 = vmatpush.msra.mxu0 %v1577
        %1667 = vmatpush.msra.mxu0 %v1575
        %1668 = vmatpush.msra.mxu0 %v1573
        %1669 = vmatpush.msra.mxu0 %v1571
        %1670 = vmatpush.msra.mxu0 %v1569
        %1671 = vmatpush.msra.mxu0 %v1567
        %1672 = vmatpush.msra.mxu0 %v1565
        %1673 = vmatpush.msra.mxu0 %v1563
        %1674 = vmatmul.f32.gmra.mxu0 %v1307
        %v1675 = vpop.f32.mrf.mxu0
        %v1676 = vadd.f32 0.0, %v1675
        %1677 = vmatmul.f32.gmra.mxu0 %v1311
        %v1678 = vpop.f32.mrf.mxu0
        %v1679 = vadd.f32 0.0, %v1678
        %1680 = vmatmul.f32.gmra.mxu0 %v1315
        %v1681 = vpop.f32.mrf.mxu0
        %v1682 = vadd.f32 0.0, %v1681
        %1683 = vmatmul.f32.gmra.mxu0 %v1319
        %v1684 = vpop.f32.mrf.mxu0
        %v1685 = vadd.f32 0.0, %v1684
        %1686 = vmatmul.f32.gmra.mxu0 %v1323
        %v1687 = vpop.f32.mrf.mxu0
        %v1688 = vadd.f32 0.0, %v1687
        %1689 = vmatmul.f32.gmra.mxu0 %v1327
        %v1690 = vpop.f32.mrf.mxu0
        %v1691 = vadd.f32 0.0, %v1690
        %1692 = vmatmul.f32.gmra.mxu0 %v1331
        %v1693 = vpop.f32.mrf.mxu0
        %v1694 = vadd.f32 0.0, %v1693
        %1695 = vmatmul.f32.gmra.mxu0 %v1335
        %v1696 = vpop.f32.mrf.mxu0
        %v1697 = vadd.f32 0.0, %v1696
        %1698 = vmatmul.f32.gmra.mxu0 %v1339
        %v1699 = vpop.f32.mrf.mxu0
        %v1700 = vadd.f32 0.0, %v1699
        %1701 = vmatmul.f32.gmra.mxu0 %v1343
        %v1702 = vpop.f32.mrf.mxu0
        %v1703 = vadd.f32 0.0, %v1702
        %1704 = vmatmul.f32.gmra.mxu0 %v1347
        %v1705 = vpop.f32.mrf.mxu0
        %v1706 = vadd.f32 0.0, %v1705
        %1707 = vmatmul.f32.gmra.mxu0 %v1351
        %v1708 = vpop.f32.mrf.mxu0
        %v1709 = vadd.f32 0.0, %v1708
        %1710 = vmatmul.f32.gmra.mxu0 %v1355
        %v1711 = vpop.f32.mrf.mxu0
        %v1712 = vadd.f32 0.0, %v1711
        %1713 = vmatmul.f32.gmra.mxu0 %v1359
        %v1714 = vpop.f32.mrf.mxu0
        %v1715 = vadd.f32 0.0, %v1714
        %1716 = vmatmul.f32.gmra.mxu0 %v1363
        %v1717 = vpop.f32.mrf.mxu0
        %v1718 = vadd.f32 0.0, %v1717
        %1719 = vmatmul.f32.gmra.mxu0 %v1367
        %v1720 = vpop.f32.mrf.mxu0
        %v1721 = vadd.f32 0.0, %v1720
        %1722 = vmatmul.f32.gmra.mxu0 %v1371
        %v1723 = vpop.f32.mrf.mxu0
        %v1724 = vadd.f32 0.0, %v1723
        %1725 = vmatmul.f32.gmra.mxu0 %v1375
        %v1726 = vpop.f32.mrf.mxu0
        %v1727 = vadd.f32 0.0, %v1726
        %1728 = vmatmul.f32.gmra.mxu0 %v1379
        %v1729 = vpop.f32.mrf.mxu0
        %v1730 = vadd.f32 0.0, %v1729
        %1731 = vmatmul.f32.gmra.mxu0 %v1383
        %v1732 = vpop.f32.mrf.mxu0
        %v1733 = vadd.f32 0.0, %v1732
        %1734 = vmatmul.f32.gmra.mxu0 %v1387
        %v1735 = vpop.f32.mrf.mxu0
        %v1736 = vadd.f32 0.0, %v1735
        %1737 = vmatmul.f32.gmra.mxu0 %v1391
        %v1738 = vpop.f32.mrf.mxu0
        %v1739 = vadd.f32 0.0, %v1738
        %1740 = vmatmul.f32.gmra.mxu0 %v1395
        %v1741 = vpop.f32.mrf.mxu0
        %v1742 = vadd.f32 0.0, %v1741
        %1743 = vmatmul.f32.gmra.mxu0 %v1399
        %v1744 = vpop.f32.mrf.mxu0
        %v1745 = vadd.f32 0.0, %v1744
        %1746 = vmatmul.f32.gmra.mxu0 %v1403
        %v1747 = vpop.f32.mrf.mxu0
        %v1748 = vadd.f32 0.0, %v1747
        %1749 = vmatmul.f32.gmra.mxu0 %v1407
        %v1750 = vpop.f32.mrf.mxu0
        %v1751 = vadd.f32 0.0, %v1750
        %1752 = vmatmul.f32.gmra.mxu0 %v1411
        %v1753 = vpop.f32.mrf.mxu0
        %v1754 = vadd.f32 0.0, %v1753
        %1755 = vmatmul.f32.gmra.mxu0 %v1415
        %v1756 = vpop.f32.mrf.mxu0
        %v1757 = vadd.f32 0.0, %v1756
        %1758 = vmatmul.f32.gmra.mxu0 %v1419
        %v1759 = vpop.f32.mrf.mxu0
        %v1760 = vadd.f32 0.0, %v1759
        %1761 = vmatmul.f32.gmra.mxu0 %v1423
        %v1762 = vpop.f32.mrf.mxu0
        %v1763 = vadd.f32 0.0, %v1762
        %1764 = vmatmul.f32.gmra.mxu0 %v1427
        %v1765 = vpop.f32.mrf.mxu0
        %v1766 = vadd.f32 0.0, %v1765
        %1767 = vmatmul.f32.gmra.mxu0 %v1431
        %v1768 = vpop.f32.mrf.mxu0
        %v1769 = vadd.f32 0.0, %v1768
        %1770 = vdwg.mxu0
        %1771 = vmatpush.msra.mxu0 %v1625
        %1772 = vmatpush.msra.mxu0 %v1623
        %1773 = vmatpush.msra.mxu0 %v1621
        %1774 = vmatpush.msra.mxu0 %v1619
        %1775 = vmatpush.msra.mxu0 %v1617
        %1776 = vmatpush.msra.mxu0 %v1615
        %1777 = vmatpush.msra.mxu0 %v1613
        %1778 = vmatpush.msra.mxu0 %v1611
        %1779 = vmatpush.msra.mxu0 %v1609
        %1780 = vmatpush.msra.mxu0 %v1607
        %1781 = vmatpush.msra.mxu0 %v1605
        %1782 = vmatpush.msra.mxu0 %v1603
        %1783 = vmatpush.msra.mxu0 %v1601
        %1784 = vmatpush.msra.mxu0 %v1599
        %1785 = vmatpush.msra.mxu0 %v1597
        %1786 = vmatpush.msra.mxu0 %v1595
        %1787 = vmatmul.f32.gmra.mxu0 %v1309
        %v1788 = vpop.f32.mrf.mxu0
        %v1789 = vadd.f32 %v1676, %v1788
        %1790 = vmatmul.f32.gmra.mxu0 %v1313
        %v1791 = vpop.f32.mrf.mxu0
        %v1792 = vadd.f32 %v1679, %v1791
        %1793 = vmatmul.f32.gmra.mxu0 %v1317
        %v1794 = vpop.f32.mrf.mxu0
        %v1795 = vadd.f32 %v1682, %v1794
        %1796 = vmatmul.f32.gmra.mxu0 %v1321
        %v1797 = vpop.f32.mrf.mxu0
        %v1798 = vadd.f32 %v1685, %v1797
        %1799 = vmatmul.f32.gmra.mxu0 %v1325
        %v1800 = vpop.f32.mrf.mxu0
        %v1801 = vadd.f32 %v1688, %v1800
        %1802 = vmatmul.f32.gmra.mxu0 %v1329
        %v1803 = vpop.f32.mrf.mxu0
        %v1804 = vadd.f32 %v1691, %v1803
        %1805 = vmatmul.f32.gmra.mxu0 %v1333
        %v1806 = vpop.f32.mrf.mxu0
        %v1807 = vadd.f32 %v1694, %v1806
        %1808 = vmatmul.f32.gmra.mxu0 %v1337
        %v1809 = vpop.f32.mrf.mxu0
        %v1810 = vadd.f32 %v1697, %v1809
        %1811 = vmatmul.f32.gmra.mxu0 %v1341
        %v1812 = vpop.f32.mrf.mxu0
        %v1813 = vadd.f32 %v1700, %v1812
        %1814 = vmatmul.f32.gmra.mxu0 %v1345
        %v1815 = vpop.f32.mrf.mxu0
        %v1816 = vadd.f32 %v1703, %v1815
        %1817 = vmatmul.f32.gmra.mxu0 %v1349
        %v1818 = vpop.f32.mrf.mxu0
        %v1819 = vadd.f32 %v1706, %v1818
        %1820 = vmatmul.f32.gmra.mxu0 %v1353
        %v1821 = vpop.f32.mrf.mxu0
        %v1822 = vadd.f32 %v1709, %v1821
        %1823 = vmatmul.f32.gmra.mxu0 %v1357
        %v1824 = vpop.f32.mrf.mxu0
        %v1825 = vadd.f32 %v1712, %v1824
        %1826 = vmatmul.f32.gmra.mxu0 %v1361
        %v1827 = vpop.f32.mrf.mxu0
        %v1828 = vadd.f32 %v1715, %v1827
        %1829 = vmatmul.f32.gmra.mxu0 %v1365
        %v1830 = vpop.f32.mrf.mxu0
        %v1831 = vadd.f32 %v1718, %v1830
        %1832 = vmatmul.f32.gmra.mxu0 %v1369
        %v1833 = vpop.f32.mrf.mxu0
        %v1834 = vadd.f32 %v1721, %v1833
        %1835 = vmatmul.f32.gmra.mxu0 %v1373
        %v1836 = vpop.f32.mrf.mxu0
        %v1837 = vadd.f32 %v1724, %v1836
        %1838 = vmatmul.f32.gmra.mxu0 %v1377
        %v1839 = vpop.f32.mrf.mxu0
        %v1840 = vadd.f32 %v1727, %v1839
        %1841 = vmatmul.f32.gmra.mxu0 %v1381
        %v1842 = vpop.f32.mrf.mxu0
        %v1843 = vadd.f32 %v1730, %v1842
        %1844 = vmatmul.f32.gmra.mxu0 %v1385
        %v1845 = vpop.f32.mrf.mxu0
        %v1846 = vadd.f32 %v1733, %v1845
        %1847 = vmatmul.f32.gmra.mxu0 %v1389
        %v1848 = vpop.f32.mrf.mxu0
        %v1849 = vadd.f32 %v1736, %v1848
        %1850 = vmatmul.f32.gmra.mxu0 %v1393
        %v1851 = vpop.f32.mrf.mxu0
        %v1852 = vadd.f32 %v1739, %v1851
        %1853 = vmatmul.f32.gmra.mxu0 %v1397
        %v1854 = vpop.f32.mrf.mxu0
        %v1855 = vadd.f32 %v1742, %v1854
        %1856 = vmatmul.f32.gmra.mxu0 %v1401
        %v1857 = vpop.f32.mrf.mxu0
        %v1858 = vadd.f32 %v1745, %v1857
        %1859 = vmatmul.f32.gmra.mxu0 %v1405
        %v1860 = vpop.f32.mrf.mxu0
        %v1861 = vadd.f32 %v1748, %v1860
        %1862 = vmatmul.f32.gmra.mxu0 %v1409
        %v1863 = vpop.f32.mrf.mxu0
        %v1864 = vadd.f32 %v1751, %v1863
        %1865 = vmatmul.f32.gmra.mxu0 %v1413
        %v1866 = vpop.f32.mrf.mxu0
        %v1867 = vadd.f32 %v1754, %v1866
        %1868 = vmatmul.f32.gmra.mxu0 %v1417
        %v1869 = vpop.f32.mrf.mxu0
        %v1870 = vadd.f32 %v1757, %v1869
        %1871 = vmatmul.f32.gmra.mxu0 %v1421
        %v1872 = vpop.f32.mrf.mxu0
        %v1873 = vadd.f32 %v1760, %v1872
        %1874 = vmatmul.f32.gmra.mxu0 %v1425
        %v1875 = vpop.f32.mrf.mxu0
        %v1876 = vadd.f32 %v1763, %v1875
        %1877 = vmatmul.f32.gmra.mxu0 %v1429
        %v1878 = vpop.f32.mrf.mxu0
        %v1879 = vadd.f32 %v1766, %v1878
        %1880 = vmatmul.f32.gmra.mxu0 %v1433
        %v1881 = vpop.f32.mrf.mxu0
        %v1882 = vadd.f32 %v1769, %v1881
        %1883 = vdwg.mxu0
        %v1884 = vmul.f32 %v1789, %v1530
        %v1885 = vmul.f32 %v1792, %v1531
        %v1886 = vmul.f32 %v1795, %v1532
        %v1887 = vmul.f32 %v1798, %v1533
        %v1888 = vmul.f32 %v1801, %v1534
        %v1889 = vmul.f32 %v1804, %v1535
        %v1890 = vmul.f32 %v1807, %v1536
        %v1891 = vmul.f32 %v1810, %v1537
        %v1892 = vmul.f32 %v1813, %v1538
        %v1893 = vmul.f32 %v1816, %v1539
        %v1894 = vmul.f32 %v1819, %v1540
        %v1895 = vmul.f32 %v1822, %v1541
        %v1896 = vmul.f32 %v1825, %v1542
        %v1897 = vmul.f32 %v1828, %v1543
        %v1898 = vmul.f32 %v1831, %v1544
        %v1899 = vmul.f32 %v1834, %v1545
        %v1900 = vmul.f32 %v1837, %v1546
        %v1901 = vmul.f32 %v1840, %v1547
        %v1902 = vmul.f32 %v1843, %v1548
        %v1903 = vmul.f32 %v1846, %v1549
        %v1904 = vmul.f32 %v1849, %v1550
        %v1905 = vmul.f32 %v1852, %v1551
        %v1906 = vmul.f32 %v1855, %v1552
        %v1907 = vmul.f32 %v1858, %v1553
        %v1908 = vmul.f32 %v1861, %v1554
        %v1909 = vmul.f32 %v1864, %v1555
        %v1910 = vmul.f32 %v1867, %v1556
        %v1911 = vmul.f32 %v1870, %v1557
        %v1912 = vmul.f32 %v1873, %v1558
        %v1913 = vmul.f32 %v1876, %v1559
        %v1914 = vmul.f32 %v1879, %v1560
        %v1915 = vmul.f32 %v1882, %v1561
        %v1916 = vsel %vm631, %v1884, 0.0
        %v1917 = vsel %vm631, %v1885, 0.0
        %v1918 = vsel %vm631, %v1886, 0.0
        %v1919 = vsel %vm631, %v1887, 0.0
        %v1920 = vsel %vm631, %v1888, 0.0
        %v1921 = vsel %vm631, %v1889, 0.0
        %v1922 = vsel %vm631, %v1890, 0.0
        %v1923 = vsel %vm631, %v1891, 0.0
        %v1924 = vsel %vm631, %v1892, 0.0
        %v1925 = vsel %vm631, %v1893, 0.0
        %v1926 = vsel %vm631, %v1894, 0.0
        %v1927 = vsel %vm631, %v1895, 0.0
        %v1928 = vsel %vm631, %v1896, 0.0
        %v1929 = vsel %vm631, %v1897, 0.0
        %v1930 = vsel %vm631, %v1898, 0.0
        %v1931 = vsel %vm631, %v1899, 0.0
        %v1932 = vsel %vm631, %v1900, 0.0
        %v1933 = vsel %vm631, %v1901, 0.0
        %v1934 = vsel %vm631, %v1902, 0.0
        %v1935 = vsel %vm631, %v1903, 0.0
        %v1936 = vsel %vm631, %v1904, 0.0
        %v1937 = vsel %vm631, %v1905, 0.0
        %v1938 = vsel %vm631, %v1906, 0.0
        %v1939 = vsel %vm631, %v1907, 0.0
        %v1940 = vsel %vm631, %v1908, 0.0
        %v1941 = vsel %vm631, %v1909, 0.0
        %v1942 = vsel %vm631, %v1910, 0.0
        %v1943 = vsel %vm631, %v1911, 0.0
        %v1944 = vsel %vm631, %v1912, 0.0
        %v1945 = vsel %vm631, %v1913, 0.0
        %v1946 = vsel %vm631, %v1914, 0.0
        %v1947 = vsel %vm631, %v1915, 0.0
        %v1948 = vadd.f32 %v591, %v1916
        %v1949 = vadd.f32 %v592, %v1917
        %v1950 = vadd.f32 %v593, %v1918
        %v1951 = vadd.f32 %v594, %v1919
        %v1952 = vadd.f32 %v595, %v1920
        %v1953 = vadd.f32 %v596, %v1921
        %v1954 = vadd.f32 %v597, %v1922
        %v1955 = vadd.f32 %v598, %v1923
        %v1956 = vadd.f32 %v599, %v1924
        %v1957 = vadd.f32 %v600, %v1925
        %v1958 = vadd.f32 %v601, %v1926
        %v1959 = vadd.f32 %v602, %v1927
        %v1960 = vadd.f32 %v603, %v1928
        %v1961 = vadd.f32 %v604, %v1929
        %v1962 = vadd.f32 %v605, %v1930
        %v1963 = vadd.f32 %v606, %v1931
        %v1964 = vadd.f32 %v607, %v1932
        %v1965 = vadd.f32 %v608, %v1933
        %v1966 = vadd.f32 %v609, %v1934
        %v1967 = vadd.f32 %v610, %v1935
        %v1968 = vadd.f32 %v611, %v1936
        %v1969 = vadd.f32 %v612, %v1937
        %v1970 = vadd.f32 %v613, %v1938
        %v1971 = vadd.f32 %v614, %v1939
        %v1972 = vadd.f32 %v615, %v1940
        %v1973 = vadd.f32 %v616, %v1941
        %v1974 = vadd.f32 %v617, %v1942
        %v1975 = vadd.f32 %v618, %v1943
        %v1976 = vadd.f32 %v619, %v1944
        %v1977 = vadd.f32 %v620, %v1945
        %v1978 = vadd.f32 %v621, %v1946
        %v1979 = vadd.f32 %v622, %v1947
      $region61: #{local_global_feature_mixing.1} parent=55 // loop_footer
        %s590 = sadd.s32 1, %s586
      $region62: #{local_global_feature_mixing.1} parent=55 // loop_footer_branch
        %585 = sbr.rel target = $region58
      $region63: #{local_global_feature_mixing.1} parent=55 // loop_exit
        _
      %v1980 = vld [vmem:[%s3] sm:$0xff]
      %v1981 = vld [vmem:[%s3 + $0x8] sm:$0xff]
      %v1982 = vld [vmem:[%s3 + $0x10] sm:$0xff]
      %v1983 = vld [vmem:[%s3 + $0x18] sm:$0xff]
      %v1984 = vld [vmem:[%s4] sm:$0x1]
      %v1986 = vperm.slane %v1984, 0
      %v1989 = vsel %vm373, %v591, 0
      %v1992 = vsel %vm373, %v592, 0
      %v1995 = vsel %vm373, %v593, 0
      %v1998 = vsel %vm373, %v594, 0
      %v2001 = vsel %vm373, %v595, 0
      %v2004 = vsel %vm373, %v596, 0
      %v2007 = vsel %vm373, %v597, 0
      %v2010 = vsel %vm373, %v598, 0
      %v2013 = vsel %vm373, %v599, 0
      %v2016 = vsel %vm373, %v600, 0
      %v2019 = vsel %vm373, %v601, 0
      %v2022 = vsel %vm373, %v602, 0
      %v2025 = vsel %vm373, %v603, 0
      %v2028 = vsel %vm373, %v604, 0
      %v2031 = vsel %vm373, %v605, 0
      %v2034 = vsel %vm373, %v606, 0
      %v2037 = vsel %vm373, %v607, 0
      %v2040 = vsel %vm373, %v608, 0
      %v2043 = vsel %vm373, %v609, 0
      %v2046 = vsel %vm373, %v610, 0
      %v2049 = vsel %vm373, %v611, 0
      %v2052 = vsel %vm373, %v612, 0
      %v2055 = vsel %vm373, %v613, 0
      %v2058 = vsel %vm373, %v614, 0
      %v2061 = vsel %vm373, %v615, 0
      %v2064 = vsel %vm373, %v616, 0
      %v2067 = vsel %vm373, %v617, 0
      %v2070 = vsel %vm373, %v618, 0
      %v2073 = vsel %vm373, %v619, 0
      %v2076 = vsel %vm373, %v620, 0
      %v2079 = vsel %vm373, %v621, 0
      %v2082 = vsel %vm373, %v622, 0
      %2084 = vmatpush.msra.mxu0 0.0
      %2085 = vmatpush.msra.mxu0 0.0
      %2086 = vmatpush.msra.mxu0 0.0
      %2087 = vmatpush.msra.mxu0 0.0
      %2088 = vmatpush.msra.mxu0 0.0
      %2089 = vmatpush.msra.mxu0 0.0
      %2090 = vmatpush.msra.mxu0 0.0
      %2091 = vmatpush.msra.mxu0 0.0
      %2092 = vmatpush.msra.mxu0 0.0
      %2093 = vmatpush.msra.mxu0 0.0
      %2094 = vmatpush.msra.mxu0 0.0
      %2095 = vmatpush.msra.mxu0 0.0
      %2096 = vmatpush.msra.mxu0 %v1983
      %2097 = vmatpush.msra.mxu0 %v1982
      %2098 = vmatpush.msra.mxu0 %v1981
      %2099 = vmatpush.msra.mxu0 %v1980
      %2100 = vmatmul.f32.gmra.mxu0 %v1989
      %v2101 = vpop.f32.mrf.mxu0
      %v2102 = vadd.f32 %v1986, %v2101
      %2103 = vmatmul.f32.gmra.mxu0 %v1992
      %v2104 = vpop.f32.mrf.mxu0
      %v2105 = vadd.f32 %v1986, %v2104
      %2106 = vmatmul.f32.gmra.mxu0 %v1995
      %v2107 = vpop.f32.mrf.mxu0
      %v2108 = vadd.f32 %v1986, %v2107
      %2109 = vmatmul.f32.gmra.mxu0 %v1998
      %v2110 = vpop.f32.mrf.mxu0
      %v2111 = vadd.f32 %v1986, %v2110
      %2112 = vmatmul.f32.gmra.mxu0 %v2001
      %v2113 = vpop.f32.mrf.mxu0
      %v2114 = vadd.f32 %v1986, %v2113
      %2115 = vmatmul.f32.gmra.mxu0 %v2004
      %v2116 = vpop.f32.mrf.mxu0
      %v2117 = vadd.f32 %v1986, %v2116
      %2118 = vmatmul.f32.gmra.mxu0 %v2007
      %v2119 = vpop.f32.mrf.mxu0
      %v2120 = vadd.f32 %v1986, %v2119
      %2121 = vmatmul.f32.gmra.mxu0 %v2010
      %v2122 = vpop.f32.mrf.mxu0
      %v2123 = vadd.f32 %v1986, %v2122
      %2124 = vmatmul.f32.gmra.mxu0 %v2013
      %v2125 = vpop.f32.mrf.mxu0
      %v2126 = vadd.f32 %v1986, %v2125
      %2127 = vmatmul.f32.gmra.mxu0 %v2016
      %v2128 = vpop.f32.mrf.mxu0
      %v2129 = vadd.f32 %v1986, %v2128
      %2130 = vmatmul.f32.gmra.mxu0 %v2019
      %v2131 = vpop.f32.mrf.mxu0
      %v2132 = vadd.f32 %v1986, %v2131
      %2133 = vmatmul.f32.gmra.mxu0 %v2022
      %v2134 = vpop.f32.mrf.mxu0
      %v2135 = vadd.f32 %v1986, %v2134
      %2136 = vmatmul.f32.gmra.mxu0 %v2025
      %v2137 = vpop.f32.mrf.mxu0
      %v2138 = vadd.f32 %v1986, %v2137
      %2139 = vmatmul.f32.gmra.mxu0 %v2028
      %v2140 = vpop.f32.mrf.mxu0
      %v2141 = vadd.f32 %v1986, %v2140
      %2142 = vmatmul.f32.gmra.mxu0 %v2031
      %v2143 = vpop.f32.mrf.mxu0
      %v2144 = vadd.f32 %v1986, %v2143
      %2145 = vmatmul.f32.gmra.mxu0 %v2034
      %v2146 = vpop.f32.mrf.mxu0
      %v2147 = vadd.f32 %v1986, %v2146
      %2148 = vmatmul.f32.gmra.mxu0 %v2037
      %v2149 = vpop.f32.mrf.mxu0
      %v2150 = vadd.f32 %v1986, %v2149
      %2151 = vmatmul.f32.gmra.mxu0 %v2040
      %v2152 = vpop.f32.mrf.mxu0
      %v2153 = vadd.f32 %v1986, %v2152
      %2154 = vmatmul.f32.gmra.mxu0 %v2043
      %v2155 = vpop.f32.mrf.mxu0
      %v2156 = vadd.f32 %v1986, %v2155
      %2157 = vmatmul.f32.gmra.mxu0 %v2046
      %v2158 = vpop.f32.mrf.mxu0
      %v2159 = vadd.f32 %v1986, %v2158
      %2160 = vmatmul.f32.gmra.mxu0 %v2049
      %v2161 = vpop.f32.mrf.mxu0
      %v2162 = vadd.f32 %v1986, %v2161
      %2163 = vmatmul.f32.gmra.mxu0 %v2052
      %v2164 = vpop.f32.mrf.mxu0
      %v2165 = vadd.f32 %v1986, %v2164
      %2166 = vmatmul.f32.gmra.mxu0 %v2055
      %v2167 = vpop.f32.mrf.mxu0
      %v2168 = vadd.f32 %v1986, %v2167
      %2169 = vmatmul.f32.gmra.mxu0 %v2058
      %v2170 = vpop.f32.mrf.mxu0
      %v2171 = vadd.f32 %v1986, %v2170
      %2172 = vmatmul.f32.gmra.mxu0 %v2061
      %v2173 = vpop.f32.mrf.mxu0
      %v2174 = vadd.f32 %v1986, %v2173
      %2175 = vmatmul.f32.gmra.mxu0 %v2064
      %v2176 = vpop.f32.mrf.mxu0
      %v2177 = vadd.f32 %v1986, %v2176
      %2178 = vmatmul.f32.gmra.mxu0 %v2067
      %v2179 = vpop.f32.mrf.mxu0
      %v2180 = vadd.f32 %v1986, %v2179
      %2181 = vmatmul.f32.gmra.mxu0 %v2070
      %v2182 = vpop.f32.mrf.mxu0
      %v2183 = vadd.f32 %v1986, %v2182
      %2184 = vmatmul.f32.gmra.mxu0 %v2073
      %v2185 = vpop.f32.mrf.mxu0
      %v2186 = vadd.f32 %v1986, %v2185
      %2187 = vmatmul.f32.gmra.mxu0 %v2076
      %v2188 = vpop.f32.mrf.mxu0
      %v2189 = vadd.f32 %v1986, %v2188
      %2190 = vmatmul.f32.gmra.mxu0 %v2079
      %v2191 = vpop.f32.mrf.mxu0
      %v2192 = vadd.f32 %v1986, %v2191
      %2193 = vmatmul.f32.gmra.mxu0 %v2082
      %v2194 = vpop.f32.mrf.mxu0
      %v2195 = vadd.f32 %v1986, %v2194
      %2196 = vdwg.mxu0
      %vm2197 = vcmask 1040384
      %v2198 = vrot.slane %v333, 7
      %v2199 = vrot.slane %v334, 7
      %v2200 = vsel %vm2197, %v2198, %v2199
      %v2201 = vrot.slane %v335, 7
      %v2202 = vsel %vm2197, %v2199, %v2201
      %v2203 = vrot.slane %v336, 7
      %v2204 = vsel %vm2197, %v2201, %v2203
      %v2205 = vrot.slane %v337, 7
      %v2206 = vsel %vm2197, %v2203, %v2205
      %v2207 = vrot.slane %v338, 7
      %v2208 = vsel %vm2197, %v2205, %v2207
      %v2209 = vrot.slane %v339, 7
      %v2210 = vsel %vm2197, %v2207, %v2209
      %v2211 = vrot.slane %v340, 7
      %v2212 = vsel %vm2197, %v2209, %v2211
      %v2213 = vrot.slane %v341, 7
      %v2214 = vsel %vm2197, %v2211, %v2213
      %v2215 = vrot.slane %v342, 7
      %v2216 = vsel %vm2197, %v2213, %v2215
      %v2217 = vrot.slane %v343, 7
      %v2218 = vsel %vm2197, %v2215, %v2217
      %v2219 = vrot.slane %v344, 7
      %v2220 = vsel %vm2197, %v2217, %v2219
      %v2221 = vrot.slane %v345, 7
      %v2222 = vsel %vm2197, %v2219, %v2221
      %v2223 = vrot.slane %v346, 7
      %v2224 = vsel %vm2197, %v2221, %v2223
      %v2225 = vrot.slane %v347, 7
      %v2226 = vsel %vm2197, %v2223, %v2225
      %v2227 = vrot.slane %v348, 7
      %v2228 = vsel %vm2197, %v2225, %v2227
      %v2229 = vrot.slane %v349, 7
      %v2230 = vsel %vm2197, %v2227, %v2229
      %v2231 = vrot.slane %v350, 7
      %v2232 = vsel %vm2197, %v2229, %v2231
      %v2233 = vrot.slane %v351, 7
      %v2234 = vsel %vm2197, %v2231, %v2233
      %v2235 = vrot.slane %v352, 7
      %v2236 = vsel %vm2197, %v2233, %v2235
      %v2237 = vrot.slane %v353, 7
      %v2238 = vsel %vm2197, %v2235, %v2237
      %v2239 = vrot.slane %v354, 7
      %v2240 = vsel %vm2197, %v2237, %v2239
      %v2241 = vrot.slane %v355, 7
      %v2242 = vsel %vm2197, %v2239, %v2241
      %v2243 = vrot.slane %v356, 7
      %v2244 = vsel %vm2197, %v2241, %v2243
      %v2245 = vrot.slane %v357, 7
      %v2246 = vsel %vm2197, %v2243, %v2245
      %v2247 = vrot.slane %v358, 7
      %v2248 = vsel %vm2197, %v2245, %v2247
      %v2249 = vrot.slane %v359, 7
      %v2250 = vsel %vm2197, %v2247, %v2249
      %v2251 = vrot.slane %v360, 7
      %v2252 = vsel %vm2197, %v2249, %v2251
      %v2253 = vrot.slane %v361, 7
      %v2254 = vsel %vm2197, %v2251, %v2253
      %v2255 = vrot.slane %v362, 7
      %v2256 = vsel %vm2197, %v2253, %v2255
      %v2257 = vrot.slane %v363, 7
      %v2258 = vsel %vm2197, %v2255, %v2257
      %v2259 = vrot.slane %v364, 7
      %v2260 = vsel %vm2197, %v2257, %v2259
      %v2293 = vsel %vm2197, 0.0, %v2198
      %vm2294 = vcmask 1046528
      %v2295 = vrot.slane %v333, 1
      %v2296 = vrot.slane %v334, 1
      %v2297 = vsel %vm2294, %v2295, %v2296
      %v2298 = vrot.slane %v335, 1
      %v2299 = vsel %vm2294, %v2296, %v2298
      %v2300 = vrot.slane %v336, 1
      %v2301 = vsel %vm2294, %v2298, %v2300
      %v2302 = vrot.slane %v337, 1
      %v2303 = vsel %vm2294, %v2300, %v2302
      %v2304 = vrot.slane %v338, 1
      %v2305 = vsel %vm2294, %v2302, %v2304
      %v2306 = vrot.slane %v339, 1
      %v2307 = vsel %vm2294, %v2304, %v2306
      %v2308 = vrot.slane %v340, 1
      %v2309 = vsel %vm2294, %v2306, %v2308
      %v2310 = vrot.slane %v341, 1
      %v2311 = vsel %vm2294, %v2308, %v2310
      %v2312 = vrot.slane %v342, 1
      %v2313 = vsel %vm2294, %v2310, %v2312
      %v2314 = vrot.slane %v343, 1
      %v2315 = vsel %vm2294, %v2312, %v2314
      %v2316 = vrot.slane %v344, 1
      %v2317 = vsel %vm2294, %v2314, %v2316
      %v2318 = vrot.slane %v345, 1
      %v2319 = vsel %vm2294, %v2316, %v2318
      %v2320 = vrot.slane %v346, 1
      %v2321 = vsel %vm2294, %v2318, %v2320
      %v2322 = vrot.slane %v347, 1
      %v2323 = vsel %vm2294, %v2320, %v2322
      %v2324 = vrot.slane %v348, 1
      %v2325 = vsel %vm2294, %v2322, %v2324
      %v2326 = vrot.slane %v349, 1
      %v2327 = vsel %vm2294, %v2324, %v2326
      %v2328 = vrot.slane %v350, 1
      %v2329 = vsel %vm2294, %v2326, %v2328
      %v2330 = vrot.slane %v351, 1
      %v2331 = vsel %vm2294, %v2328, %v2330
      %v2332 = vrot.slane %v352, 1
      %v2333 = vsel %vm2294, %v2330, %v2332
      %v2334 = vrot.slane %v353, 1
      %v2335 = vsel %vm2294, %v2332, %v2334
      %v2336 = vrot.slane %v354, 1
      %v2337 = vsel %vm2294, %v2334, %v2336
      %v2338 = vrot.slane %v355, 1
      %v2339 = vsel %vm2294, %v2336, %v2338
      %v2340 = vrot.slane %v356, 1
      %v2341 = vsel %vm2294, %v2338, %v2340
      %v2342 = vrot.slane %v357, 1
      %v2343 = vsel %vm2294, %v2340, %v2342
      %v2344 = vrot.slane %v358, 1
      %v2345 = vsel %vm2294, %v2342, %v2344
      %v2346 = vrot.slane %v359, 1
      %v2347 = vsel %vm2294, %v2344, %v2346
      %v2348 = vrot.slane %v360, 1
      %v2349 = vsel %vm2294, %v2346, %v2348
      %v2350 = vrot.slane %v361, 1
      %v2351 = vsel %vm2294, %v2348, %v2350
      %v2352 = vrot.slane %v362, 1
      %v2353 = vsel %vm2294, %v2350, %v2352
      %v2354 = vrot.slane %v363, 1
      %v2355 = vsel %vm2294, %v2352, %v2354
      %v2356 = vrot.slane %v364, 1
      %v2357 = vsel %vm2294, %v2354, %v2356
      %v2390 = vsel %vm2294, %v2356, 0.0
      %v2391 = vld [vmem:[%s5] sm:$0x1]
      %v2392 = vperm.slane %v2391, 0
      %v2393 = vmul.f32 %v2392, %v2293
      %v2394 = vmul.f32 %v2392, %v2200
      %v2395 = vmul.f32 %v2392, %v2202
      %v2396 = vmul.f32 %v2392, %v2204
      %v2397 = vmul.f32 %v2392, %v2206
      %v2398 = vmul.f32 %v2392, %v2208
      %v2399 = vmul.f32 %v2392, %v2210
      %v2400 = vmul.f32 %v2392, %v2212
      %v2401 = vmul.f32 %v2392, %v2214
      %v2402 = vmul.f32 %v2392, %v2216
      %v2403 = vmul.f32 %v2392, %v2218
      %v2404 = vmul.f32 %v2392, %v2220
      %v2405 = vmul.f32 %v2392, %v2222
      %v2406 = vmul.f32 %v2392, %v2224
      %v2407 = vmul.f32 %v2392, %v2226
      %v2408 = vmul.f32 %v2392, %v2228
      %v2409 = vmul.f32 %v2392, %v2230
      %v2410 = vmul.f32 %v2392, %v2232
      %v2411 = vmul.f32 %v2392, %v2234
      %v2412 = vmul.f32 %v2392, %v2236
      %v2413 = vmul.f32 %v2392, %v2238
      %v2414 = vmul.f32 %v2392, %v2240
      %v2415 = vmul.f32 %v2392, %v2242
      %v2416 = vmul.f32 %v2392, %v2244
      %v2417 = vmul.f32 %v2392, %v2246
      %v2418 = vmul.f32 %v2392, %v2248
      %v2419 = vmul.f32 %v2392, %v2250
      %v2420 = vmul.f32 %v2392, %v2252
      %v2421 = vmul.f32 %v2392, %v2254
      %v2422 = vmul.f32 %v2392, %v2256
      %v2423 = vmul.f32 %v2392, %v2258
      %v2424 = vmul.f32 %v2392, %v2260
      %v2425 = vld [vmem:[%s5 + $0x1] sm:$0x1]
      %v2426 = vperm.slane %v2425, 0
      %v2427 = vmul.f32 %v2426, %v333
      %v2428 = vmul.f32 %v2426, %v334
      %v2429 = vmul.f32 %v2426, %v335
      %v2430 = vmul.f32 %v2426, %v336
      %v2431 = vmul.f32 %v2426, %v337
      %v2432 = vmul.f32 %v2426, %v338
      %v2433 = vmul.f32 %v2426, %v339
      %v2434 = vmul.f32 %v2426, %v340
      %v2435 = vmul.f32 %v2426, %v341
      %v2436 = vmul.f32 %v2426, %v342
      %v2437 = vmul.f32 %v2426, %v343
      %v2438 = vmul.f32 %v2426, %v344
      %v2439 = vmul.f32 %v2426, %v345
      %v2440 = vmul.f32 %v2426, %v346
      %v2441 = vmul.f32 %v2426, %v347
      %v2442 = vmul.f32 %v2426, %v348
      %v2443 = vmul.f32 %v2426, %v349
      %v2444 = vmul.f32 %v2426, %v350
      %v2445 = vmul.f32 %v2426, %v351
      %v2446 = vmul.f32 %v2426, %v352
      %v2447 = vmul.f32 %v2426, %v353
      %v2448 = vmul.f32 %v2426, %v354
      %v2449 = vmul.f32 %v2426, %v355
      %v2450 = vmul.f32 %v2426, %v356
      %v2451 = vmul.f32 %v2426, %v357
      %v2452 = vmul.f32 %v2426, %v358
      %v2453 = vmul.f32 %v2426, %v359
      %v2454 = vmul.f32 %v2426, %v360
      %v2455 = vmul.f32 %v2426, %v361
      %v2456 = vmul.f32 %v2426, %v362
      %v2457 = vmul.f32 %v2426, %v363
      %v2458 = vmul.f32 %v2426, %v364
      %v2459 = vadd.f32 %v2393, %v2427
      %v2460 = vadd.f32 %v2394, %v2428
      %v2461 = vadd.f32 %v2395, %v2429
      %v2462 = vadd.f32 %v2396, %v2430
      %v2463 = vadd.f32 %v2397, %v2431
      %v2464 = vadd.f32 %v2398, %v2432
      %v2465 = vadd.f32 %v2399, %v2433
      %v2466 = vadd.f32 %v2400, %v2434
      %v2467 = vadd.f32 %v2401, %v2435
      %v2468 = vadd.f32 %v2402, %v2436
      %v2469 = vadd.f32 %v2403, %v2437
      %v2470 = vadd.f32 %v2404, %v2438
      %v2471 = vadd.f32 %v2405, %v2439
      %v2472 = vadd.f32 %v2406, %v2440
      %v2473 = vadd.f32 %v2407, %v2441
      %v2474 = vadd.f32 %v2408, %v2442
      %v2475 = vadd.f32 %v2409, %v2443
      %v2476 = vadd.f32 %v2410, %v2444
      %v2477 = vadd.f32 %v2411, %v2445
      %v2478 = vadd.f32 %v2412, %v2446
      %v2479 = vadd.f32 %v2413, %v2447
      %v2480 = vadd.f32 %v2414, %v2448
      %v2481 = vadd.f32 %v2415, %v2449
      %v2482 = vadd.f32 %v2416, %v2450
      %v2483 = vadd.f32 %v2417, %v2451
      %v2484 = vadd.f32 %v2418, %v2452
      %v2485 = vadd.f32 %v2419, %v2453
      %v2486 = vadd.f32 %v2420, %v2454
      %v2487 = vadd.f32 %v2421, %v2455
      %v2488 = vadd.f32 %v2422, %v2456
      %v2489 = vadd.f32 %v2423, %v2457
      %v2490 = vadd.f32 %v2424, %v2458
      %v2491 = vld [vmem:[%s5 + $0x2] sm:$0x1]
      %v2492 = vperm.slane %v2491, 0
      %v2493 = vmul.f32 %v2492, %v2297
      %v2494 = vmul.f32 %v2492, %v2299
      %v2495 = vmul.f32 %v2492, %v2301
      %v2496 = vmul.f32 %v2492, %v2303
      %v2497 = vmul.f32 %v2492, %v2305
      %v2498 = vmul.f32 %v2492, %v2307
      %v2499 = vmul.f32 %v2492, %v2309
      %v2500 = vmul.f32 %v2492, %v2311
      %v2501 = vmul.f32 %v2492, %v2313
      %v2502 = vmul.f32 %v2492, %v2315
      %v2503 = vmul.f32 %v2492, %v2317
      %v2504 = vmul.f32 %v2492, %v2319
      %v2505 = vmul.f32 %v2492, %v2321
      %v2506 = vmul.f32 %v2492, %v2323
      %v2507 = vmul.f32 %v2492, %v2325
      %v2508 = vmul.f32 %v2492, %v2327
      %v2509 = vmul.f32 %v2492, %v2329
      %v2510 = vmul.f32 %v2492, %v2331
      %v2511 = vmul.f32 %v2492, %v2333
      %v2512 = vmul.f32 %v2492, %v2335
      %v2513 = vmul.f32 %v2492, %v2337
      %v2514 = vmul.f32 %v2492, %v2339
      %v2515 = vmul.f32 %v2492, %v2341
      %v2516 = vmul.f32 %v2492, %v2343
      %v2517 = vmul.f32 %v2492, %v2345
      %v2518 = vmul.f32 %v2492, %v2347
      %v2519 = vmul.f32 %v2492, %v2349
      %v2520 = vmul.f32 %v2492, %v2351
      %v2521 = vmul.f32 %v2492, %v2353
      %v2522 = vmul.f32 %v2492, %v2355
      %v2523 = vmul.f32 %v2492, %v2357
      %v2524 = vmul.f32 %v2492, %v2390
      %v2525 = vadd.f32 %v2459, %v2493
      %v2526 = vadd.f32 %v2460, %v2494
      %v2527 = vadd.f32 %v2461, %v2495
      %v2528 = vadd.f32 %v2462, %v2496
      %v2529 = vadd.f32 %v2463, %v2497
      %v2530 = vadd.f32 %v2464, %v2498
      %v2531 = vadd.f32 %v2465, %v2499
      %v2532 = vadd.f32 %v2466, %v2500
      %v2533 = vadd.f32 %v2467, %v2501
      %v2534 = vadd.f32 %v2468, %v2502
      %v2535 = vadd.f32 %v2469, %v2503
      %v2536 = vadd.f32 %v2470, %v2504
      %v2537 = vadd.f32 %v2471, %v2505
      %v2538 = vadd.f32 %v2472, %v2506
      %v2539 = vadd.f32 %v2473, %v2507
      %v2540 = vadd.f32 %v2474, %v2508
      %v2541 = vadd.f32 %v2475, %v2509
      %v2542 = vadd.f32 %v2476, %v2510
      %v2543 = vadd.f32 %v2477, %v2511
      %v2544 = vadd.f32 %v2478, %v2512
      %v2545 = vadd.f32 %v2479, %v2513
      %v2546 = vadd.f32 %v2480, %v2514
      %v2547 = vadd.f32 %v2481, %v2515
      %v2548 = vadd.f32 %v2482, %v2516
      %v2549 = vadd.f32 %v2483, %v2517
      %v2550 = vadd.f32 %v2484, %v2518
      %v2551 = vadd.f32 %v2485, %v2519
      %v2552 = vadd.f32 %v2486, %v2520
      %v2553 = vadd.f32 %v2487, %v2521
      %v2554 = vadd.f32 %v2488, %v2522
      %v2555 = vadd.f32 %v2489, %v2523
      %v2556 = vadd.f32 %v2490, %v2524
      %v2557 = vld [vmem:[%s5 + $0x3] sm:$0x1]
      %v2558 = vperm.slane %v2557, 0
      %v2559 = vadd.f32 %v2525, %v2558
      %v2560 = vadd.f32 %v2526, %v2558
      %v2561 = vadd.f32 %v2527, %v2558
      %v2562 = vadd.f32 %v2528, %v2558
      %v2563 = vadd.f32 %v2529, %v2558
      %v2564 = vadd.f32 %v2530, %v2558
      %v2565 = vadd.f32 %v2531, %v2558
      %v2566 = vadd.f32 %v2532, %v2558
      %v2567 = vadd.f32 %v2533, %v2558
      %v2568 = vadd.f32 %v2534, %v2558
      %v2569 = vadd.f32 %v2535, %v2558
      %v2570 = vadd.f32 %v2536, %v2558
      %v2571 = vadd.f32 %v2537, %v2558
      %v2572 = vadd.f32 %v2538, %v2558
      %v2573 = vadd.f32 %v2539, %v2558
      %v2574 = vadd.f32 %v2540, %v2558
      %v2575 = vadd.f32 %v2541, %v2558
      %v2576 = vadd.f32 %v2542, %v2558
      %v2577 = vadd.f32 %v2543, %v2558
      %v2578 = vadd.f32 %v2544, %v2558
      %v2579 = vadd.f32 %v2545, %v2558
      %v2580 = vadd.f32 %v2546, %v2558
      %v2581 = vadd.f32 %v2547, %v2558
      %v2582 = vadd.f32 %v2548, %v2558
      %v2583 = vadd.f32 %v2549, %v2558
      %v2584 = vadd.f32 %v2550, %v2558
      %v2585 = vadd.f32 %v2551, %v2558
      %v2586 = vadd.f32 %v2552, %v2558
      %v2587 = vadd.f32 %v2553, %v2558
      %v2588 = vadd.f32 %v2554, %v2558
      %v2589 = vadd.f32 %v2555, %v2558
      %v2590 = vadd.f32 %v2556, %v2558
      %v2591 = vld [vmem:[%s6] sm:$0xff]
      %v2592 = vld [vmem:[%s6 + $0x8] sm:$0xff]
      %v2593 = vld [vmem:[%s6 + $0x10] sm:$0xff]
      %v2594 = vld [vmem:[%s6 + $0x18] sm:$0xff]
      %v2595 = vld [vmem:[%s6 + $0x20] sm:$0xff]
      %v2596 = vld [vmem:[%s6 + $0x28] sm:$0xff]
      %v2597 = vld [vmem:[%s6 + $0x30] sm:$0xff]
      %v2598 = vld [vmem:[%s6 + $0x38] sm:$0xff]
      %v2600 = vsel %vm373, %v2102, 0
      %v2603 = vsel %vm373, %v2105, 0
      %v2606 = vsel %vm373, %v2108, 0
      %v2609 = vsel %vm373, %v2111, 0
      %v2612 = vsel %vm373, %v2114, 0
      %v2615 = vsel %vm373, %v2117, 0
      %v2618 = vsel %vm373, %v2120, 0
      %v2621 = vsel %vm373, %v2123, 0
      %v2624 = vsel %vm373, %v2126, 0
      %v2627 = vsel %vm373, %v2129, 0
      %v2630 = vsel %vm373, %v2132, 0
      %v2633 = vsel %vm373, %v2135, 0
      %v2636 = vsel %vm373, %v2138, 0
      %v2639 = vsel %vm373, %v2141, 0
      %v2642 = vsel %vm373, %v2144, 0
      %v2645 = vsel %vm373, %v2147, 0
      %v2648 = vsel %vm373, %v2150, 0
      %v2651 = vsel %vm373, %v2153, 0
      %v2654 = vsel %vm373, %v2156, 0
      %v2657 = vsel %vm373, %v2159, 0
      %v2660 = vsel %vm373, %v2162, 0
      %v2663 = vsel %vm373, %v2165, 0
      %v2666 = vsel %vm373, %v2168, 0
      %v2669 = vsel %vm373, %v2171, 0
      %v2672 = vsel %vm373, %v2174, 0
      %v2675 = vsel %vm373, %v2177, 0
      %v2678 = vsel %vm373, %v2180, 0
      %v2681 = vsel %vm373, %v2183, 0
      %v2684 = vsel %vm373, %v2186, 0
      %v2687 = vsel %vm373, %v2189, 0
      %v2690 = vsel %vm373, %v2192, 0
      %v2693 = vsel %vm373, %v2195, 0
      %2695 = vmatpush.msra.mxu0 0.0
      %2696 = vmatpush.msra.mxu0 0.0
      %2697 = vmatpush.msra.mxu0 0.0
      %2698 = vmatpush.msra.mxu0 0.0
      %2699 = vmatpush.msra.mxu0 0.0
      %2700 = vmatpush.msra.mxu0 0.0
      %2701 = vmatpush.msra.mxu0 0.0
      %2702 = vmatpush.msra.mxu0 0.0
      %2703 = vmatpush.msra.mxu0 0.0
      %2704 = vmatpush.msra.mxu0 0.0
      %2705 = vmatpush.msra.mxu0 0.0
      %2706 = vmatpush.msra.mxu0 0.0
      %2707 = vmatpush.msra.mxu0 %v2598
      %2708 = vmatpush.msra.mxu0 %v2597
      %2709 = vmatpush.msra.mxu0 %v2596
      %2710 = vmatpush.msra.mxu0 %v2595
      %2711 = vmatmul.f32.gmra.mxu0 %v2600
      %v2712 = vpop.f32.mrf.mxu0
      %v2713 = vadd.f32 0.0, %v2712
      %2714 = vmatmul.f32.gmra.mxu0 %v2603
      %v2715 = vpop.f32.mrf.mxu0
      %v2716 = vadd.f32 0.0, %v2715
      %2717 = vmatmul.f32.gmra.mxu0 %v2606
      %v2718 = vpop.f32.mrf.mxu0
      %v2719 = vadd.f32 0.0, %v2718
      %2720 = vmatmul.f32.gmra.mxu0 %v2609
      %v2721 = vpop.f32.mrf.mxu0
      %v2722 = vadd.f32 0.0, %v2721
      %2723 = vmatmul.f32.gmra.mxu0 %v2612
      %v2724 = vpop.f32.mrf.mxu0
      %v2725 = vadd.f32 0.0, %v2724
      %2726 = vmatmul.f32.gmra.mxu0 %v2615
      %v2727 = vpop.f32.mrf.mxu0
      %v2728 = vadd.f32 0.0, %v2727
      %2729 = vmatmul.f32.gmra.mxu0 %v2618
      %v2730 = vpop.f32.mrf.mxu0
      %v2731 = vadd.f32 0.0, %v2730
      %2732 = vmatmul.f32.gmra.mxu0 %v2621
      %v2733 = vpop.f32.mrf.mxu0
      %v2734 = vadd.f32 0.0, %v2733
      %2735 = vmatmul.f32.gmra.mxu0 %v2624
      %v2736 = vpop.f32.mrf.mxu0
      %v2737 = vadd.f32 0.0, %v2736
      %2738 = vmatmul.f32.gmra.mxu0 %v2627
      %v2739 = vpop.f32.mrf.mxu0
      %v2740 = vadd.f32 0.0, %v2739
      %2741 = vmatmul.f32.gmra.mxu0 %v2630
      %v2742 = vpop.f32.mrf.mxu0
      %v2743 = vadd.f32 0.0, %v2742
      %2744 = vmatmul.f32.gmra.mxu0 %v2633
      %v2745 = vpop.f32.mrf.mxu0
      %v2746 = vadd.f32 0.0, %v2745
      %2747 = vmatmul.f32.gmra.mxu0 %v2636
      %v2748 = vpop.f32.mrf.mxu0
      %v2749 = vadd.f32 0.0, %v2748
      %2750 = vmatmul.f32.gmra.mxu0 %v2639
      %v2751 = vpop.f32.mrf.mxu0
      %v2752 = vadd.f32 0.0, %v2751
      %2753 = vmatmul.f32.gmra.mxu0 %v2642
      %v2754 = vpop.f32.mrf.mxu0
      %v2755 = vadd.f32 0.0, %v2754
      %2756 = vmatmul.f32.gmra.mxu0 %v2645
      %v2757 = vpop.f32.mrf.mxu0
      %v2758 = vadd.f32 0.0, %v2757
      %2759 = vmatmul.f32.gmra.mxu0 %v2648
      %v2760 = vpop.f32.mrf.mxu0
      %v2761 = vadd.f32 0.0, %v2760
      %2762 = vmatmul.f32.gmra.mxu0 %v2651
      %v2763 = vpop.f32.mrf.mxu0
      %v2764 = vadd.f32 0.0, %v2763
      %2765 = vmatmul.f32.gmra.mxu0 %v2654
      %v2766 = vpop.f32.mrf.mxu0
      %v2767 = vadd.f32 0.0, %v2766
      %2768 = vmatmul.f32.gmra.mxu0 %v2657
      %v2769 = vpop.f32.mrf.mxu0
      %v2770 = vadd.f32 0.0, %v2769
      %2771 = vmatmul.f32.gmra.mxu0 %v2660
      %v2772 = vpop.f32.mrf.mxu0
      %v2773 = vadd.f32 0.0, %v2772
      %2774 = vmatmul.f32.gmra.mxu0 %v2663
      %v2775 = vpop.f32.mrf.mxu0
      %v2776 = vadd.f32 0.0, %v2775
      %2777 = vmatmul.f32.gmra.mxu0 %v2666
      %v2778 = vpop.f32.mrf.mxu0
      %v2779 = vadd.f32 0.0, %v2778
      %2780 = vmatmul.f32.gmra.mxu0 %v2669
      %v2781 = vpop.f32.mrf.mxu0
      %v2782 = vadd.f32 0.0, %v2781
      %2783 = vmatmul.f32.gmra.mxu0 %v2672
      %v2784 = vpop.f32.mrf.mxu0
      %v2785 = vadd.f32 0.0, %v2784
      %2786 = vmatmul.f32.gmra.mxu0 %v2675
      %v2787 = vpop.f32.mrf.mxu0
      %v2788 = vadd.f32 0.0, %v2787
      %2789 = vmatmul.f32.gmra.mxu0 %v2678
      %v2790 = vpop.f32.mrf.mxu0
      %v2791 = vadd.f32 0.0, %v2790
      %2792 = vmatmul.f32.gmra.mxu0 %v2681
      %v2793 = vpop.f32.mrf.mxu0
      %v2794 = vadd.f32 0.0, %v2793
      %2795 = vmatmul.f32.gmra.mxu0 %v2684
      %v2796 = vpop.f32.mrf.mxu0
      %v2797 = vadd.f32 0.0, %v2796
      %2798 = vmatmul.f32.gmra.mxu0 %v2687
      %v2799 = vpop.f32.mrf.mxu0
      %v2800 = vadd.f32 0.0, %v2799
      %2801 = vmatmul.f32.gmra.mxu0 %v2690
      %v2802 = vpop.f32.mrf.mxu0
      %v2803 = vadd.f32 0.0, %v2802
      %2804 = vmatmul.f32.gmra.mxu0 %v2693
      %v2805 = vpop.f32.mrf.mxu0
      %v2806 = vadd.f32 0.0, %v2805
      %2807 = vdwg.mxu0
      %v2809 = vsel %vm373, %v2559, 0
      %v2812 = vsel %vm373, %v2560, 0
      %v2815 = vsel %vm373, %v2561, 0
      %v2818 = vsel %vm373, %v2562, 0
      %v2821 = vsel %vm373, %v2563, 0
      %v2824 = vsel %vm373, %v2564, 0
      %v2827 = vsel %vm373, %v2565, 0
      %v2830 = vsel %vm373, %v2566, 0
      %v2833 = vsel %vm373, %v2567, 0
      %v2836 = vsel %vm373, %v2568, 0
      %v2839 = vsel %vm373, %v2569, 0
      %v2842 = vsel %vm373, %v2570, 0
      %v2845 = vsel %vm373, %v2571, 0
      %v2848 = vsel %vm373, %v2572, 0
      %v2851 = vsel %vm373, %v2573, 0
      %v2854 = vsel %vm373, %v2574, 0
      %v2857 = vsel %vm373, %v2575, 0
      %v2860 = vsel %vm373, %v2576, 0
      %v2863 = vsel %vm373, %v2577, 0
      %v2866 = vsel %vm373, %v2578, 0
      %v2869 = vsel %vm373, %v2579, 0
      %v2872 = vsel %vm373, %v2580, 0
      %v2875 = vsel %vm373, %v2581, 0
      %v2878 = vsel %vm373, %v2582, 0
      %v2881 = vsel %vm373, %v2583, 0
      %v2884 = vsel %vm373, %v2584, 0
      %v2887 = vsel %vm373, %v2585, 0
      %v2890 = vsel %vm373, %v2586, 0
      %v2893 = vsel %vm373, %v2587, 0
      %v2896 = vsel %vm373, %v2588, 0
      %v2899 = vsel %vm373, %v2589, 0
      %v2902 = vsel %vm373, %v2590, 0
      %2904 = vmatpush.msra.mxu0 0.0
      %2905 = vmatpush.msra.mxu0 0.0
      %2906 = vmatpush.msra.mxu0 0.0
      %2907 = vmatpush.msra.mxu0 0.0
      %2908 = vmatpush.msra.mxu0 0.0
      %2909 = vmatpush.msra.mxu0 0.0
      %2910 = vmatpush.msra.mxu0 0.0
      %2911 = vmatpush.msra.mxu0 0.0
      %2912 = vmatpush.msra.mxu0 0.0
      %2913 = vmatpush.msra.mxu0 0.0
      %2914 = vmatpush.msra.mxu0 0.0
      %2915 = vmatpush.msra.mxu0 0.0
      %2916 = vmatpush.msra.mxu0 %v2594
      %2917 = vmatpush.msra.mxu0 %v2593
      %2918 = vmatpush.msra.mxu0 %v2592
      %2919 = vmatpush.msra.mxu0 %v2591
      %2920 = vmatmul.f32.gmra.mxu0 %v2809
      %v2921 = vpop.f32.mrf.mxu0
      %v2922 = vadd.f32 %v2713, %v2921
      %2923 = vmatmul.f32.gmra.mxu0 %v2812
      %v2924 = vpop.f32.mrf.mxu0
      %v2925 = vadd.f32 %v2716, %v2924
      %2926 = vmatmul.f32.gmra.mxu0 %v2815
      %v2927 = vpop.f32.mrf.mxu0
      %v2928 = vadd.f32 %v2719, %v2927
      %2929 = vmatmul.f32.gmra.mxu0 %v2818
      %v2930 = vpop.f32.mrf.mxu0
      %v2931 = vadd.f32 %v2722, %v2930
      %2932 = vmatmul.f32.gmra.mxu0 %v2821
      %v2933 = vpop.f32.mrf.mxu0
      %v2934 = vadd.f32 %v2725, %v2933
      %2935 = vmatmul.f32.gmra.mxu0 %v2824
      %v2936 = vpop.f32.mrf.mxu0
      %v2937 = vadd.f32 %v2728, %v2936
      %2938 = vmatmul.f32.gmra.mxu0 %v2827
      %v2939 = vpop.f32.mrf.mxu0
      %v2940 = vadd.f32 %v2731, %v2939
      %2941 = vmatmul.f32.gmra.mxu0 %v2830
      %v2942 = vpop.f32.mrf.mxu0
      %v2943 = vadd.f32 %v2734, %v2942
      %2944 = vmatmul.f32.gmra.mxu0 %v2833
      %v2945 = vpop.f32.mrf.mxu0
      %v2946 = vadd.f32 %v2737, %v2945
      %2947 = vmatmul.f32.gmra.mxu0 %v2836
      %v2948 = vpop.f32.mrf.mxu0
      %v2949 = vadd.f32 %v2740, %v2948
      %2950 = vmatmul.f32.gmra.mxu0 %v2839
      %v2951 = vpop.f32.mrf.mxu0
      %v2952 = vadd.f32 %v2743, %v2951
      %2953 = vmatmul.f32.gmra.mxu0 %v2842
      %v2954 = vpop.f32.mrf.mxu0
      %v2955 = vadd.f32 %v2746, %v2954
      %2956 = vmatmul.f32.gmra.mxu0 %v2845
      %v2957 = vpop.f32.mrf.mxu0
      %v2958 = vadd.f32 %v2749, %v2957
      %2959 = vmatmul.f32.gmra.mxu0 %v2848
      %v2960 = vpop.f32.mrf.mxu0
      %v2961 = vadd.f32 %v2752, %v2960
      %2962 = vmatmul.f32.gmra.mxu0 %v2851
      %v2963 = vpop.f32.mrf.mxu0
      %v2964 = vadd.f32 %v2755, %v2963
      %2965 = vmatmul.f32.gmra.mxu0 %v2854
      %v2966 = vpop.f32.mrf.mxu0
      %v2967 = vadd.f32 %v2758, %v2966
      %2968 = vmatmul.f32.gmra.mxu0 %v2857
      %v2969 = vpop.f32.mrf.mxu0
      %v2970 = vadd.f32 %v2761, %v2969
      %2971 = vmatmul.f32.gmra.mxu0 %v2860
      %v2972 = vpop.f32.mrf.mxu0
      %v2973 = vadd.f32 %v2764, %v2972
      %2974 = vmatmul.f32.gmra.mxu0 %v2863
      %v2975 = vpop.f32.mrf.mxu0
      %v2976 = vadd.f32 %v2767, %v2975
      %2977 = vmatmul.f32.gmra.mxu0 %v2866
      %v2978 = vpop.f32.mrf.mxu0
      %v2979 = vadd.f32 %v2770, %v2978
      %2980 = vmatmul.f32.gmra.mxu0 %v2869
      %v2981 = vpop.f32.mrf.mxu0
      %v2982 = vadd.f32 %v2773, %v2981
      %2983 = vmatmul.f32.gmra.mxu0 %v2872
      %v2984 = vpop.f32.mrf.mxu0
      %v2985 = vadd.f32 %v2776, %v2984
      %2986 = vmatmul.f32.gmra.mxu0 %v2875
      %v2987 = vpop.f32.mrf.mxu0
      %v2988 = vadd.f32 %v2779, %v2987
      %2989 = vmatmul.f32.gmra.mxu0 %v2878
      %v2990 = vpop.f32.mrf.mxu0
      %v2991 = vadd.f32 %v2782, %v2990
      %2992 = vmatmul.f32.gmra.mxu0 %v2881
      %v2993 = vpop.f32.mrf.mxu0
      %v2994 = vadd.f32 %v2785, %v2993
      %2995 = vmatmul.f32.gmra.mxu0 %v2884
      %v2996 = vpop.f32.mrf.mxu0
      %v2997 = vadd.f32 %v2788, %v2996
      %2998 = vmatmul.f32.gmra.mxu0 %v2887
      %v2999 = vpop.f32.mrf.mxu0
      %v3000 = vadd.f32 %v2791, %v2999
      %3001 = vmatmul.f32.gmra.mxu0 %v2890
      %v3002 = vpop.f32.mrf.mxu0
      %v3003 = vadd.f32 %v2794, %v3002
      %3004 = vmatmul.f32.gmra.mxu0 %v2893
      %v3005 = vpop.f32.mrf.mxu0
      %v3006 = vadd.f32 %v2797, %v3005
      %3007 = vmatmul.f32.gmra.mxu0 %v2896
      %v3008 = vpop.f32.mrf.mxu0
      %v3009 = vadd.f32 %v2800, %v3008
      %3010 = vmatmul.f32.gmra.mxu0 %v2899
      %v3011 = vpop.f32.mrf.mxu0
      %v3012 = vadd.f32 %v2803, %v3011
      %3013 = vmatmul.f32.gmra.mxu0 %v2902
      %v3014 = vpop.f32.mrf.mxu0
      %v3015 = vadd.f32 %v2806, %v3014
      %3016 = vdwg.mxu0
      %v3017 = vld [vmem:[%s7] sm:$0x1]
      %v3018 = vperm.slane %v3017, 0
      %v3019 = vadd.f32 %v2922, %v3018
      %v3020 = vadd.f32 %v2925, %v3018
      %v3021 = vadd.f32 %v2928, %v3018
      %v3022 = vadd.f32 %v2931, %v3018
      %v3023 = vadd.f32 %v2934, %v3018
      %v3024 = vadd.f32 %v2937, %v3018
      %v3025 = vadd.f32 %v2940, %v3018
      %v3026 = vadd.f32 %v2943, %v3018
      %v3027 = vadd.f32 %v2946, %v3018
      %v3028 = vadd.f32 %v2949, %v3018
      %v3029 = vadd.f32 %v2952, %v3018
      %v3030 = vadd.f32 %v2955, %v3018
      %v3031 = vadd.f32 %v2958, %v3018
      %v3032 = vadd.f32 %v2961, %v3018
      %v3033 = vadd.f32 %v2964, %v3018
      %v3034 = vadd.f32 %v2967, %v3018
      %v3035 = vadd.f32 %v2970, %v3018
      %v3036 = vadd.f32 %v2973, %v3018
      %v3037 = vadd.f32 %v2976, %v3018
      %v3038 = vadd.f32 %v2979, %v3018
      %v3039 = vadd.f32 %v2982, %v3018
      %v3040 = vadd.f32 %v2985, %v3018
      %v3041 = vadd.f32 %v2988, %v3018
      %v3042 = vadd.f32 %v2991, %v3018
      %v3043 = vadd.f32 %v2994, %v3018
      %v3044 = vadd.f32 %v2997, %v3018
      %v3045 = vadd.f32 %v3000, %v3018
      %v3046 = vadd.f32 %v3003, %v3018
      %v3047 = vadd.f32 %v3006, %v3018
      %v3048 = vadd.f32 %v3009, %v3018
      %v3049 = vadd.f32 %v3012, %v3018
      %v3050 = vadd.f32 %v3015, %v3018
      %v3051 = vsel %vm373, %v3019, 0.0
      %3052 = vadd.xlane.f32.xlu0 %v3051
      %v3053 = vpop.xlane.xlu0 %3052
      %v3054 = vsel %vm373, %v3020, 0.0
      %3055 = vadd.xlane.f32.xlu0 %v3054
      %v3056 = vpop.xlane.xlu0 %3055
      %v3057 = vsel %vm373, %v3021, 0.0
      %3058 = vadd.xlane.f32.xlu0 %v3057
      %v3059 = vpop.xlane.xlu0 %3058
      %v3060 = vsel %vm373, %v3022, 0.0
      %3061 = vadd.xlane.f32.xlu0 %v3060
      %v3062 = vpop.xlane.xlu0 %3061
      %v3063 = vsel %vm373, %v3023, 0.0
      %3064 = vadd.xlane.f32.xlu0 %v3063
      %v3065 = vpop.xlane.xlu0 %3064
      %v3066 = vsel %vm373, %v3024, 0.0
      %3067 = vadd.xlane.f32.xlu0 %v3066
      %v3068 = vpop.xlane.xlu0 %3067
      %v3069 = vsel %vm373, %v3025, 0.0
      %3070 = vadd.xlane.f32.xlu0 %v3069
      %v3071 = vpop.xlane.xlu0 %3070
      %v3072 = vsel %vm373, %v3026, 0.0
      %3073 = vadd.xlane.f32.xlu0 %v3072
      %v3074 = vpop.xlane.xlu0 %3073
      %v3075 = vsel %vm373, %v3027, 0.0
      %3076 = vadd.xlane.f32.xlu0 %v3075
      %v3077 = vpop.xlane.xlu0 %3076
      %v3078 = vsel %vm373, %v3028, 0.0
      %3079 = vadd.xlane.f32.xlu0 %v3078
      %v3080 = vpop.xlane.xlu0 %3079
      %v3081 = vsel %vm373, %v3029, 0.0
      %3082 = vadd.xlane.f32.xlu0 %v3081
      %v3083 = vpop.xlane.xlu0 %3082
      %v3084 = vsel %vm373, %v3030, 0.0
      %3085 = vadd.xlane.f32.xlu0 %v3084
      %v3086 = vpop.xlane.xlu0 %3085
      %v3087 = vsel %vm373, %v3031, 0.0
      %3088 = vadd.xlane.f32.xlu0 %v3087
      %v3089 = vpop.xlane.xlu0 %3088
      %v3090 = vsel %vm373, %v3032, 0.0
      %3091 = vadd.xlane.f32.xlu0 %v3090
      %v3092 = vpop.xlane.xlu0 %3091
      %v3093 = vsel %vm373, %v3033, 0.0
      %3094 = vadd.xlane.f32.xlu0 %v3093
      %v3095 = vpop.xlane.xlu0 %3094
      %v3096 = vsel %vm373, %v3034, 0.0
      %3097 = vadd.xlane.f32.xlu0 %v3096
      %v3098 = vpop.xlane.xlu0 %3097
      %v3099 = vsel %vm373, %v3035, 0.0
      %3100 = vadd.xlane.f32.xlu0 %v3099
      %v3101 = vpop.xlane.xlu0 %3100
      %v3102 = vsel %vm373, %v3036, 0.0
      %3103 = vadd.xlane.f32.xlu0 %v3102
      %v3104 = vpop.xlane.xlu0 %3103
      %v3105 = vsel %vm373, %v3037, 0.0
      %3106 = vadd.xlane.f32.xlu0 %v3105
      %v3107 = vpop.xlane.xlu0 %3106
      %v3108 = vsel %vm373, %v3038, 0.0
      %3109 = vadd.xlane.f32.xlu0 %v3108
      %v3110 = vpop.xlane.xlu0 %3109
      %v3111 = vsel %vm373, %v3039, 0.0
      %3112 = vadd.xlane.f32.xlu0 %v3111
      %v3113 = vpop.xlane.xlu0 %3112
      %v3114 = vsel %vm373, %v3040, 0.0
      %3115 = vadd.xlane.f32.xlu0 %v3114
      %v3116 = vpop.xlane.xlu0 %3115
      %v3117 = vsel %vm373, %v3041, 0.0
      %3118 = vadd.xlane.f32.xlu0 %v3117
      %v3119 = vpop.xlane.xlu0 %3118
      %v3120 = vsel %vm373, %v3042, 0.0
      %3121 = vadd.xlane.f32.xlu0 %v3120
      %v3122 = vpop.xlane.xlu0 %3121
      %v3123 = vsel %vm373, %v3043, 0.0
      %3124 = vadd.xlane.f32.xlu0 %v3123
      %v3125 = vpop.xlane.xlu0 %3124
      %v3126 = vsel %vm373, %v3044, 0.0
      %3127 = vadd.xlane.f32.xlu0 %v3126
      %v3128 = vpop.xlane.xlu0 %3127
      %v3129 = vsel %vm373, %v3045, 0.0
      %3130 = vadd.xlane.f32.xlu0 %v3129
      %v3131 = vpop.xlane.xlu0 %3130
      %v3132 = vsel %vm373, %v3046, 0.0
      %3133 = vadd.xlane.f32.xlu0 %v3132
      %v3134 = vpop.xlane.xlu0 %3133
      %v3135 = vsel %vm373, %v3047, 0.0
      %3136 = vadd.xlane.f32.xlu0 %v3135
      %v3137 = vpop.xlane.xlu0 %3136
      %v3138 = vsel %vm373, %v3048, 0.0
      %3139 = vadd.xlane.f32.xlu0 %v3138
      %v3140 = vpop.xlane.xlu0 %3139
      %v3141 = vsel %vm373, %v3049, 0.0
      %3142 = vadd.xlane.f32.xlu0 %v3141
      %v3143 = vpop.xlane.xlu0 %3142
      %v3144 = vsel %vm373, %v3050, 0.0
      %3145 = vadd.xlane.f32.xlu0 %v3144
      %v3146 = vpop.xlane.xlu0 %3145
      %v3147 = vrcp.pop 32.0
      %v3148 = vmul.f32 32.0, %v3147
      %v3149 = vsub.f32 1.0, %v3148
      %v3150 = vmul.f32 %v3147, %v3149
      %v3151 = vadd.f32 %v3147, %v3150
      %vm3152 = vweird.f32 %v3147
      %v3153 = vsel %vm3152, %v3147, %v3151
      %v3154 = vmul.f32 %v3053, %v3153
      %v3155 = vmul.f32 %v3056, %v3153
      %v3156 = vmul.f32 %v3059, %v3153
      %v3157 = vmul.f32 %v3062, %v3153
      %v3158 = vmul.f32 %v3065, %v3153
      %v3159 = vmul.f32 %v3068, %v3153
      %v3160 = vmul.f32 %v3071, %v3153
      %v3161 = vmul.f32 %v3074, %v3153
      %v3162 = vmul.f32 %v3077, %v3153
      %v3163 = vmul.f32 %v3080, %v3153
      %v3164 = vmul.f32 %v3083, %v3153
      %v3165 = vmul.f32 %v3086, %v3153
      %v3166 = vmul.f32 %v3089, %v3153
      %v3167 = vmul.f32 %v3092, %v3153
      %v3168 = vmul.f32 %v3095, %v3153
      %v3169 = vmul.f32 %v3098, %v3153
      %v3170 = vmul.f32 %v3101, %v3153
      %v3171 = vmul.f32 %v3104, %v3153
      %v3172 = vmul.f32 %v3107, %v3153
      %v3173 = vmul.f32 %v3110, %v3153
      %v3174 = vmul.f32 %v3113, %v3153
      %v3175 = vmul.f32 %v3116, %v3153
      %v3176 = vmul.f32 %v3119, %v3153
      %v3177 = vmul.f32 %v3122, %v3153
      %v3178 = vmul.f32 %v3125, %v3153
      %v3179 = vmul.f32 %v3128, %v3153
      %v3180 = vmul.f32 %v3131, %v3153
      %v3181 = vmul.f32 %v3134, %v3153
      %v3182 = vmul.f32 %v3137, %v3153
      %v3183 = vmul.f32 %v3140, %v3153
      %v3184 = vmul.f32 %v3143, %v3153
      %v3185 = vmul.f32 %v3146, %v3153
      %v3186 = vsub.f32 %v3019, %v3154
      %v3187 = vsub.f32 %v3020, %v3155
      %v3188 = vsub.f32 %v3021, %v3156
      %v3189 = vsub.f32 %v3022, %v3157
      %v3190 = vsub.f32 %v3023, %v3158
      %v3191 = vsub.f32 %v3024, %v3159
      %v3192 = vsub.f32 %v3025, %v3160
      %v3193 = vsub.f32 %v3026, %v3161
      %v3194 = vsub.f32 %v3027, %v3162
      %v3195 = vsub.f32 %v3028, %v3163
      %v3196 = vsub.f32 %v3029, %v3164
      %v3197 = vsub.f32 %v3030, %v3165
      %v3198 = vsub.f32 %v3031, %v3166
      %v3199 = vsub.f32 %v3032, %v3167
      %v3200 = vsub.f32 %v3033, %v3168
      %v3201 = vsub.f32 %v3034, %v3169
      %v3202 = vsub.f32 %v3035, %v3170
      %v3203 = vsub.f32 %v3036, %v3171
      %v3204 = vsub.f32 %v3037, %v3172
      %v3205 = vsub.f32 %v3038, %v3173
      %v3206 = vsub.f32 %v3039, %v3174
      %v3207 = vsub.f32 %v3040, %v3175
      %v3208 = vsub.f32 %v3041, %v3176
      %v3209 = vsub.f32 %v3042, %v3177
      %v3210 = vsub.f32 %v3043, %v3178
      %v3211 = vsub.f32 %v3044, %v3179
      %v3212 = vsub.f32 %v3045, %v3180
      %v3213 = vsub.f32 %v3046, %v3181
      %v3214 = vsub.f32 %v3047, %v3182
      %v3215 = vsub.f32 %v3048, %v3183
      %v3216 = vsub.f32 %v3049, %v3184
      %v3217 = vsub.f32 %v3050, %v3185
      %v3218 = vmul.f32 %v3186, %v3186
      %v3219 = vmul.f32 %v3187, %v3187
      %v3220 = vmul.f32 %v3188, %v3188
      %v3221 = vmul.f32 %v3189, %v3189
      %v3222 = vmul.f32 %v3190, %v3190
      %v3223 = vmul.f32 %v3191, %v3191
      %v3224 = vmul.f32 %v3192, %v3192
      %v3225 = vmul.f32 %v3193, %v3193
      %v3226 = vmul.f32 %v3194, %v3194
      %v3227 = vmul.f32 %v3195, %v3195
      %v3228 = vmul.f32 %v3196, %v3196
      %v3229 = vmul.f32 %v3197, %v3197
      %v3230 = vmul.f32 %v3198, %v3198
      %v3231 = vmul.f32 %v3199, %v3199
      %v3232 = vmul.f32 %v3200, %v3200
      %v3233 = vmul.f32 %v3201, %v3201
      %v3234 = vmul.f32 %v3202, %v3202
      %v3235 = vmul.f32 %v3203, %v3203
      %v3236 = vmul.f32 %v3204, %v3204
      %v3237 = vmul.f32 %v3205, %v3205
      %v3238 = vmul.f32 %v3206, %v3206
      %v3239 = vmul.f32 %v3207, %v3207
      %v3240 = vmul.f32 %v3208, %v3208
      %v3241 = vmul.f32 %v3209, %v3209
      %v3242 = vmul.f32 %v3210, %v3210
      %v3243 = vmul.f32 %v3211, %v3211
      %v3244 = vmul.f32 %v3212, %v3212
      %v3245 = vmul.f32 %v3213, %v3213
      %v3246 = vmul.f32 %v3214, %v3214
      %v3247 = vmul.f32 %v3215, %v3215
      %v3248 = vmul.f32 %v3216, %v3216
      %v3249 = vmul.f32 %v3217, %v3217
      %v3250 = vsel %vm373, %v3218, 0.0
      %3251 = vadd.xlane.f32.xlu0 %v3250
      %v3252 = vpop.xlane.xlu0 %3251
      %v3253 = vsel %vm373, %v3219, 0.0
      %3254 = vadd.xlane.f32.xlu0 %v3253
      %v3255 = vpop.xlane.xlu0 %3254
      %v3256 = vsel %vm373, %v3220, 0.0
      %3257 = vadd.xlane.f32.xlu0 %v3256
      %v3258 = vpop.xlane.xlu0 %3257
      %v3259 = vsel %vm373, %v3221, 0.0
      %3260 = vadd.xlane.f32.xlu0 %v3259
      %v3261 = vpop.xlane.xlu0 %3260
      %v3262 = vsel %vm373, %v3222, 0.0
      %3263 = vadd.xlane.f32.xlu0 %v3262
      %v3264 = vpop.xlane.xlu0 %3263
      %v3265 = vsel %vm373, %v3223, 0.0
      %3266 = vadd.xlane.f32.xlu0 %v3265
      %v3267 = vpop.xlane.xlu0 %3266
      %v3268 = vsel %vm373, %v3224, 0.0
      %3269 = vadd.xlane.f32.xlu0 %v3268
      %v3270 = vpop.xlane.xlu0 %3269
      %v3271 = vsel %vm373, %v3225, 0.0
      %3272 = vadd.xlane.f32.xlu0 %v3271
      %v3273 = vpop.xlane.xlu0 %3272
      %v3274 = vsel %vm373, %v3226, 0.0
      %3275 = vadd.xlane.f32.xlu0 %v3274
      %v3276 = vpop.xlane.xlu0 %3275
      %v3277 = vsel %vm373, %v3227, 0.0
      %3278 = vadd.xlane.f32.xlu0 %v3277
      %v3279 = vpop.xlane.xlu0 %3278
      %v3280 = vsel %vm373, %v3228, 0.0
      %3281 = vadd.xlane.f32.xlu0 %v3280
      %v3282 = vpop.xlane.xlu0 %3281
      %v3283 = vsel %vm373, %v3229, 0.0
      %3284 = vadd.xlane.f32.xlu0 %v3283
      %v3285 = vpop.xlane.xlu0 %3284
      %v3286 = vsel %vm373, %v3230, 0.0
      %3287 = vadd.xlane.f32.xlu0 %v3286
      %v3288 = vpop.xlane.xlu0 %3287
      %v3289 = vsel %vm373, %v3231, 0.0
      %3290 = vadd.xlane.f32.xlu0 %v3289
      %v3291 = vpop.xlane.xlu0 %3290
      %v3292 = vsel %vm373, %v3232, 0.0
      %3293 = vadd.xlane.f32.xlu0 %v3292
      %v3294 = vpop.xlane.xlu0 %3293
      %v3295 = vsel %vm373, %v3233, 0.0
      %3296 = vadd.xlane.f32.xlu0 %v3295
      %v3297 = vpop.xlane.xlu0 %3296
      %v3298 = vsel %vm373, %v3234, 0.0
      %3299 = vadd.xlane.f32.xlu0 %v3298
      %v3300 = vpop.xlane.xlu0 %3299
      %v3301 = vsel %vm373, %v3235, 0.0
      %3302 = vadd.xlane.f32.xlu0 %v3301
      %v3303 = vpop.xlane.xlu0 %3302
      %v3304 = vsel %vm373, %v3236, 0.0
      %3305 = vadd.xlane.f32.xlu0 %v3304
      %v3306 = vpop.xlane.xlu0 %3305
      %v3307 = vsel %vm373, %v3237, 0.0
      %3308 = vadd.xlane.f32.xlu0 %v3307
      %v3309 = vpop.xlane.xlu0 %3308
      %v3310 = vsel %vm373, %v3238, 0.0
      %3311 = vadd.xlane.f32.xlu0 %v3310
      %v3312 = vpop.xlane.xlu0 %3311
      %v3313 = vsel %vm373, %v3239, 0.0
      %3314 = vadd.xlane.f32.xlu0 %v3313
      %v3315 = vpop.xlane.xlu0 %3314
      %v3316 = vsel %vm373, %v3240, 0.0
      %3317 = vadd.xlane.f32.xlu0 %v3316
      %v3318 = vpop.xlane.xlu0 %3317
      %v3319 = vsel %vm373, %v3241, 0.0
      %3320 = vadd.xlane.f32.xlu0 %v3319
      %v3321 = vpop.xlane.xlu0 %3320
      %v3322 = vsel %vm373, %v3242, 0.0
      %3323 = vadd.xlane.f32.xlu0 %v3322
      %v3324 = vpop.xlane.xlu0 %3323
      %v3325 = vsel %vm373, %v3243, 0.0
      %3326 = vadd.xlane.f32.xlu0 %v3325
      %v3327 = vpop.xlane.xlu0 %3326
      %v3328 = vsel %vm373, %v3244, 0.0
      %3329 = vadd.xlane.f32.xlu0 %v3328
      %v3330 = vpop.xlane.xlu0 %3329
      %v3331 = vsel %vm373, %v3245, 0.0
      %3332 = vadd.xlane.f32.xlu0 %v3331
      %v3333 = vpop.xlane.xlu0 %3332
      %v3334 = vsel %vm373, %v3246, 0.0
      %3335 = vadd.xlane.f32.xlu0 %v3334
      %v3336 = vpop.xlane.xlu0 %3335
      %v3337 = vsel %vm373, %v3247, 0.0
      %3338 = vadd.xlane.f32.xlu0 %v3337
      %v3339 = vpop.xlane.xlu0 %3338
      %v3340 = vsel %vm373, %v3248, 0.0
      %3341 = vadd.xlane.f32.xlu0 %v3340
      %v3342 = vpop.xlane.xlu0 %3341
      %v3343 = vsel %vm373, %v3249, 0.0
      %3344 = vadd.xlane.f32.xlu0 %v3343
      %v3345 = vpop.xlane.xlu0 %3344
      %v3346 = vmul.f32 %v3252, %v3153
      %v3347 = vmul.f32 %v3255, %v3153
      %v3348 = vmul.f32 %v3258, %v3153
      %v3349 = vmul.f32 %v3261, %v3153
      %v3350 = vmul.f32 %v3264, %v3153
      %v3351 = vmul.f32 %v3267, %v3153
      %v3352 = vmul.f32 %v3270, %v3153
      %v3353 = vmul.f32 %v3273, %v3153
      %v3354 = vmul.f32 %v3276, %v3153
      %v3355 = vmul.f32 %v3279, %v3153
      %v3356 = vmul.f32 %v3282, %v3153
      %v3357 = vmul.f32 %v3285, %v3153
      %v3358 = vmul.f32 %v3288, %v3153
      %v3359 = vmul.f32 %v3291, %v3153
      %v3360 = vmul.f32 %v3294, %v3153
      %v3361 = vmul.f32 %v3297, %v3153
      %v3362 = vmul.f32 %v3300, %v3153
      %v3363 = vmul.f32 %v3303, %v3153
      %v3364 = vmul.f32 %v3306, %v3153
      %v3365 = vmul.f32 %v3309, %v3153
      %v3366 = vmul.f32 %v3312, %v3153
      %v3367 = vmul.f32 %v3315, %v3153
      %v3368 = vmul.f32 %v3318, %v3153
      %v3369 = vmul.f32 %v3321, %v3153
      %v3370 = vmul.f32 %v3324, %v3153
      %v3371 = vmul.f32 %v3327, %v3153
      %v3372 = vmul.f32 %v3330, %v3153
      %v3373 = vmul.f32 %v3333, %v3153
      %v3374 = vmul.f32 %v3336, %v3153
      %v3375 = vmul.f32 %v3339, %v3153
      %v3376 = vmul.f32 %v3342, %v3153
      %v3377 = vmul.f32 %v3345, %v3153
      %v3378 = vadd.f32 %v3346, 1e-05
      %v3379 = vadd.f32 %v3347, 1e-05
      %v3380 = vadd.f32 %v3348, 1e-05
      %v3381 = vadd.f32 %v3349, 1e-05
      %v3382 = vadd.f32 %v3350, 1e-05
      %v3383 = vadd.f32 %v3351, 1e-05
      %v3384 = vadd.f32 %v3352, 1e-05
      %v3385 = vadd.f32 %v3353, 1e-05
      %v3386 = vadd.f32 %v3354, 1e-05
      %v3387 = vadd.f32 %v3355, 1e-05
      %v3388 = vadd.f32 %v3356, 1e-05
      %v3389 = vadd.f32 %v3357, 1e-05
      %v3390 = vadd.f32 %v3358, 1e-05
      %v3391 = vadd.f32 %v3359, 1e-05
      %v3392 = vadd.f32 %v3360, 1e-05
      %v3393 = vadd.f32 %v3361, 1e-05
      %v3394 = vadd.f32 %v3362, 1e-05
      %v3395 = vadd.f32 %v3363, 1e-05
      %v3396 = vadd.f32 %v3364, 1e-05
      %v3397 = vadd.f32 %v3365, 1e-05
      %v3398 = vadd.f32 %v3366, 1e-05
      %v3399 = vadd.f32 %v3367, 1e-05
      %v3400 = vadd.f32 %v3368, 1e-05
      %v3401 = vadd.f32 %v3369, 1e-05
      %v3402 = vadd.f32 %v3370, 1e-05
      %v3403 = vadd.f32 %v3371, 1e-05
      %v3404 = vadd.f32 %v3372, 1e-05
      %v3405 = vadd.f32 %v3373, 1e-05
      %v3406 = vadd.f32 %v3374, 1e-05
      %v3407 = vadd.f32 %v3375, 1e-05
      %v3408 = vadd.f32 %v3376, 1e-05
      %v3409 = vadd.f32 %v3377, 1e-05
      %v3410 = vrsqrt.pop %v3378
      %v3411 = vmul.f32 %v3410, %v3378
      %v3412 = vmul.f32 %v3411, %v3410
      %v3413 = vmul.f32 0.5, %v3412
      %v3414 = vsub.f32 1.5, %v3413
      %v3415 = vmul.f32 %v3410, %v3414
      %vm3416 = vweird.f32 %v3378
      %vm3417 = vweird.f32 %v3410
      %vm3418 = vmor %vm3416, %vm3417
      %v3419 = vsel %vm3418, %v3410, %v3415
      %v3420 = vrsqrt.pop %v3379
      %v3421 = vmul.f32 %v3420, %v3379
      %v3422 = vmul.f32 %v3421, %v3420
      %v3423 = vmul.f32 0.5, %v3422
      %v3424 = vsub.f32 1.5, %v3423
      %v3425 = vmul.f32 %v3420, %v3424
      %vm3426 = vweird.f32 %v3379
      %vm3427 = vweird.f32 %v3420
      %vm3428 = vmor %vm3426, %vm3427
      %v3429 = vsel %vm3428, %v3420, %v3425
      %v3430 = vrsqrt.pop %v3380
      %v3431 = vmul.f32 %v3430, %v3380
      %v3432 = vmul.f32 %v3431, %v3430
      %v3433 = vmul.f32 0.5, %v3432
      %v3434 = vsub.f32 1.5, %v3433
      %v3435 = vmul.f32 %v3430, %v3434
      %vm3436 = vweird.f32 %v3380
      %vm3437 = vweird.f32 %v3430
      %vm3438 = vmor %vm3436, %vm3437
      %v3439 = vsel %vm3438, %v3430, %v3435
      %v3440 = vrsqrt.pop %v3381
      %v3441 = vmul.f32 %v3440, %v3381
      %v3442 = vmul.f32 %v3441, %v3440
      %v3443 = vmul.f32 0.5, %v3442
      %v3444 = vsub.f32 1.5, %v3443
      %v3445 = vmul.f32 %v3440, %v3444
      %vm3446 = vweird.f32 %v3381
      %vm3447 = vweird.f32 %v3440
      %vm3448 = vmor %vm3446, %vm3447
      %v3449 = vsel %vm3448, %v3440, %v3445
      %v3450 = vrsqrt.pop %v3382
      %v3451 = vmul.f32 %v3450, %v3382
      %v3452 = vmul.f32 %v3451, %v3450
      %v3453 = vmul.f32 0.5, %v3452
      %v3454 = vsub.f32 1.5, %v3453
      %v3455 = vmul.f32 %v3450, %v3454
      %vm3456 = vweird.f32 %v3382
      %vm3457 = vweird.f32 %v3450
      %vm3458 = vmor %vm3456, %vm3457
      %v3459 = vsel %vm3458, %v3450, %v3455
      %v3460 = vrsqrt.pop %v3383
      %v3461 = vmul.f32 %v3460, %v3383
      %v3462 = vmul.f32 %v3461, %v3460
      %v3463 = vmul.f32 0.5, %v3462
      %v3464 = vsub.f32 1.5, %v3463
      %v3465 = vmul.f32 %v3460, %v3464
      %vm3466 = vweird.f32 %v3383
      %vm3467 = vweird.f32 %v3460
      %vm3468 = vmor %vm3466, %vm3467
      %v3469 = vsel %vm3468, %v3460, %v3465
      %v3470 = vrsqrt.pop %v3384
      %v3471 = vmul.f32 %v3470, %v3384
      %v3472 = vmul.f32 %v3471, %v3470
      %v3473 = vmul.f32 0.5, %v3472
      %v3474 = vsub.f32 1.5, %v3473
      %v3475 = vmul.f32 %v3470, %v3474
      %vm3476 = vweird.f32 %v3384
      %vm3477 = vweird.f32 %v3470
      %vm3478 = vmor %vm3476, %vm3477
      %v3479 = vsel %vm3478, %v3470, %v3475
      %v3480 = vrsqrt.pop %v3385
      %v3481 = vmul.f32 %v3480, %v3385
      %v3482 = vmul.f32 %v3481, %v3480
      %v3483 = vmul.f32 0.5, %v3482
      %v3484 = vsub.f32 1.5, %v3483
      %v3485 = vmul.f32 %v3480, %v3484
      %vm3486 = vweird.f32 %v3385
      %vm3487 = vweird.f32 %v3480
      %vm3488 = vmor %vm3486, %vm3487
      %v3489 = vsel %vm3488, %v3480, %v3485
      %v3490 = vrsqrt.pop %v3386
      %v3491 = vmul.f32 %v3490, %v3386
      %v3492 = vmul.f32 %v3491, %v3490
      %v3493 = vmul.f32 0.5, %v3492
      %v3494 = vsub.f32 1.5, %v3493
      %v3495 = vmul.f32 %v3490, %v3494
      %vm3496 = vweird.f32 %v3386
      %vm3497 = vweird.f32 %v3490
      %vm3498 = vmor %vm3496, %vm3497
      %v3499 = vsel %vm3498, %v3490, %v3495
      %v3500 = vrsqrt.pop %v3387
      %v3501 = vmul.f32 %v3500, %v3387
      %v3502 = vmul.f32 %v3501, %v3500
      %v3503 = vmul.f32 0.5, %v3502
      %v3504 = vsub.f32 1.5, %v3503
      %v3505 = vmul.f32 %v3500, %v3504
      %vm3506 = vweird.f32 %v3387
      %vm3507 = vweird.f32 %v3500
      %vm3508 = vmor %vm3506, %vm3507
      %v3509 = vsel %vm3508, %v3500, %v3505
      %v3510 = vrsqrt.pop %v3388
      %v3511 = vmul.f32 %v3510, %v3388
      %v3512 = vmul.f32 %v3511, %v3510
      %v3513 = vmul.f32 0.5, %v3512
      %v3514 = vsub.f32 1.5, %v3513
      %v3515 = vmul.f32 %v3510, %v3514
      %vm3516 = vweird.f32 %v3388
      %vm3517 = vweird.f32 %v3510
      %vm3518 = vmor %vm3516, %vm3517
      %v3519 = vsel %vm3518, %v3510, %v3515
      %v3520 = vrsqrt.pop %v3389
      %v3521 = vmul.f32 %v3520, %v3389
      %v3522 = vmul.f32 %v3521, %v3520
      %v3523 = vmul.f32 0.5, %v3522
      %v3524 = vsub.f32 1.5, %v3523
      %v3525 = vmul.f32 %v3520, %v3524
      %vm3526 = vweird.f32 %v3389
      %vm3527 = vweird.f32 %v3520
      %vm3528 = vmor %vm3526, %vm3527
      %v3529 = vsel %vm3528, %v3520, %v3525
      %v3530 = vrsqrt.pop %v3390
      %v3531 = vmul.f32 %v3530, %v3390
      %v3532 = vmul.f32 %v3531, %v3530
      %v3533 = vmul.f32 0.5, %v3532
      %v3534 = vsub.f32 1.5, %v3533
      %v3535 = vmul.f32 %v3530, %v3534
      %vm3536 = vweird.f32 %v3390
      %vm3537 = vweird.f32 %v3530
      %vm3538 = vmor %vm3536, %vm3537
      %v3539 = vsel %vm3538, %v3530, %v3535
      %v3540 = vrsqrt.pop %v3391
      %v3541 = vmul.f32 %v3540, %v3391
      %v3542 = vmul.f32 %v3541, %v3540
      %v3543 = vmul.f32 0.5, %v3542
      %v3544 = vsub.f32 1.5, %v3543
      %v3545 = vmul.f32 %v3540, %v3544
      %vm3546 = vweird.f32 %v3391
      %vm3547 = vweird.f32 %v3540
      %vm3548 = vmor %vm3546, %vm3547
      %v3549 = vsel %vm3548, %v3540, %v3545
      %v3550 = vrsqrt.pop %v3392
      %v3551 = vmul.f32 %v3550, %v3392
      %v3552 = vmul.f32 %v3551, %v3550
      %v3553 = vmul.f32 0.5, %v3552
      %v3554 = vsub.f32 1.5, %v3553
      %v3555 = vmul.f32 %v3550, %v3554
      %vm3556 = vweird.f32 %v3392
      %vm3557 = vweird.f32 %v3550
      %vm3558 = vmor %vm3556, %vm3557
      %v3559 = vsel %vm3558, %v3550, %v3555
      %v3560 = vrsqrt.pop %v3393
      %v3561 = vmul.f32 %v3560, %v3393
      %v3562 = vmul.f32 %v3561, %v3560
      %v3563 = vmul.f32 0.5, %v3562
      %v3564 = vsub.f32 1.5, %v3563
      %v3565 = vmul.f32 %v3560, %v3564
      %vm3566 = vweird.f32 %v3393
      %vm3567 = vweird.f32 %v3560
      %vm3568 = vmor %vm3566, %vm3567
      %v3569 = vsel %vm3568, %v3560, %v3565
      %v3570 = vrsqrt.pop %v3394
      %v3571 = vmul.f32 %v3570, %v3394
      %v3572 = vmul.f32 %v3571, %v3570
      %v3573 = vmul.f32 0.5, %v3572
      %v3574 = vsub.f32 1.5, %v3573
      %v3575 = vmul.f32 %v3570, %v3574
      %vm3576 = vweird.f32 %v3394
      %vm3577 = vweird.f32 %v3570
      %vm3578 = vmor %vm3576, %vm3577
      %v3579 = vsel %vm3578, %v3570, %v3575
      %v3580 = vrsqrt.pop %v3395
      %v3581 = vmul.f32 %v3580, %v3395
      %v3582 = vmul.f32 %v3581, %v3580
      %v3583 = vmul.f32 0.5, %v3582
      %v3584 = vsub.f32 1.5, %v3583
      %v3585 = vmul.f32 %v3580, %v3584
      %vm3586 = vweird.f32 %v3395
      %vm3587 = vweird.f32 %v3580
      %vm3588 = vmor %vm3586, %vm3587
      %v3589 = vsel %vm3588, %v3580, %v3585
      %v3590 = vrsqrt.pop %v3396
      %v3591 = vmul.f32 %v3590, %v3396
      %v3592 = vmul.f32 %v3591, %v3590
      %v3593 = vmul.f32 0.5, %v3592
      %v3594 = vsub.f32 1.5, %v3593
      %v3595 = vmul.f32 %v3590, %v3594
      %vm3596 = vweird.f32 %v3396
      %vm3597 = vweird.f32 %v3590
      %vm3598 = vmor %vm3596, %vm3597
      %v3599 = vsel %vm3598, %v3590, %v3595
      %v3600 = vrsqrt.pop %v3397
      %v3601 = vmul.f32 %v3600, %v3397
      %v3602 = vmul.f32 %v3601, %v3600
      %v3603 = vmul.f32 0.5, %v3602
      %v3604 = vsub.f32 1.5, %v3603
      %v3605 = vmul.f32 %v3600, %v3604
      %vm3606 = vweird.f32 %v3397
      %vm3607 = vweird.f32 %v3600
      %vm3608 = vmor %vm3606, %vm3607
      %v3609 = vsel %vm3608, %v3600, %v3605
      %v3610 = vrsqrt.pop %v3398
      %v3611 = vmul.f32 %v3610, %v3398
      %v3612 = vmul.f32 %v3611, %v3610
      %v3613 = vmul.f32 0.5, %v3612
      %v3614 = vsub.f32 1.5, %v3613
      %v3615 = vmul.f32 %v3610, %v3614
      %vm3616 = vweird.f32 %v3398
      %vm3617 = vweird.f32 %v3610
      %vm3618 = vmor %vm3616, %vm3617
      %v3619 = vsel %vm3618, %v3610, %v3615
      %v3620 = vrsqrt.pop %v3399
      %v3621 = vmul.f32 %v3620, %v3399
      %v3622 = vmul.f32 %v3621, %v3620
      %v3623 = vmul.f32 0.5, %v3622
      %v3624 = vsub.f32 1.5, %v3623
      %v3625 = vmul.f32 %v3620, %v3624
      %vm3626 = vweird.f32 %v3399
      %vm3627 = vweird.f32 %v3620
      %vm3628 = vmor %vm3626, %vm3627
      %v3629 = vsel %vm3628, %v3620, %v3625
      %v3630 = vrsqrt.pop %v3400
      %v3631 = vmul.f32 %v3630, %v3400
      %v3632 = vmul.f32 %v3631, %v3630
      %v3633 = vmul.f32 0.5, %v3632
      %v3634 = vsub.f32 1.5, %v3633
      %v3635 = vmul.f32 %v3630, %v3634
      %vm3636 = vweird.f32 %v3400
      %vm3637 = vweird.f32 %v3630
      %vm3638 = vmor %vm3636, %vm3637
      %v3639 = vsel %vm3638, %v3630, %v3635
      %v3640 = vrsqrt.pop %v3401
      %v3641 = vmul.f32 %v3640, %v3401
      %v3642 = vmul.f32 %v3641, %v3640
      %v3643 = vmul.f32 0.5, %v3642
      %v3644 = vsub.f32 1.5, %v3643
      %v3645 = vmul.f32 %v3640, %v3644
      %vm3646 = vweird.f32 %v3401
      %vm3647 = vweird.f32 %v3640
      %vm3648 = vmor %vm3646, %vm3647
      %v3649 = vsel %vm3648, %v3640, %v3645
      %v3650 = vrsqrt.pop %v3402
      %v3651 = vmul.f32 %v3650, %v3402
      %v3652 = vmul.f32 %v3651, %v3650
      %v3653 = vmul.f32 0.5, %v3652
      %v3654 = vsub.f32 1.5, %v3653
      %v3655 = vmul.f32 %v3650, %v3654
      %vm3656 = vweird.f32 %v3402
      %vm3657 = vweird.f32 %v3650
      %vm3658 = vmor %vm3656, %vm3657
      %v3659 = vsel %vm3658, %v3650, %v3655
      %v3660 = vrsqrt.pop %v3403
      %v3661 = vmul.f32 %v3660, %v3403
      %v3662 = vmul.f32 %v3661, %v3660
      %v3663 = vmul.f32 0.5, %v3662
      %v3664 = vsub.f32 1.5, %v3663
      %v3665 = vmul.f32 %v3660, %v3664
      %vm3666 = vweird.f32 %v3403
      %vm3667 = vweird.f32 %v3660
      %vm3668 = vmor %vm3666, %vm3667
      %v3669 = vsel %vm3668, %v3660, %v3665
      %v3670 = vrsqrt.pop %v3404
      %v3671 = vmul.f32 %v3670, %v3404
      %v3672 = vmul.f32 %v3671, %v3670
      %v3673 = vmul.f32 0.5, %v3672
      %v3674 = vsub.f32 1.5, %v3673
      %v3675 = vmul.f32 %v3670, %v3674
      %vm3676 = vweird.f32 %v3404
      %vm3677 = vweird.f32 %v3670
      %vm3678 = vmor %vm3676, %vm3677
      %v3679 = vsel %vm3678, %v3670, %v3675
      %v3680 = vrsqrt.pop %v3405
      %v3681 = vmul.f32 %v3680, %v3405
      %v3682 = vmul.f32 %v3681, %v3680
      %v3683 = vmul.f32 0.5, %v3682
      %v3684 = vsub.f32 1.5, %v3683
      %v3685 = vmul.f32 %v3680, %v3684
      %vm3686 = vweird.f32 %v3405
      %vm3687 = vweird.f32 %v3680
      %vm3688 = vmor %vm3686, %vm3687
      %v3689 = vsel %vm3688, %v3680, %v3685
      %v3690 = vrsqrt.pop %v3406
      %v3691 = vmul.f32 %v3690, %v3406
      %v3692 = vmul.f32 %v3691, %v3690
      %v3693 = vmul.f32 0.5, %v3692
      %v3694 = vsub.f32 1.5, %v3693
      %v3695 = vmul.f32 %v3690, %v3694
      %vm3696 = vweird.f32 %v3406
      %vm3697 = vweird.f32 %v3690
      %vm3698 = vmor %vm3696, %vm3697
      %v3699 = vsel %vm3698, %v3690, %v3695
      %v3700 = vrsqrt.pop %v3407
      %v3701 = vmul.f32 %v3700, %v3407
      %v3702 = vmul.f32 %v3701, %v3700
      %v3703 = vmul.f32 0.5, %v3702
      %v3704 = vsub.f32 1.5, %v3703
      %v3705 = vmul.f32 %v3700, %v3704
      %vm3706 = vweird.f32 %v3407
      %vm3707 = vweird.f32 %v3700
      %vm3708 = vmor %vm3706, %vm3707
      %v3709 = vsel %vm3708, %v3700, %v3705
      %v3710 = vrsqrt.pop %v3408
      %v3711 = vmul.f32 %v3710, %v3408
      %v3712 = vmul.f32 %v3711, %v3710
      %v3713 = vmul.f32 0.5, %v3712
      %v3714 = vsub.f32 1.5, %v3713
      %v3715 = vmul.f32 %v3710, %v3714
      %vm3716 = vweird.f32 %v3408
      %vm3717 = vweird.f32 %v3710
      %vm3718 = vmor %vm3716, %vm3717
      %v3719 = vsel %vm3718, %v3710, %v3715
      %v3720 = vrsqrt.pop %v3409
      %v3721 = vmul.f32 %v3720, %v3409
      %v3722 = vmul.f32 %v3721, %v3720
      %v3723 = vmul.f32 0.5, %v3722
      %v3724 = vsub.f32 1.5, %v3723
      %v3725 = vmul.f32 %v3720, %v3724
      %vm3726 = vweird.f32 %v3409
      %vm3727 = vweird.f32 %v3720
      %vm3728 = vmor %vm3726, %vm3727
      %v3729 = vsel %vm3728, %v3720, %v3725
      %v3730 = vmul.f32 %v3186, %v3419
      %v3731 = vmul.f32 %v3187, %v3429
      %v3732 = vmul.f32 %v3188, %v3439
      %v3733 = vmul.f32 %v3189, %v3449
      %v3734 = vmul.f32 %v3190, %v3459
      %v3735 = vmul.f32 %v3191, %v3469
      %v3736 = vmul.f32 %v3192, %v3479
      %v3737 = vmul.f32 %v3193, %v3489
      %v3738 = vmul.f32 %v3194, %v3499
      %v3739 = vmul.f32 %v3195, %v3509
      %v3740 = vmul.f32 %v3196, %v3519
      %v3741 = vmul.f32 %v3197, %v3529
      %v3742 = vmul.f32 %v3198, %v3539
      %v3743 = vmul.f32 %v3199, %v3549
      %v3744 = vmul.f32 %v3200, %v3559
      %v3745 = vmul.f32 %v3201, %v3569
      %v3746 = vmul.f32 %v3202, %v3579
      %v3747 = vmul.f32 %v3203, %v3589
      %v3748 = vmul.f32 %v3204, %v3599
      %v3749 = vmul.f32 %v3205, %v3609
      %v3750 = vmul.f32 %v3206, %v3619
      %v3751 = vmul.f32 %v3207, %v3629
      %v3752 = vmul.f32 %v3208, %v3639
      %v3753 = vmul.f32 %v3209, %v3649
      %v3754 = vmul.f32 %v3210, %v3659
      %v3755 = vmul.f32 %v3211, %v3669
      %v3756 = vmul.f32 %v3212, %v3679
      %v3757 = vmul.f32 %v3213, %v3689
      %v3758 = vmul.f32 %v3214, %v3699
      %v3759 = vmul.f32 %v3215, %v3709
      %v3760 = vmul.f32 %v3216, %v3719
      %v3761 = vmul.f32 %v3217, %v3729
      %v3762 = vld [vmem:[%s7 + $0x1] sm:$0x1]
      %v3763 = vperm.slane %v3762, 0
      %v3764 = vmul.f32 %v3730, %v3763
      %v3765 = vmul.f32 %v3731, %v3763
      %v3766 = vmul.f32 %v3732, %v3763
      %v3767 = vmul.f32 %v3733, %v3763
      %v3768 = vmul.f32 %v3734, %v3763
      %v3769 = vmul.f32 %v3735, %v3763
      %v3770 = vmul.f32 %v3736, %v3763
      %v3771 = vmul.f32 %v3737, %v3763
      %v3772 = vmul.f32 %v3738, %v3763
      %v3773 = vmul.f32 %v3739, %v3763
      %v3774 = vmul.f32 %v3740, %v3763
      %v3775 = vmul.f32 %v3741, %v3763
      %v3776 = vmul.f32 %v3742, %v3763
      %v3777 = vmul.f32 %v3743, %v3763
      %v3778 = vmul.f32 %v3744, %v3763
      %v3779 = vmul.f32 %v3745, %v3763
      %v3780 = vmul.f32 %v3746, %v3763
      %v3781 = vmul.f32 %v3747, %v3763
      %v3782 = vmul.f32 %v3748, %v3763
      %v3783 = vmul.f32 %v3749, %v3763
      %v3784 = vmul.f32 %v3750, %v3763
      %v3785 = vmul.f32 %v3751, %v3763
      %v3786 = vmul.f32 %v3752, %v3763
      %v3787 = vmul.f32 %v3753, %v3763
      %v3788 = vmul.f32 %v3754, %v3763
      %v3789 = vmul.f32 %v3755, %v3763
      %v3790 = vmul.f32 %v3756, %v3763
      %v3791 = vmul.f32 %v3757, %v3763
      %v3792 = vmul.f32 %v3758, %v3763
      %v3793 = vmul.f32 %v3759, %v3763
      %v3794 = vmul.f32 %v3760, %v3763
      %v3795 = vmul.f32 %v3761, %v3763
      %v3796 = vld [vmem:[%s7 + $0x2] sm:$0x1]
      %v3797 = vperm.slane %v3796, 0
      %v3798 = vadd.f32 %v3764, %v3797
      %v3799 = vadd.f32 %v3765, %v3797
      %v3800 = vadd.f32 %v3766, %v3797
      %v3801 = vadd.f32 %v3767, %v3797
      %v3802 = vadd.f32 %v3768, %v3797
      %v3803 = vadd.f32 %v3769, %v3797
      %v3804 = vadd.f32 %v3770, %v3797
      %v3805 = vadd.f32 %v3771, %v3797
      %v3806 = vadd.f32 %v3772, %v3797
      %v3807 = vadd.f32 %v3773, %v3797
      %v3808 = vadd.f32 %v3774, %v3797
      %v3809 = vadd.f32 %v3775, %v3797
      %v3810 = vadd.f32 %v3776, %v3797
      %v3811 = vadd.f32 %v3777, %v3797
      %v3812 = vadd.f32 %v3778, %v3797
      %v3813 = vadd.f32 %v3779, %v3797
      %v3814 = vadd.f32 %v3780, %v3797
      %v3815 = vadd.f32 %v3781, %v3797
      %v3816 = vadd.f32 %v3782, %v3797
      %v3817 = vadd.f32 %v3783, %v3797
      %v3818 = vadd.f32 %v3784, %v3797
      %v3819 = vadd.f32 %v3785, %v3797
      %v3820 = vadd.f32 %v3786, %v3797
      %v3821 = vadd.f32 %v3787, %v3797
      %v3822 = vadd.f32 %v3788, %v3797
      %v3823 = vadd.f32 %v3789, %v3797
      %v3824 = vadd.f32 %v3790, %v3797
      %v3825 = vadd.f32 %v3791, %v3797
      %v3826 = vadd.f32 %v3792, %v3797
      %v3827 = vadd.f32 %v3793, %v3797
      %v3828 = vadd.f32 %v3794, %v3797
      %v3829 = vadd.f32 %v3795, %v3797
      %v3830 = vmul.f32 %v3798, 0.5
      %v3831 = vmul.f32 %v3799, 0.5
      %v3832 = vmul.f32 %v3800, 0.5
      %v3833 = vmul.f32 %v3801, 0.5
      %v3834 = vmul.f32 %v3802, 0.5
      %v3835 = vmul.f32 %v3803, 0.5
      %v3836 = vmul.f32 %v3804, 0.5
      %v3837 = vmul.f32 %v3805, 0.5
      %v3838 = vmul.f32 %v3806, 0.5
      %v3839 = vmul.f32 %v3807, 0.5
      %v3840 = vmul.f32 %v3808, 0.5
      %v3841 = vmul.f32 %v3809, 0.5
      %v3842 = vmul.f32 %v3810, 0.5
      %v3843 = vmul.f32 %v3811, 0.5
      %v3844 = vmul.f32 %v3812, 0.5
      %v3845 = vmul.f32 %v3813, 0.5
      %v3846 = vmul.f32 %v3814, 0.5
      %v3847 = vmul.f32 %v3815, 0.5
      %v3848 = vmul.f32 %v3816, 0.5
      %v3849 = vmul.f32 %v3817, 0.5
      %v3850 = vmul.f32 %v3818, 0.5
      %v3851 = vmul.f32 %v3819, 0.5
      %v3852 = vmul.f32 %v3820, 0.5
      %v3853 = vmul.f32 %v3821, 0.5
      %v3854 = vmul.f32 %v3822, 0.5
      %v3855 = vmul.f32 %v3823, 0.5
      %v3856 = vmul.f32 %v3824, 0.5
      %v3857 = vmul.f32 %v3825, 0.5
      %v3858 = vmul.f32 %v3826, 0.5
      %v3859 = vmul.f32 %v3827, 0.5
      %v3860 = vmul.f32 %v3828, 0.5
      %v3861 = vmul.f32 %v3829, 0.5
      %v3862 = vmul.f32 %v3798, 0.70710677
      %v3863 = vmul.f32 %v3799, 0.70710677
      %v3864 = vmul.f32 %v3800, 0.70710677
      %v3865 = vmul.f32 %v3801, 0.70710677
      %v3866 = vmul.f32 %v3802, 0.70710677
      %v3867 = vmul.f32 %v3803, 0.70710677
      %v3868 = vmul.f32 %v3804, 0.70710677
      %v3869 = vmul.f32 %v3805, 0.70710677
      %v3870 = vmul.f32 %v3806, 0.70710677
      %v3871 = vmul.f32 %v3807, 0.70710677
      %v3872 = vmul.f32 %v3808, 0.70710677
      %v3873 = vmul.f32 %v3809, 0.70710677
      %v3874 = vmul.f32 %v3810, 0.70710677
      %v3875 = vmul.f32 %v3811, 0.70710677
      %v3876 = vmul.f32 %v3812, 0.70710677
      %v3877 = vmul.f32 %v3813, 0.70710677
      %v3878 = vmul.f32 %v3814, 0.70710677
      %v3879 = vmul.f32 %v3815, 0.70710677
      %v3880 = vmul.f32 %v3816, 0.70710677
      %v3881 = vmul.f32 %v3817, 0.70710677
      %v3882 = vmul.f32 %v3818, 0.70710677
      %v3883 = vmul.f32 %v3819, 0.70710677
      %v3884 = vmul.f32 %v3820, 0.70710677
      %v3885 = vmul.f32 %v3821, 0.70710677
      %v3886 = vmul.f32 %v3822, 0.70710677
      %v3887 = vmul.f32 %v3823, 0.70710677
      %v3888 = vmul.f32 %v3824, 0.70710677
      %v3889 = vmul.f32 %v3825, 0.70710677
      %v3890 = vmul.f32 %v3826, 0.70710677
      %v3891 = vmul.f32 %v3827, 0.70710677
      %v3892 = vmul.f32 %v3828, 0.70710677
      %v3893 = vmul.f32 %v3829, 0.70710677
      %vm3894 = vcmp.ge.f32.partialorder %v3862, 0.0
      %vm3895 = vcmp.ge.f32.partialorder %v3863, 0.0
      %vm3896 = vcmp.ge.f32.partialorder %v3864, 0.0
      %vm3897 = vcmp.ge.f32.partialorder %v3865, 0.0
      %vm3898 = vcmp.ge.f32.partialorder %v3866, 0.0
      %vm3899 = vcmp.ge.f32.partialorder %v3867, 0.0
      %vm3900 = vcmp.ge.f32.partialorder %v3868, 0.0
      %vm3901 = vcmp.ge.f32.partialorder %v3869, 0.0
      %vm3902 = vcmp.ge.f32.partialorder %v3870, 0.0
      %vm3903 = vcmp.ge.f32.partialorder %v3871, 0.0
      %vm3904 = vcmp.ge.f32.partialorder %v3872, 0.0
      %vm3905 = vcmp.ge.f32.partialorder %v3873, 0.0
      %vm3906 = vcmp.ge.f32.partialorder %v3874, 0.0
      %vm3907 = vcmp.ge.f32.partialorder %v3875, 0.0
      %vm3908 = vcmp.ge.f32.partialorder %v3876, 0.0
      %vm3909 = vcmp.ge.f32.partialorder %v3877, 0.0
      %vm3910 = vcmp.ge.f32.partialorder %v3878, 0.0
      %vm3911 = vcmp.ge.f32.partialorder %v3879, 0.0
      %vm3912 = vcmp.ge.f32.partialorder %v3880, 0.0
      %vm3913 = vcmp.ge.f32.partialorder %v3881, 0.0
      %vm3914 = vcmp.ge.f32.partialorder %v3882, 0.0
      %vm3915 = vcmp.ge.f32.partialorder %v3883, 0.0
      %vm3916 = vcmp.ge.f32.partialorder %v3884, 0.0
      %vm3917 = vcmp.ge.f32.partialorder %v3885, 0.0
      %vm3918 = vcmp.ge.f32.partialorder %v3886, 0.0
      %vm3919 = vcmp.ge.f32.partialorder %v3887, 0.0
      %vm3920 = vcmp.ge.f32.partialorder %v3888, 0.0
      %vm3921 = vcmp.ge.f32.partialorder %v3889, 0.0
      %vm3922 = vcmp.ge.f32.partialorder %v3890, 0.0
      %vm3923 = vcmp.ge.f32.partialorder %v3891, 0.0
      %vm3924 = vcmp.ge.f32.partialorder %v3892, 0.0
      %vm3925 = vcmp.ge.f32.partialorder %v3893, 0.0
      %v3926 = vsel %vm3894, 1.0, -1.0
      %v3927 = vsel %vm3895, 1.0, -1.0
      %v3928 = vsel %vm3896, 1.0, -1.0
      %v3929 = vsel %vm3897, 1.0, -1.0
      %v3930 = vsel %vm3898, 1.0, -1.0
      %v3931 = vsel %vm3899, 1.0, -1.0
      %v3932 = vsel %vm3900, 1.0, -1.0
      %v3933 = vsel %vm3901, 1.0, -1.0
      %v3934 = vsel %vm3902, 1.0, -1.0
      %v3935 = vsel %vm3903, 1.0, -1.0
      %v3936 = vsel %vm3904, 1.0, -1.0
      %v3937 = vsel %vm3905, 1.0, -1.0
      %v3938 = vsel %vm3906, 1.0, -1.0
      %v3939 = vsel %vm3907, 1.0, -1.0
      %v3940 = vsel %vm3908, 1.0, -1.0
      %v3941 = vsel %vm3909, 1.0, -1.0
      %v3942 = vsel %vm3910, 1.0, -1.0
      %v3943 = vsel %vm3911, 1.0, -1.0
      %v3944 = vsel %vm3912, 1.0, -1.0
      %v3945 = vsel %vm3913, 1.0, -1.0
      %v3946 = vsel %vm3914, 1.0, -1.0
      %v3947 = vsel %vm3915, 1.0, -1.0
      %v3948 = vsel %vm3916, 1.0, -1.0
      %v3949 = vsel %vm3917, 1.0, -1.0
      %v3950 = vsel %vm3918, 1.0, -1.0
      %v3951 = vsel %vm3919, 1.0, -1.0
      %v3952 = vsel %vm3920, 1.0, -1.0
      %v3953 = vsel %vm3921, 1.0, -1.0
      %v3954 = vsel %vm3922, 1.0, -1.0
      %v3955 = vsel %vm3923, 1.0, -1.0
      %v3956 = vsel %vm3924, 1.0, -1.0
      %v3957 = vsel %vm3925, 1.0, -1.0
      %v3958 = vand.u32 2147483647, %v3862
      %v3959 = vand.u32 2147483647, %v3863
      %v3960 = vand.u32 2147483647, %v3864
      %v3961 = vand.u32 2147483647, %v3865
      %v3962 = vand.u32 2147483647, %v3866
      %v3963 = vand.u32 2147483647, %v3867
      %v3964 = vand.u32 2147483647, %v3868
      %v3965 = vand.u32 2147483647, %v3869
      %v3966 = vand.u32 2147483647, %v3870
      %v3967 = vand.u32 2147483647, %v3871
      %v3968 = vand.u32 2147483647, %v3872
      %v3969 = vand.u32 2147483647, %v3873
      %v3970 = vand.u32 2147483647, %v3874
      %v3971 = vand.u32 2147483647, %v3875
      %v3972 = vand.u32 2147483647, %v3876
      %v3973 = vand.u32 2147483647, %v3877
      %v3974 = vand.u32 2147483647, %v3878
      %v3975 = vand.u32 2147483647, %v3879
      %v3976 = vand.u32 2147483647, %v3880
      %v3977 = vand.u32 2147483647, %v3881
      %v3978 = vand.u32 2147483647, %v3882
      %v3979 = vand.u32 2147483647, %v3883
      %v3980 = vand.u32 2147483647, %v3884
      %v3981 = vand.u32 2147483647, %v3885
      %v3982 = vand.u32 2147483647, %v3886
      %v3983 = vand.u32 2147483647, %v3887
      %v3984 = vand.u32 2147483647, %v3888
      %v3985 = vand.u32 2147483647, %v3889
      %v3986 = vand.u32 2147483647, %v3890
      %v3987 = vand.u32 2147483647, %v3891
      %v3988 = vand.u32 2147483647, %v3892
      %v3989 = vand.u32 2147483647, %v3893
      %v3990 = vmul.f32 %v3958, 0.3275911
      %v3991 = vmul.f32 %v3959, 0.3275911
      %v3992 = vmul.f32 %v3960, 0.3275911
      %v3993 = vmul.f32 %v3961, 0.3275911
      %v3994 = vmul.f32 %v3962, 0.3275911
      %v3995 = vmul.f32 %v3963, 0.3275911
      %v3996 = vmul.f32 %v3964, 0.3275911
      %v3997 = vmul.f32 %v3965, 0.3275911
      %v3998 = vmul.f32 %v3966, 0.3275911
      %v3999 = vmul.f32 %v3967, 0.3275911
      %v4000 = vmul.f32 %v3968, 0.3275911
      %v4001 = vmul.f32 %v3969, 0.3275911
      %v4002 = vmul.f32 %v3970, 0.3275911
      %v4003 = vmul.f32 %v3971, 0.3275911
      %v4004 = vmul.f32 %v3972, 0.3275911
      %v4005 = vmul.f32 %v3973, 0.3275911
      %v4006 = vmul.f32 %v3974, 0.3275911
      %v4007 = vmul.f32 %v3975, 0.3275911
      %v4008 = vmul.f32 %v3976, 0.3275911
      %v4009 = vmul.f32 %v3977, 0.3275911
      %v4010 = vmul.f32 %v3978, 0.3275911
      %v4011 = vmul.f32 %v3979, 0.3275911
      %v4012 = vmul.f32 %v3980, 0.3275911
      %v4013 = vmul.f32 %v3981, 0.3275911
      %v4014 = vmul.f32 %v3982, 0.3275911
      %v4015 = vmul.f32 %v3983, 0.3275911
      %v4016 = vmul.f32 %v3984, 0.3275911
      %v4017 = vmul.f32 %v3985, 0.3275911
      %v4018 = vmul.f32 %v3986, 0.3275911
      %v4019 = vmul.f32 %v3987, 0.3275911
      %v4020 = vmul.f32 %v3988, 0.3275911
      %v4021 = vmul.f32 %v3989, 0.3275911
      %v4022 = vadd.f32 %v3990, 1.0
      %v4023 = vadd.f32 %v3991, 1.0
      %v4024 = vadd.f32 %v3992, 1.0
      %v4025 = vadd.f32 %v3993, 1.0
      %v4026 = vadd.f32 %v3994, 1.0
      %v4027 = vadd.f32 %v3995, 1.0
      %v4028 = vadd.f32 %v3996, 1.0
      %v4029 = vadd.f32 %v3997, 1.0
      %v4030 = vadd.f32 %v3998, 1.0
      %v4031 = vadd.f32 %v3999, 1.0
      %v4032 = vadd.f32 %v4000, 1.0
      %v4033 = vadd.f32 %v4001, 1.0
      %v4034 = vadd.f32 %v4002, 1.0
      %v4035 = vadd.f32 %v4003, 1.0
      %v4036 = vadd.f32 %v4004, 1.0
      %v4037 = vadd.f32 %v4005, 1.0
      %v4038 = vadd.f32 %v4006, 1.0
      %v4039 = vadd.f32 %v4007, 1.0
      %v4040 = vadd.f32 %v4008, 1.0
      %v4041 = vadd.f32 %v4009, 1.0
      %v4042 = vadd.f32 %v4010, 1.0
      %v4043 = vadd.f32 %v4011, 1.0
      %v4044 = vadd.f32 %v4012, 1.0
      %v4045 = vadd.f32 %v4013, 1.0
      %v4046 = vadd.f32 %v4014, 1.0
      %v4047 = vadd.f32 %v4015, 1.0
      %v4048 = vadd.f32 %v4016, 1.0
      %v4049 = vadd.f32 %v4017, 1.0
      %v4050 = vadd.f32 %v4018, 1.0
      %v4051 = vadd.f32 %v4019, 1.0
      %v4052 = vadd.f32 %v4020, 1.0
      %v4053 = vadd.f32 %v4021, 1.0
      %v4054 = vrcp.pop %v4022
      %v4055 = vmul.f32 %v4022, %v4054
      %v4056 = vsub.f32 1.0, %v4055
      %v4057 = vmul.f32 %v4054, %v4056
      %v4058 = vadd.f32 %v4054, %v4057
      %vm4059 = vweird.f32 %v4022
      %vm4060 = vweird.f32 %v4054
      %vm4061 = vmor %vm4059, %vm4060
      %v4062 = vsel %vm4061, %v4054, %v4058
      %v4063 = vand.u32 2147483647, %v4022
      %vm4064 = vcmp.eq.f32.partialorder %v4063, 8.507059e+37
      %v4065 = vand.u32 %v4022, 2147483648
      %v4066 = vor.u32 1.1754944e-38, %v4065
      %v4067 = vsel %vm4064, %v4066, %v4062
      %v4068 = vmul.f32 1.0, %v4067
      %v4069 = vrcp.pop %v4023
      %v4070 = vmul.f32 %v4023, %v4069
      %v4071 = vsub.f32 1.0, %v4070
      %v4072 = vmul.f32 %v4069, %v4071
      %v4073 = vadd.f32 %v4069, %v4072
      %vm4074 = vweird.f32 %v4023
      %vm4075 = vweird.f32 %v4069
      %vm4076 = vmor %vm4074, %vm4075
      %v4077 = vsel %vm4076, %v4069, %v4073
      %v4078 = vand.u32 2147483647, %v4023
      %vm4079 = vcmp.eq.f32.partialorder %v4078, 8.507059e+37
      %v4080 = vand.u32 %v4023, 2147483648
      %v4081 = vor.u32 1.1754944e-38, %v4080
      %v4082 = vsel %vm4079, %v4081, %v4077
      %v4083 = vmul.f32 1.0, %v4082
      %v4084 = vrcp.pop %v4024
      %v4085 = vmul.f32 %v4024, %v4084
      %v4086 = vsub.f32 1.0, %v4085
      %v4087 = vmul.f32 %v4084, %v4086
      %v4088 = vadd.f32 %v4084, %v4087
      %vm4089 = vweird.f32 %v4024
      %vm4090 = vweird.f32 %v4084
      %vm4091 = vmor %vm4089, %vm4090
      %v4092 = vsel %vm4091, %v4084, %v4088
      %v4093 = vand.u32 2147483647, %v4024
      %vm4094 = vcmp.eq.f32.partialorder %v4093, 8.507059e+37
      %v4095 = vand.u32 %v4024, 2147483648
      %v4096 = vor.u32 1.1754944e-38, %v4095
      %v4097 = vsel %vm4094, %v4096, %v4092
      %v4098 = vmul.f32 1.0, %v4097
      %v4099 = vrcp.pop %v4025
      %v4100 = vmul.f32 %v4025, %v4099
      %v4101 = vsub.f32 1.0, %v4100
      %v4102 = vmul.f32 %v4099, %v4101
      %v4103 = vadd.f32 %v4099, %v4102
      %vm4104 = vweird.f32 %v4025
      %vm4105 = vweird.f32 %v4099
      %vm4106 = vmor %vm4104, %vm4105
      %v4107 = vsel %vm4106, %v4099, %v4103
      %v4108 = vand.u32 2147483647, %v4025
      %vm4109 = vcmp.eq.f32.partialorder %v4108, 8.507059e+37
      %v4110 = vand.u32 %v4025, 2147483648
      %v4111 = vor.u32 1.1754944e-38, %v4110
      %v4112 = vsel %vm4109, %v4111, %v4107
      %v4113 = vmul.f32 1.0, %v4112
      %v4114 = vrcp.pop %v4026
      %v4115 = vmul.f32 %v4026, %v4114
      %v4116 = vsub.f32 1.0, %v4115
      %v4117 = vmul.f32 %v4114, %v4116
      %v4118 = vadd.f32 %v4114, %v4117
      %vm4119 = vweird.f32 %v4026
      %vm4120 = vweird.f32 %v4114
      %vm4121 = vmor %vm4119, %vm4120
      %v4122 = vsel %vm4121, %v4114, %v4118
      %v4123 = vand.u32 2147483647, %v4026
      %vm4124 = vcmp.eq.f32.partialorder %v4123, 8.507059e+37
      %v4125 = vand.u32 %v4026, 2147483648
      %v4126 = vor.u32 1.1754944e-38, %v4125
      %v4127 = vsel %vm4124, %v4126, %v4122
      %v4128 = vmul.f32 1.0, %v4127
      %v4129 = vrcp.pop %v4027
      %v4130 = vmul.f32 %v4027, %v4129
      %v4131 = vsub.f32 1.0, %v4130
      %v4132 = vmul.f32 %v4129, %v4131
      %v4133 = vadd.f32 %v4129, %v4132
      %vm4134 = vweird.f32 %v4027
      %vm4135 = vweird.f32 %v4129
      %vm4136 = vmor %vm4134, %vm4135
      %v4137 = vsel %vm4136, %v4129, %v4133
      %v4138 = vand.u32 2147483647, %v4027
      %vm4139 = vcmp.eq.f32.partialorder %v4138, 8.507059e+37
      %v4140 = vand.u32 %v4027, 2147483648
      %v4141 = vor.u32 1.1754944e-38, %v4140
      %v4142 = vsel %vm4139, %v4141, %v4137
      %v4143 = vmul.f32 1.0, %v4142
      %v4144 = vrcp.pop %v4028
      %v4145 = vmul.f32 %v4028, %v4144
      %v4146 = vsub.f32 1.0, %v4145
      %v4147 = vmul.f32 %v4144, %v4146
      %v4148 = vadd.f32 %v4144, %v4147
      %vm4149 = vweird.f32 %v4028
      %vm4150 = vweird.f32 %v4144
      %vm4151 = vmor %vm4149, %vm4150
      %v4152 = vsel %vm4151, %v4144, %v4148
      %v4153 = vand.u32 2147483647, %v4028
      %vm4154 = vcmp.eq.f32.partialorder %v4153, 8.507059e+37
      %v4155 = vand.u32 %v4028, 2147483648
      %v4156 = vor.u32 1.1754944e-38, %v4155
      %v4157 = vsel %vm4154, %v4156, %v4152
      %v4158 = vmul.f32 1.0, %v4157
      %v4159 = vrcp.pop %v4029
      %v4160 = vmul.f32 %v4029, %v4159
      %v4161 = vsub.f32 1.0, %v4160
      %v4162 = vmul.f32 %v4159, %v4161
      %v4163 = vadd.f32 %v4159, %v4162
      %vm4164 = vweird.f32 %v4029
      %vm4165 = vweird.f32 %v4159
      %vm4166 = vmor %vm4164, %vm4165
      %v4167 = vsel %vm4166, %v4159, %v4163
      %v4168 = vand.u32 2147483647, %v4029
      %vm4169 = vcmp.eq.f32.partialorder %v4168, 8.507059e+37
      %v4170 = vand.u32 %v4029, 2147483648
      %v4171 = vor.u32 1.1754944e-38, %v4170
      %v4172 = vsel %vm4169, %v4171, %v4167
      %v4173 = vmul.f32 1.0, %v4172
      %v4174 = vrcp.pop %v4030
      %v4175 = vmul.f32 %v4030, %v4174
      %v4176 = vsub.f32 1.0, %v4175
      %v4177 = vmul.f32 %v4174, %v4176
      %v4178 = vadd.f32 %v4174, %v4177
      %vm4179 = vweird.f32 %v4030
      %vm4180 = vweird.f32 %v4174
      %vm4181 = vmor %vm4179, %vm4180
      %v4182 = vsel %vm4181, %v4174, %v4178
      %v4183 = vand.u32 2147483647, %v4030
      %vm4184 = vcmp.eq.f32.partialorder %v4183, 8.507059e+37
      %v4185 = vand.u32 %v4030, 2147483648
      %v4186 = vor.u32 1.1754944e-38, %v4185
      %v4187 = vsel %vm4184, %v4186, %v4182
      %v4188 = vmul.f32 1.0, %v4187
      %v4189 = vrcp.pop %v4031
      %v4190 = vmul.f32 %v4031, %v4189
      %v4191 = vsub.f32 1.0, %v4190
      %v4192 = vmul.f32 %v4189, %v4191
      %v4193 = vadd.f32 %v4189, %v4192
      %vm4194 = vweird.f32 %v4031
      %vm4195 = vweird.f32 %v4189
      %vm4196 = vmor %vm4194, %vm4195
      %v4197 = vsel %vm4196, %v4189, %v4193
      %v4198 = vand.u32 2147483647, %v4031
      %vm4199 = vcmp.eq.f32.partialorder %v4198, 8.507059e+37
      %v4200 = vand.u32 %v4031, 2147483648
      %v4201 = vor.u32 1.1754944e-38, %v4200
      %v4202 = vsel %vm4199, %v4201, %v4197
      %v4203 = vmul.f32 1.0, %v4202
      %v4204 = vrcp.pop %v4032
      %v4205 = vmul.f32 %v4032, %v4204
      %v4206 = vsub.f32 1.0, %v4205
      %v4207 = vmul.f32 %v4204, %v4206
      %v4208 = vadd.f32 %v4204, %v4207
      %vm4209 = vweird.f32 %v4032
      %vm4210 = vweird.f32 %v4204
      %vm4211 = vmor %vm4209, %vm4210
      %v4212 = vsel %vm4211, %v4204, %v4208
      %v4213 = vand.u32 2147483647, %v4032
      %vm4214 = vcmp.eq.f32.partialorder %v4213, 8.507059e+37
      %v4215 = vand.u32 %v4032, 2147483648
      %v4216 = vor.u32 1.1754944e-38, %v4215
      %v4217 = vsel %vm4214, %v4216, %v4212
      %v4218 = vmul.f32 1.0, %v4217
      %v4219 = vrcp.pop %v4033
      %v4220 = vmul.f32 %v4033, %v4219
      %v4221 = vsub.f32 1.0, %v4220
      %v4222 = vmul.f32 %v4219, %v4221
      %v4223 = vadd.f32 %v4219, %v4222
      %vm4224 = vweird.f32 %v4033
      %vm4225 = vweird.f32 %v4219
      %vm4226 = vmor %vm4224, %vm4225
      %v4227 = vsel %vm4226, %v4219, %v4223
      %v4228 = vand.u32 2147483647, %v4033
      %vm4229 = vcmp.eq.f32.partialorder %v4228, 8.507059e+37
      %v4230 = vand.u32 %v4033, 2147483648
      %v4231 = vor.u32 1.1754944e-38, %v4230
      %v4232 = vsel %vm4229, %v4231, %v4227
      %v4233 = vmul.f32 1.0, %v4232
      %v4234 = vrcp.pop %v4034
      %v4235 = vmul.f32 %v4034, %v4234
      %v4236 = vsub.f32 1.0, %v4235
      %v4237 = vmul.f32 %v4234, %v4236
      %v4238 = vadd.f32 %v4234, %v4237
      %vm4239 = vweird.f32 %v4034
      %vm4240 = vweird.f32 %v4234
      %vm4241 = vmor %vm4239, %vm4240
      %v4242 = vsel %vm4241, %v4234, %v4238
      %v4243 = vand.u32 2147483647, %v4034
      %vm4244 = vcmp.eq.f32.partialorder %v4243, 8.507059e+37
      %v4245 = vand.u32 %v4034, 2147483648
      %v4246 = vor.u32 1.1754944e-38, %v4245
      %v4247 = vsel %vm4244, %v4246, %v4242
      %v4248 = vmul.f32 1.0, %v4247
      %v4249 = vrcp.pop %v4035
      %v4250 = vmul.f32 %v4035, %v4249
      %v4251 = vsub.f32 1.0, %v4250
      %v4252 = vmul.f32 %v4249, %v4251
      %v4253 = vadd.f32 %v4249, %v4252
      %vm4254 = vweird.f32 %v4035
      %vm4255 = vweird.f32 %v4249
      %vm4256 = vmor %vm4254, %vm4255
      %v4257 = vsel %vm4256, %v4249, %v4253
      %v4258 = vand.u32 2147483647, %v4035
      %vm4259 = vcmp.eq.f32.partialorder %v4258, 8.507059e+37
      %v4260 = vand.u32 %v4035, 2147483648
      %v4261 = vor.u32 1.1754944e-38, %v4260
      %v4262 = vsel %vm4259, %v4261, %v4257
      %v4263 = vmul.f32 1.0, %v4262
      %v4264 = vrcp.pop %v4036
      %v4265 = vmul.f32 %v4036, %v4264
      %v4266 = vsub.f32 1.0, %v4265
      %v4267 = vmul.f32 %v4264, %v4266
      %v4268 = vadd.f32 %v4264, %v4267
      %vm4269 = vweird.f32 %v4036
      %vm4270 = vweird.f32 %v4264
      %vm4271 = vmor %vm4269, %vm4270
      %v4272 = vsel %vm4271, %v4264, %v4268
      %v4273 = vand.u32 2147483647, %v4036
      %vm4274 = vcmp.eq.f32.partialorder %v4273, 8.507059e+37
      %v4275 = vand.u32 %v4036, 2147483648
      %v4276 = vor.u32 1.1754944e-38, %v4275
      %v4277 = vsel %vm4274, %v4276, %v4272
      %v4278 = vmul.f32 1.0, %v4277
      %v4279 = vrcp.pop %v4037
      %v4280 = vmul.f32 %v4037, %v4279
      %v4281 = vsub.f32 1.0, %v4280
      %v4282 = vmul.f32 %v4279, %v4281
      %v4283 = vadd.f32 %v4279, %v4282
      %vm4284 = vweird.f32 %v4037
      %vm4285 = vweird.f32 %v4279
      %vm4286 = vmor %vm4284, %vm4285
      %v4287 = vsel %vm4286, %v4279, %v4283
      %v4288 = vand.u32 2147483647, %v4037
      %vm4289 = vcmp.eq.f32.partialorder %v4288, 8.507059e+37
      %v4290 = vand.u32 %v4037, 2147483648
      %v4291 = vor.u32 1.1754944e-38, %v4290
      %v4292 = vsel %vm4289, %v4291, %v4287
      %v4293 = vmul.f32 1.0, %v4292
      %v4294 = vrcp.pop %v4038
      %v4295 = vmul.f32 %v4038, %v4294
      %v4296 = vsub.f32 1.0, %v4295
      %v4297 = vmul.f32 %v4294, %v4296
      %v4298 = vadd.f32 %v4294, %v4297
      %vm4299 = vweird.f32 %v4038
      %vm4300 = vweird.f32 %v4294
      %vm4301 = vmor %vm4299, %vm4300
      %v4302 = vsel %vm4301, %v4294, %v4298
      %v4303 = vand.u32 2147483647, %v4038
      %vm4304 = vcmp.eq.f32.partialorder %v4303, 8.507059e+37
      %v4305 = vand.u32 %v4038, 2147483648
      %v4306 = vor.u32 1.1754944e-38, %v4305
      %v4307 = vsel %vm4304, %v4306, %v4302
      %v4308 = vmul.f32 1.0, %v4307
      %v4309 = vrcp.pop %v4039
      %v4310 = vmul.f32 %v4039, %v4309
      %v4311 = vsub.f32 1.0, %v4310
      %v4312 = vmul.f32 %v4309, %v4311
      %v4313 = vadd.f32 %v4309, %v4312
      %vm4314 = vweird.f32 %v4039
      %vm4315 = vweird.f32 %v4309
      %vm4316 = vmor %vm4314, %vm4315
      %v4317 = vsel %vm4316, %v4309, %v4313
      %v4318 = vand.u32 2147483647, %v4039
      %vm4319 = vcmp.eq.f32.partialorder %v4318, 8.507059e+37
      %v4320 = vand.u32 %v4039, 2147483648
      %v4321 = vor.u32 1.1754944e-38, %v4320
      %v4322 = vsel %vm4319, %v4321, %v4317
      %v4323 = vmul.f32 1.0, %v4322
      %v4324 = vrcp.pop %v4040
      %v4325 = vmul.f32 %v4040, %v4324
      %v4326 = vsub.f32 1.0, %v4325
      %v4327 = vmul.f32 %v4324, %v4326
      %v4328 = vadd.f32 %v4324, %v4327
      %vm4329 = vweird.f32 %v4040
      %vm4330 = vweird.f32 %v4324
      %vm4331 = vmor %vm4329, %vm4330
      %v4332 = vsel %vm4331, %v4324, %v4328
      %v4333 = vand.u32 2147483647, %v4040
      %vm4334 = vcmp.eq.f32.partialorder %v4333, 8.507059e+37
      %v4335 = vand.u32 %v4040, 2147483648
      %v4336 = vor.u32 1.1754944e-38, %v4335
      %v4337 = vsel %vm4334, %v4336, %v4332
      %v4338 = vmul.f32 1.0, %v4337
      %v4339 = vrcp.pop %v4041
      %v4340 = vmul.f32 %v4041, %v4339
      %v4341 = vsub.f32 1.0, %v4340
      %v4342 = vmul.f32 %v4339, %v4341
      %v4343 = vadd.f32 %v4339, %v4342
      %vm4344 = vweird.f32 %v4041
      %vm4345 = vweird.f32 %v4339
      %vm4346 = vmor %vm4344, %vm4345
      %v4347 = vsel %vm4346, %v4339, %v4343
      %v4348 = vand.u32 2147483647, %v4041
      %vm4349 = vcmp.eq.f32.partialorder %v4348, 8.507059e+37
      %v4350 = vand.u32 %v4041, 2147483648
      %v4351 = vor.u32 1.1754944e-38, %v4350
      %v4352 = vsel %vm4349, %v4351, %v4347
      %v4353 = vmul.f32 1.0, %v4352
      %v4354 = vrcp.pop %v4042
      %v4355 = vmul.f32 %v4042, %v4354
      %v4356 = vsub.f32 1.0, %v4355
      %v4357 = vmul.f32 %v4354, %v4356
      %v4358 = vadd.f32 %v4354, %v4357
      %vm4359 = vweird.f32 %v4042
      %vm4360 = vweird.f32 %v4354
      %vm4361 = vmor %vm4359, %vm4360
      %v4362 = vsel %vm4361, %v4354, %v4358
      %v4363 = vand.u32 2147483647, %v4042
      %vm4364 = vcmp.eq.f32.partialorder %v4363, 8.507059e+37
      %v4365 = vand.u32 %v4042, 2147483648
      %v4366 = vor.u32 1.1754944e-38, %v4365
      %v4367 = vsel %vm4364, %v4366, %v4362
      %v4368 = vmul.f32 1.0, %v4367
      %v4369 = vrcp.pop %v4043
      %v4370 = vmul.f32 %v4043, %v4369
      %v4371 = vsub.f32 1.0, %v4370
      %v4372 = vmul.f32 %v4369, %v4371
      %v4373 = vadd.f32 %v4369, %v4372
      %vm4374 = vweird.f32 %v4043
      %vm4375 = vweird.f32 %v4369
      %vm4376 = vmor %vm4374, %vm4375
      %v4377 = vsel %vm4376, %v4369, %v4373
      %v4378 = vand.u32 2147483647, %v4043
      %vm4379 = vcmp.eq.f32.partialorder %v4378, 8.507059e+37
      %v4380 = vand.u32 %v4043, 2147483648
      %v4381 = vor.u32 1.1754944e-38, %v4380
      %v4382 = vsel %vm4379, %v4381, %v4377
      %v4383 = vmul.f32 1.0, %v4382
      %v4384 = vrcp.pop %v4044
      %v4385 = vmul.f32 %v4044, %v4384
      %v4386 = vsub.f32 1.0, %v4385
      %v4387 = vmul.f32 %v4384, %v4386
      %v4388 = vadd.f32 %v4384, %v4387
      %vm4389 = vweird.f32 %v4044
      %vm4390 = vweird.f32 %v4384
      %vm4391 = vmor %vm4389, %vm4390
      %v4392 = vsel %vm4391, %v4384, %v4388
      %v4393 = vand.u32 2147483647, %v4044
      %vm4394 = vcmp.eq.f32.partialorder %v4393, 8.507059e+37
      %v4395 = vand.u32 %v4044, 2147483648
      %v4396 = vor.u32 1.1754944e-38, %v4395
      %v4397 = vsel %vm4394, %v4396, %v4392
      %v4398 = vmul.f32 1.0, %v4397
      %v4399 = vrcp.pop %v4045
      %v4400 = vmul.f32 %v4045, %v4399
      %v4401 = vsub.f32 1.0, %v4400
      %v4402 = vmul.f32 %v4399, %v4401
      %v4403 = vadd.f32 %v4399, %v4402
      %vm4404 = vweird.f32 %v4045
      %vm4405 = vweird.f32 %v4399
      %vm4406 = vmor %vm4404, %vm4405
      %v4407 = vsel %vm4406, %v4399, %v4403
      %v4408 = vand.u32 2147483647, %v4045
      %vm4409 = vcmp.eq.f32.partialorder %v4408, 8.507059e+37
      %v4410 = vand.u32 %v4045, 2147483648
      %v4411 = vor.u32 1.1754944e-38, %v4410
      %v4412 = vsel %vm4409, %v4411, %v4407
      %v4413 = vmul.f32 1.0, %v4412
      %v4414 = vrcp.pop %v4046
      %v4415 = vmul.f32 %v4046, %v4414
      %v4416 = vsub.f32 1.0, %v4415
      %v4417 = vmul.f32 %v4414, %v4416
      %v4418 = vadd.f32 %v4414, %v4417
      %vm4419 = vweird.f32 %v4046
      %vm4420 = vweird.f32 %v4414
      %vm4421 = vmor %vm4419, %vm4420
      %v4422 = vsel %vm4421, %v4414, %v4418
      %v4423 = vand.u32 2147483647, %v4046
      %vm4424 = vcmp.eq.f32.partialorder %v4423, 8.507059e+37
      %v4425 = vand.u32 %v4046, 2147483648
      %v4426 = vor.u32 1.1754944e-38, %v4425
      %v4427 = vsel %vm4424, %v4426, %v4422
      %v4428 = vmul.f32 1.0, %v4427
      %v4429 = vrcp.pop %v4047
      %v4430 = vmul.f32 %v4047, %v4429
      %v4431 = vsub.f32 1.0, %v4430
      %v4432 = vmul.f32 %v4429, %v4431
      %v4433 = vadd.f32 %v4429, %v4432
      %vm4434 = vweird.f32 %v4047
      %vm4435 = vweird.f32 %v4429
      %vm4436 = vmor %vm4434, %vm4435
      %v4437 = vsel %vm4436, %v4429, %v4433
      %v4438 = vand.u32 2147483647, %v4047
      %vm4439 = vcmp.eq.f32.partialorder %v4438, 8.507059e+37
      %v4440 = vand.u32 %v4047, 2147483648
      %v4441 = vor.u32 1.1754944e-38, %v4440
      %v4442 = vsel %vm4439, %v4441, %v4437
      %v4443 = vmul.f32 1.0, %v4442
      %v4444 = vrcp.pop %v4048
      %v4445 = vmul.f32 %v4048, %v4444
      %v4446 = vsub.f32 1.0, %v4445
      %v4447 = vmul.f32 %v4444, %v4446
      %v4448 = vadd.f32 %v4444, %v4447
      %vm4449 = vweird.f32 %v4048
      %vm4450 = vweird.f32 %v4444
      %vm4451 = vmor %vm4449, %vm4450
      %v4452 = vsel %vm4451, %v4444, %v4448
      %v4453 = vand.u32 2147483647, %v4048
      %vm4454 = vcmp.eq.f32.partialorder %v4453, 8.507059e+37
      %v4455 = vand.u32 %v4048, 2147483648
      %v4456 = vor.u32 1.1754944e-38, %v4455
      %v4457 = vsel %vm4454, %v4456, %v4452
      %v4458 = vmul.f32 1.0, %v4457
      %v4459 = vrcp.pop %v4049
      %v4460 = vmul.f32 %v4049, %v4459
      %v4461 = vsub.f32 1.0, %v4460
      %v4462 = vmul.f32 %v4459, %v4461
      %v4463 = vadd.f32 %v4459, %v4462
      %vm4464 = vweird.f32 %v4049
      %vm4465 = vweird.f32 %v4459
      %vm4466 = vmor %vm4464, %vm4465
      %v4467 = vsel %vm4466, %v4459, %v4463
      %v4468 = vand.u32 2147483647, %v4049
      %vm4469 = vcmp.eq.f32.partialorder %v4468, 8.507059e+37
      %v4470 = vand.u32 %v4049, 2147483648
      %v4471 = vor.u32 1.1754944e-38, %v4470
      %v4472 = vsel %vm4469, %v4471, %v4467
      %v4473 = vmul.f32 1.0, %v4472
      %v4474 = vrcp.pop %v4050
      %v4475 = vmul.f32 %v4050, %v4474
      %v4476 = vsub.f32 1.0, %v4475
      %v4477 = vmul.f32 %v4474, %v4476
      %v4478 = vadd.f32 %v4474, %v4477
      %vm4479 = vweird.f32 %v4050
      %vm4480 = vweird.f32 %v4474
      %vm4481 = vmor %vm4479, %vm4480
      %v4482 = vsel %vm4481, %v4474, %v4478
      %v4483 = vand.u32 2147483647, %v4050
      %vm4484 = vcmp.eq.f32.partialorder %v4483, 8.507059e+37
      %v4485 = vand.u32 %v4050, 2147483648
      %v4486 = vor.u32 1.1754944e-38, %v4485
      %v4487 = vsel %vm4484, %v4486, %v4482
      %v4488 = vmul.f32 1.0, %v4487
      %v4489 = vrcp.pop %v4051
      %v4490 = vmul.f32 %v4051, %v4489
      %v4491 = vsub.f32 1.0, %v4490
      %v4492 = vmul.f32 %v4489, %v4491
      %v4493 = vadd.f32 %v4489, %v4492
      %vm4494 = vweird.f32 %v4051
      %vm4495 = vweird.f32 %v4489
      %vm4496 = vmor %vm4494, %vm4495
      %v4497 = vsel %vm4496, %v4489, %v4493
      %v4498 = vand.u32 2147483647, %v4051
      %vm4499 = vcmp.eq.f32.partialorder %v4498, 8.507059e+37
      %v4500 = vand.u32 %v4051, 2147483648
      %v4501 = vor.u32 1.1754944e-38, %v4500
      %v4502 = vsel %vm4499, %v4501, %v4497
      %v4503 = vmul.f32 1.0, %v4502
      %v4504 = vrcp.pop %v4052
      %v4505 = vmul.f32 %v4052, %v4504
      %v4506 = vsub.f32 1.0, %v4505
      %v4507 = vmul.f32 %v4504, %v4506
      %v4508 = vadd.f32 %v4504, %v4507
      %vm4509 = vweird.f32 %v4052
      %vm4510 = vweird.f32 %v4504
      %vm4511 = vmor %vm4509, %vm4510
      %v4512 = vsel %vm4511, %v4504, %v4508
      %v4513 = vand.u32 2147483647, %v4052
      %vm4514 = vcmp.eq.f32.partialorder %v4513, 8.507059e+37
      %v4515 = vand.u32 %v4052, 2147483648
      %v4516 = vor.u32 1.1754944e-38, %v4515
      %v4517 = vsel %vm4514, %v4516, %v4512
      %v4518 = vmul.f32 1.0, %v4517
      %v4519 = vrcp.pop %v4053
      %v4520 = vmul.f32 %v4053, %v4519
      %v4521 = vsub.f32 1.0, %v4520
      %v4522 = vmul.f32 %v4519, %v4521
      %v4523 = vadd.f32 %v4519, %v4522
      %vm4524 = vweird.f32 %v4053
      %vm4525 = vweird.f32 %v4519
      %vm4526 = vmor %vm4524, %vm4525
      %v4527 = vsel %vm4526, %v4519, %v4523
      %v4528 = vand.u32 2147483647, %v4053
      %vm4529 = vcmp.eq.f32.partialorder %v4528, 8.507059e+37
      %v4530 = vand.u32 %v4053, 2147483648
      %v4531 = vor.u32 1.1754944e-38, %v4530
      %v4532 = vsel %vm4529, %v4531, %v4527
      %v4533 = vmul.f32 1.0, %v4532
      %v4534 = vmul.f32 %v4068, 1.0614054
      %v4535 = vmul.f32 %v4083, 1.0614054
      %v4536 = vmul.f32 %v4098, 1.0614054
      %v4537 = vmul.f32 %v4113, 1.0614054
      %v4538 = vmul.f32 %v4128, 1.0614054
      %v4539 = vmul.f32 %v4143, 1.0614054
      %v4540 = vmul.f32 %v4158, 1.0614054
      %v4541 = vmul.f32 %v4173, 1.0614054
      %v4542 = vmul.f32 %v4188, 1.0614054
      %v4543 = vmul.f32 %v4203, 1.0614054
      %v4544 = vmul.f32 %v4218, 1.0614054
      %v4545 = vmul.f32 %v4233, 1.0614054
      %v4546 = vmul.f32 %v4248, 1.0614054
      %v4547 = vmul.f32 %v4263, 1.0614054
      %v4548 = vmul.f32 %v4278, 1.0614054
      %v4549 = vmul.f32 %v4293, 1.0614054
      %v4550 = vmul.f32 %v4308, 1.0614054
      %v4551 = vmul.f32 %v4323, 1.0614054
      %v4552 = vmul.f32 %v4338, 1.0614054
      %v4553 = vmul.f32 %v4353, 1.0614054
      %v4554 = vmul.f32 %v4368, 1.0614054
      %v4555 = vmul.f32 %v4383, 1.0614054
      %v4556 = vmul.f32 %v4398, 1.0614054
      %v4557 = vmul.f32 %v4413, 1.0614054
      %v4558 = vmul.f32 %v4428, 1.0614054
      %v4559 = vmul.f32 %v4443, 1.0614054
      %v4560 = vmul.f32 %v4458, 1.0614054
      %v4561 = vmul.f32 %v4473, 1.0614054
      %v4562 = vmul.f32 %v4488, 1.0614054
      %v4563 = vmul.f32 %v4503, 1.0614054
      %v4564 = vmul.f32 %v4518, 1.0614054
      %v4565 = vmul.f32 %v4533, 1.0614054
      %v4566 = vadd.f32 %v4534, -1.4531521
      %v4567 = vadd.f32 %v4535, -1.4531521
      %v4568 = vadd.f32 %v4536, -1.4531521
      %v4569 = vadd.f32 %v4537, -1.4531521
      %v4570 = vadd.f32 %v4538, -1.4531521
      %v4571 = vadd.f32 %v4539, -1.4531521
      %v4572 = vadd.f32 %v4540, -1.4531521
      %v4573 = vadd.f32 %v4541, -1.4531521
      %v4574 = vadd.f32 %v4542, -1.4531521
      %v4575 = vadd.f32 %v4543, -1.4531521
      %v4576 = vadd.f32 %v4544, -1.4531521
      %v4577 = vadd.f32 %v4545, -1.4531521
      %v4578 = vadd.f32 %v4546, -1.4531521
      %v4579 = vadd.f32 %v4547, -1.4531521
      %v4580 = vadd.f32 %v4548, -1.4531521
      %v4581 = vadd.f32 %v4549, -1.4531521
      %v4582 = vadd.f32 %v4550, -1.4531521
      %v4583 = vadd.f32 %v4551, -1.4531521
      %v4584 = vadd.f32 %v4552, -1.4531521
      %v4585 = vadd.f32 %v4553, -1.4531521
      %v4586 = vadd.f32 %v4554, -1.4531521
      %v4587 = vadd.f32 %v4555, -1.4531521
      %v4588 = vadd.f32 %v4556, -1.4531521
      %v4589 = vadd.f32 %v4557, -1.4531521
      %v4590 = vadd.f32 %v4558, -1.4531521
      %v4591 = vadd.f32 %v4559, -1.4531521
      %v4592 = vadd.f32 %v4560, -1.4531521
      %v4593 = vadd.f32 %v4561, -1.4531521
      %v4594 = vadd.f32 %v4562, -1.4531521
      %v4595 = vadd.f32 %v4563, -1.4531521
      %v4596 = vadd.f32 %v4564, -1.4531521
      %v4597 = vadd.f32 %v4565, -1.4531521
      %v4598 = vmul.f32 %v4566, %v4068
      %v4599 = vmul.f32 %v4567, %v4083
      %v4600 = vmul.f32 %v4568, %v4098
      %v4601 = vmul.f32 %v4569, %v4113
      %v4602 = vmul.f32 %v4570, %v4128
      %v4603 = vmul.f32 %v4571, %v4143
      %v4604 = vmul.f32 %v4572, %v4158
      %v4605 = vmul.f32 %v4573, %v4173
      %v4606 = vmul.f32 %v4574, %v4188
      %v4607 = vmul.f32 %v4575, %v4203
      %v4608 = vmul.f32 %v4576, %v4218
      %v4609 = vmul.f32 %v4577, %v4233
      %v4610 = vmul.f32 %v4578, %v4248
      %v4611 = vmul.f32 %v4579, %v4263
      %v4612 = vmul.f32 %v4580, %v4278
      %v4613 = vmul.f32 %v4581, %v4293
      %v4614 = vmul.f32 %v4582, %v4308
      %v4615 = vmul.f32 %v4583, %v4323
      %v4616 = vmul.f32 %v4584, %v4338
      %v4617 = vmul.f32 %v4585, %v4353
      %v4618 = vmul.f32 %v4586, %v4368
      %v4619 = vmul.f32 %v4587, %v4383
      %v4620 = vmul.f32 %v4588, %v4398
      %v4621 = vmul.f32 %v4589, %v4413
      %v4622 = vmul.f32 %v4590, %v4428
      %v4623 = vmul.f32 %v4591, %v4443
      %v4624 = vmul.f32 %v4592, %v4458
      %v4625 = vmul.f32 %v4593, %v4473
      %v4626 = vmul.f32 %v4594, %v4488
      %v4627 = vmul.f32 %v4595, %v4503
      %v4628 = vmul.f32 %v4596, %v4518
      %v4629 = vmul.f32 %v4597, %v4533
      %v4630 = vadd.f32 %v4598, 1.4214138
      %v4631 = vadd.f32 %v4599, 1.4214138
      %v4632 = vadd.f32 %v4600, 1.4214138
      %v4633 = vadd.f32 %v4601, 1.4214138
      %v4634 = vadd.f32 %v4602, 1.4214138
      %v4635 = vadd.f32 %v4603, 1.4214138
      %v4636 = vadd.f32 %v4604, 1.4214138
      %v4637 = vadd.f32 %v4605, 1.4214138
      %v4638 = vadd.f32 %v4606, 1.4214138
      %v4639 = vadd.f32 %v4607, 1.4214138
      %v4640 = vadd.f32 %v4608, 1.4214138
      %v4641 = vadd.f32 %v4609, 1.4214138
      %v4642 = vadd.f32 %v4610, 1.4214138
      %v4643 = vadd.f32 %v4611, 1.4214138
      %v4644 = vadd.f32 %v4612, 1.4214138
      %v4645 = vadd.f32 %v4613, 1.4214138
      %v4646 = vadd.f32 %v4614, 1.4214138
      %v4647 = vadd.f32 %v4615, 1.4214138
      %v4648 = vadd.f32 %v4616, 1.4214138
      %v4649 = vadd.f32 %v4617, 1.4214138
      %v4650 = vadd.f32 %v4618, 1.4214138
      %v4651 = vadd.f32 %v4619, 1.4214138
      %v4652 = vadd.f32 %v4620, 1.4214138
      %v4653 = vadd.f32 %v4621, 1.4214138
      %v4654 = vadd.f32 %v4622, 1.4214138
      %v4655 = vadd.f32 %v4623, 1.4214138
      %v4656 = vadd.f32 %v4624, 1.4214138
      %v4657 = vadd.f32 %v4625, 1.4214138
      %v4658 = vadd.f32 %v4626, 1.4214138
      %v4659 = vadd.f32 %v4627, 1.4214138
      %v4660 = vadd.f32 %v4628, 1.4214138
      %v4661 = vadd.f32 %v4629, 1.4214138
      %v4662 = vmul.f32 %v4630, %v4068
      %v4663 = vmul.f32 %v4631, %v4083
      %v4664 = vmul.f32 %v4632, %v4098
      %v4665 = vmul.f32 %v4633, %v4113
      %v4666 = vmul.f32 %v4634, %v4128
      %v4667 = vmul.f32 %v4635, %v4143
      %v4668 = vmul.f32 %v4636, %v4158
      %v4669 = vmul.f32 %v4637, %v4173
      %v4670 = vmul.f32 %v4638, %v4188
      %v4671 = vmul.f32 %v4639, %v4203
      %v4672 = vmul.f32 %v4640, %v4218
      %v4673 = vmul.f32 %v4641, %v4233
      %v4674 = vmul.f32 %v4642, %v4248
      %v4675 = vmul.f32 %v4643, %v4263
      %v4676 = vmul.f32 %v4644, %v4278
      %v4677 = vmul.f32 %v4645, %v4293
      %v4678 = vmul.f32 %v4646, %v4308
      %v4679 = vmul.f32 %v4647, %v4323
      %v4680 = vmul.f32 %v4648, %v4338
      %v4681 = vmul.f32 %v4649, %v4353
      %v4682 = vmul.f32 %v4650, %v4368
      %v4683 = vmul.f32 %v4651, %v4383
      %v4684 = vmul.f32 %v4652, %v4398
      %v4685 = vmul.f32 %v4653, %v4413
      %v4686 = vmul.f32 %v4654, %v4428
      %v4687 = vmul.f32 %v4655, %v4443
      %v4688 = vmul.f32 %v4656, %v4458
      %v4689 = vmul.f32 %v4657, %v4473
      %v4690 = vmul.f32 %v4658, %v4488
      %v4691 = vmul.f32 %v4659, %v4503
      %v4692 = vmul.f32 %v4660, %v4518
      %v4693 = vmul.f32 %v4661, %v4533
      %v4694 = vadd.f32 %v4662, -0.28449672
      %v4695 = vadd.f32 %v4663, -0.28449672
      %v4696 = vadd.f32 %v4664, -0.28449672
      %v4697 = vadd.f32 %v4665, -0.28449672
      %v4698 = vadd.f32 %v4666, -0.28449672
      %v4699 = vadd.f32 %v4667, -0.28449672
      %v4700 = vadd.f32 %v4668, -0.28449672
      %v4701 = vadd.f32 %v4669, -0.28449672
      %v4702 = vadd.f32 %v4670, -0.28449672
      %v4703 = vadd.f32 %v4671, -0.28449672
      %v4704 = vadd.f32 %v4672, -0.28449672
      %v4705 = vadd.f32 %v4673, -0.28449672
      %v4706 = vadd.f32 %v4674, -0.28449672
      %v4707 = vadd.f32 %v4675, -0.28449672
      %v4708 = vadd.f32 %v4676, -0.28449672
      %v4709 = vadd.f32 %v4677, -0.28449672
      %v4710 = vadd.f32 %v4678, -0.28449672
      %v4711 = vadd.f32 %v4679, -0.28449672
      %v4712 = vadd.f32 %v4680, -0.28449672
      %v4713 = vadd.f32 %v4681, -0.28449672
      %v4714 = vadd.f32 %v4682, -0.28449672
      %v4715 = vadd.f32 %v4683, -0.28449672
      %v4716 = vadd.f32 %v4684, -0.28449672
      %v4717 = vadd.f32 %v4685, -0.28449672
      %v4718 = vadd.f32 %v4686, -0.28449672
      %v4719 = vadd.f32 %v4687, -0.28449672
      %v4720 = vadd.f32 %v4688, -0.28449672
      %v4721 = vadd.f32 %v4689, -0.28449672
      %v4722 = vadd.f32 %v4690, -0.28449672
      %v4723 = vadd.f32 %v4691, -0.28449672
      %v4724 = vadd.f32 %v4692, -0.28449672
      %v4725 = vadd.f32 %v4693, -0.28449672
      %v4726 = vmul.f32 %v4694, %v4068
      %v4727 = vmul.f32 %v4695, %v4083
      %v4728 = vmul.f32 %v4696, %v4098
      %v4729 = vmul.f32 %v4697, %v4113
      %v4730 = vmul.f32 %v4698, %v4128
      %v4731 = vmul.f32 %v4699, %v4143
      %v4732 = vmul.f32 %v4700, %v4158
      %v4733 = vmul.f32 %v4701, %v4173
      %v4734 = vmul.f32 %v4702, %v4188
      %v4735 = vmul.f32 %v4703, %v4203
      %v4736 = vmul.f32 %v4704, %v4218
      %v4737 = vmul.f32 %v4705, %v4233
      %v4738 = vmul.f32 %v4706, %v4248
      %v4739 = vmul.f32 %v4707, %v4263
      %v4740 = vmul.f32 %v4708, %v4278
      %v4741 = vmul.f32 %v4709, %v4293
      %v4742 = vmul.f32 %v4710, %v4308
      %v4743 = vmul.f32 %v4711, %v4323
      %v4744 = vmul.f32 %v4712, %v4338
      %v4745 = vmul.f32 %v4713, %v4353
      %v4746 = vmul.f32 %v4714, %v4368
      %v4747 = vmul.f32 %v4715, %v4383
      %v4748 = vmul.f32 %v4716, %v4398
      %v4749 = vmul.f32 %v4717, %v4413
      %v4750 = vmul.f32 %v4718, %v4428
      %v4751 = vmul.f32 %v4719, %v4443
      %v4752 = vmul.f32 %v4720, %v4458
      %v4753 = vmul.f32 %v4721, %v4473
      %v4754 = vmul.f32 %v4722, %v4488
      %v4755 = vmul.f32 %v4723, %v4503
      %v4756 = vmul.f32 %v4724, %v4518
      %v4757 = vmul.f32 %v4725, %v4533
      %v4758 = vadd.f32 %v4726, 0.2548296
      %v4759 = vadd.f32 %v4727, 0.2548296
      %v4760 = vadd.f32 %v4728, 0.2548296
      %v4761 = vadd.f32 %v4729, 0.2548296
      %v4762 = vadd.f32 %v4730, 0.2548296
      %v4763 = vadd.f32 %v4731, 0.2548296
      %v4764 = vadd.f32 %v4732, 0.2548296
      %v4765 = vadd.f32 %v4733, 0.2548296
      %v4766 = vadd.f32 %v4734, 0.2548296
      %v4767 = vadd.f32 %v4735, 0.2548296
      %v4768 = vadd.f32 %v4736, 0.2548296
      %v4769 = vadd.f32 %v4737, 0.2548296
      %v4770 = vadd.f32 %v4738, 0.2548296
      %v4771 = vadd.f32 %v4739, 0.2548296
      %v4772 = vadd.f32 %v4740, 0.2548296
      %v4773 = vadd.f32 %v4741, 0.2548296
      %v4774 = vadd.f32 %v4742, 0.2548296
      %v4775 = vadd.f32 %v4743, 0.2548296
      %v4776 = vadd.f32 %v4744, 0.2548296
      %v4777 = vadd.f32 %v4745, 0.2548296
      %v4778 = vadd.f32 %v4746, 0.2548296
      %v4779 = vadd.f32 %v4747, 0.2548296
      %v4780 = vadd.f32 %v4748, 0.2548296
      %v4781 = vadd.f32 %v4749, 0.2548296
      %v4782 = vadd.f32 %v4750, 0.2548296
      %v4783 = vadd.f32 %v4751, 0.2548296
      %v4784 = vadd.f32 %v4752, 0.2548296
      %v4785 = vadd.f32 %v4753, 0.2548296
      %v4786 = vadd.f32 %v4754, 0.2548296
      %v4787 = vadd.f32 %v4755, 0.2548296
      %v4788 = vadd.f32 %v4756, 0.2548296
      %v4789 = vadd.f32 %v4757, 0.2548296
      %v4790 = vmul.f32 %v4758, %v4068
      %v4791 = vmul.f32 %v4759, %v4083
      %v4792 = vmul.f32 %v4760, %v4098
      %v4793 = vmul.f32 %v4761, %v4113
      %v4794 = vmul.f32 %v4762, %v4128
      %v4795 = vmul.f32 %v4763, %v4143
      %v4796 = vmul.f32 %v4764, %v4158
      %v4797 = vmul.f32 %v4765, %v4173
      %v4798 = vmul.f32 %v4766, %v4188
      %v4799 = vmul.f32 %v4767, %v4203
      %v4800 = vmul.f32 %v4768, %v4218
      %v4801 = vmul.f32 %v4769, %v4233
      %v4802 = vmul.f32 %v4770, %v4248
      %v4803 = vmul.f32 %v4771, %v4263
      %v4804 = vmul.f32 %v4772, %v4278
      %v4805 = vmul.f32 %v4773, %v4293
      %v4806 = vmul.f32 %v4774, %v4308
      %v4807 = vmul.f32 %v4775, %v4323
      %v4808 = vmul.f32 %v4776, %v4338
      %v4809 = vmul.f32 %v4777, %v4353
      %v4810 = vmul.f32 %v4778, %v4368
      %v4811 = vmul.f32 %v4779, %v4383
      %v4812 = vmul.f32 %v4780, %v4398
      %v4813 = vmul.f32 %v4781, %v4413
      %v4814 = vmul.f32 %v4782, %v4428
      %v4815 = vmul.f32 %v4783, %v4443
      %v4816 = vmul.f32 %v4784, %v4458
      %v4817 = vmul.f32 %v4785, %v4473
      %v4818 = vmul.f32 %v4786, %v4488
      %v4819 = vmul.f32 %v4787, %v4503
      %v4820 = vmul.f32 %v4788, %v4518
      %v4821 = vmul.f32 %v4789, %v4533
      %v4822 = vsub.f32 0.0, %v3958
      %v4823 = vsub.f32 0.0, %v3959
      %v4824 = vsub.f32 0.0, %v3960
      %v4825 = vsub.f32 0.0, %v3961
      %v4826 = vsub.f32 0.0, %v3962
      %v4827 = vsub.f32 0.0, %v3963
      %v4828 = vsub.f32 0.0, %v3964
      %v4829 = vsub.f32 0.0, %v3965
      %v4830 = vsub.f32 0.0, %v3966
      %v4831 = vsub.f32 0.0, %v3967
      %v4832 = vsub.f32 0.0, %v3968
      %v4833 = vsub.f32 0.0, %v3969
      %v4834 = vsub.f32 0.0, %v3970
      %v4835 = vsub.f32 0.0, %v3971
      %v4836 = vsub.f32 0.0, %v3972
      %v4837 = vsub.f32 0.0, %v3973
      %v4838 = vsub.f32 0.0, %v3974
      %v4839 = vsub.f32 0.0, %v3975
      %v4840 = vsub.f32 0.0, %v3976
      %v4841 = vsub.f32 0.0, %v3977
      %v4842 = vsub.f32 0.0, %v3978
      %v4843 = vsub.f32 0.0, %v3979
      %v4844 = vsub.f32 0.0, %v3980
      %v4845 = vsub.f32 0.0, %v3981
      %v4846 = vsub.f32 0.0, %v3982
      %v4847 = vsub.f32 0.0, %v3983
      %v4848 = vsub.f32 0.0, %v3984
      %v4849 = vsub.f32 0.0, %v3985
      %v4850 = vsub.f32 0.0, %v3986
      %v4851 = vsub.f32 0.0, %v3987
      %v4852 = vsub.f32 0.0, %v3988
      %v4853 = vsub.f32 0.0, %v3989
      %v4854 = vmul.f32 %v4822, %v3958
      %v4855 = vmul.f32 %v4823, %v3959
      %v4856 = vmul.f32 %v4824, %v3960
      %v4857 = vmul.f32 %v4825, %v3961
      %v4858 = vmul.f32 %v4826, %v3962
      %v4859 = vmul.f32 %v4827, %v3963
      %v4860 = vmul.f32 %v4828, %v3964
      %v4861 = vmul.f32 %v4829, %v3965
      %v4862 = vmul.f32 %v4830, %v3966
      %v4863 = vmul.f32 %v4831, %v3967
      %v4864 = vmul.f32 %v4832, %v3968
      %v4865 = vmul.f32 %v4833, %v3969
      %v4866 = vmul.f32 %v4834, %v3970
      %v4867 = vmul.f32 %v4835, %v3971
      %v4868 = vmul.f32 %v4836, %v3972
      %v4869 = vmul.f32 %v4837, %v3973
      %v4870 = vmul.f32 %v4838, %v3974
      %v4871 = vmul.f32 %v4839, %v3975
      %v4872 = vmul.f32 %v4840, %v3976
      %v4873 = vmul.f32 %v4841, %v3977
      %v4874 = vmul.f32 %v4842, %v3978
      %v4875 = vmul.f32 %v4843, %v3979
      %v4876 = vmul.f32 %v4844, %v3980
      %v4877 = vmul.f32 %v4845, %v3981
      %v4878 = vmul.f32 %v4846, %v3982
      %v4879 = vmul.f32 %v4847, %v3983
      %v4880 = vmul.f32 %v4848, %v3984
      %v4881 = vmul.f32 %v4849, %v3985
      %v4882 = vmul.f32 %v4850, %v3986
      %v4883 = vmul.f32 %v4851, %v3987
      %v4884 = vmul.f32 %v4852, %v3988
      %v4885 = vmul.f32 %v4853, %v3989
      %v4886 = vmul.f32 %v4854, 1.442695
      %v4887 = vpow.pop %v4886
      %v4888 = vmul.f32 %v4855, 1.442695
      %v4889 = vpow.pop %v4888
      %v4890 = vmul.f32 %v4856, 1.442695
      %v4891 = vpow.pop %v4890
      %v4892 = vmul.f32 %v4857, 1.442695
      %v4893 = vpow.pop %v4892
      %v4894 = vmul.f32 %v4858, 1.442695
      %v4895 = vpow.pop %v4894
      %v4896 = vmul.f32 %v4859, 1.442695
      %v4897 = vpow.pop %v4896
      %v4898 = vmul.f32 %v4860, 1.442695
      %v4899 = vpow.pop %v4898
      %v4900 = vmul.f32 %v4861, 1.442695
      %v4901 = vpow.pop %v4900
      %v4902 = vmul.f32 %v4862, 1.442695
      %v4903 = vpow.pop %v4902
      %v4904 = vmul.f32 %v4863, 1.442695
      %v4905 = vpow.pop %v4904
      %v4906 = vmul.f32 %v4864, 1.442695
      %v4907 = vpow.pop %v4906
      %v4908 = vmul.f32 %v4865, 1.442695
      %v4909 = vpow.pop %v4908
      %v4910 = vmul.f32 %v4866, 1.442695
      %v4911 = vpow.pop %v4910
      %v4912 = vmul.f32 %v4867, 1.442695
      %v4913 = vpow.pop %v4912
      %v4914 = vmul.f32 %v4868, 1.442695
      %v4915 = vpow.pop %v4914
      %v4916 = vmul.f32 %v4869, 1.442695
      %v4917 = vpow.pop %v4916
      %v4918 = vmul.f32 %v4870, 1.442695
      %v4919 = vpow.pop %v4918
      %v4920 = vmul.f32 %v4871, 1.442695
      %v4921 = vpow.pop %v4920
      %v4922 = vmul.f32 %v4872, 1.442695
      %v4923 = vpow.pop %v4922
      %v4924 = vmul.f32 %v4873, 1.442695
      %v4925 = vpow.pop %v4924
      %v4926 = vmul.f32 %v4874, 1.442695
      %v4927 = vpow.pop %v4926
      %v4928 = vmul.f32 %v4875, 1.442695
      %v4929 = vpow.pop %v4928
      %v4930 = vmul.f32 %v4876, 1.442695
      %v4931 = vpow.pop %v4930
      %v4932 = vmul.f32 %v4877, 1.442695
      %v4933 = vpow.pop %v4932
      %v4934 = vmul.f32 %v4878, 1.442695
      %v4935 = vpow.pop %v4934
      %v4936 = vmul.f32 %v4879, 1.442695
      %v4937 = vpow.pop %v4936
      %v4938 = vmul.f32 %v4880, 1.442695
      %v4939 = vpow.pop %v4938
      %v4940 = vmul.f32 %v4881, 1.442695
      %v4941 = vpow.pop %v4940
      %v4942 = vmul.f32 %v4882, 1.442695
      %v4943 = vpow.pop %v4942
      %v4944 = vmul.f32 %v4883, 1.442695
      %v4945 = vpow.pop %v4944
      %v4946 = vmul.f32 %v4884, 1.442695
      %v4947 = vpow.pop %v4946
      %v4948 = vmul.f32 %v4885, 1.442695
      %v4949 = vpow.pop %v4948
      %v4950 = vmul.f32 %v4790, %v4887
      %v4951 = vmul.f32 %v4791, %v4889
      %v4952 = vmul.f32 %v4792, %v4891
      %v4953 = vmul.f32 %v4793, %v4893
      %v4954 = vmul.f32 %v4794, %v4895
      %v4955 = vmul.f32 %v4795, %v4897
      %v4956 = vmul.f32 %v4796, %v4899
      %v4957 = vmul.f32 %v4797, %v4901
      %v4958 = vmul.f32 %v4798, %v4903
      %v4959 = vmul.f32 %v4799, %v4905
      %v4960 = vmul.f32 %v4800, %v4907
      %v4961 = vmul.f32 %v4801, %v4909
      %v4962 = vmul.f32 %v4802, %v4911
      %v4963 = vmul.f32 %v4803, %v4913
      %v4964 = vmul.f32 %v4804, %v4915
      %v4965 = vmul.f32 %v4805, %v4917
      %v4966 = vmul.f32 %v4806, %v4919
      %v4967 = vmul.f32 %v4807, %v4921
      %v4968 = vmul.f32 %v4808, %v4923
      %v4969 = vmul.f32 %v4809, %v4925
      %v4970 = vmul.f32 %v4810, %v4927
      %v4971 = vmul.f32 %v4811, %v4929
      %v4972 = vmul.f32 %v4812, %v4931
      %v4973 = vmul.f32 %v4813, %v4933
      %v4974 = vmul.f32 %v4814, %v4935
      %v4975 = vmul.f32 %v4815, %v4937
      %v4976 = vmul.f32 %v4816, %v4939
      %v4977 = vmul.f32 %v4817, %v4941
      %v4978 = vmul.f32 %v4818, %v4943
      %v4979 = vmul.f32 %v4819, %v4945
      %v4980 = vmul.f32 %v4820, %v4947
      %v4981 = vmul.f32 %v4821, %v4949
      %v4982 = vsub.f32 1.0, %v4950
      %v4983 = vsub.f32 1.0, %v4951
      %v4984 = vsub.f32 1.0, %v4952
      %v4985 = vsub.f32 1.0, %v4953
      %v4986 = vsub.f32 1.0, %v4954
      %v4987 = vsub.f32 1.0, %v4955
      %v4988 = vsub.f32 1.0, %v4956
      %v4989 = vsub.f32 1.0, %v4957
      %v4990 = vsub.f32 1.0, %v4958
      %v4991 = vsub.f32 1.0, %v4959
      %v4992 = vsub.f32 1.0, %v4960
      %v4993 = vsub.f32 1.0, %v4961
      %v4994 = vsub.f32 1.0, %v4962
      %v4995 = vsub.f32 1.0, %v4963
      %v4996 = vsub.f32 1.0, %v4964
      %v4997 = vsub.f32 1.0, %v4965
      %v4998 = vsub.f32 1.0, %v4966
      %v4999 = vsub.f32 1.0, %v4967
      %v5000 = vsub.f32 1.0, %v4968
      %v5001 = vsub.f32 1.0, %v4969
      %v5002 = vsub.f32 1.0, %v4970
      %v5003 = vsub.f32 1.0, %v4971
      %v5004 = vsub.f32 1.0, %v4972
      %v5005 = vsub.f32 1.0, %v4973
      %v5006 = vsub.f32 1.0, %v4974
      %v5007 = vsub.f32 1.0, %v4975
      %v5008 = vsub.f32 1.0, %v4976
      %v5009 = vsub.f32 1.0, %v4977
      %v5010 = vsub.f32 1.0, %v4978
      %v5011 = vsub.f32 1.0, %v4979
      %v5012 = vsub.f32 1.0, %v4980
      %v5013 = vsub.f32 1.0, %v4981
      %v5014 = vmul.f32 %v3926, %v4982
      %v5015 = vmul.f32 %v3927, %v4983
      %v5016 = vmul.f32 %v3928, %v4984
      %v5017 = vmul.f32 %v3929, %v4985
      %v5018 = vmul.f32 %v3930, %v4986
      %v5019 = vmul.f32 %v3931, %v4987
      %v5020 = vmul.f32 %v3932, %v4988
      %v5021 = vmul.f32 %v3933, %v4989
      %v5022 = vmul.f32 %v3934, %v4990
      %v5023 = vmul.f32 %v3935, %v4991
      %v5024 = vmul.f32 %v3936, %v4992
      %v5025 = vmul.f32 %v3937, %v4993
      %v5026 = vmul.f32 %v3938, %v4994
      %v5027 = vmul.f32 %v3939, %v4995
      %v5028 = vmul.f32 %v3940, %v4996
      %v5029 = vmul.f32 %v3941, %v4997
      %v5030 = vmul.f32 %v3942, %v4998
      %v5031 = vmul.f32 %v3943, %v4999
      %v5032 = vmul.f32 %v3944, %v5000
      %v5033 = vmul.f32 %v3945, %v5001
      %v5034 = vmul.f32 %v3946, %v5002
      %v5035 = vmul.f32 %v3947, %v5003
      %v5036 = vmul.f32 %v3948, %v5004
      %v5037 = vmul.f32 %v3949, %v5005
      %v5038 = vmul.f32 %v3950, %v5006
      %v5039 = vmul.f32 %v3951, %v5007
      %v5040 = vmul.f32 %v3952, %v5008
      %v5041 = vmul.f32 %v3953, %v5009
      %v5042 = vmul.f32 %v3954, %v5010
      %v5043 = vmul.f32 %v3955, %v5011
      %v5044 = vmul.f32 %v3956, %v5012
      %v5045 = vmul.f32 %v3957, %v5013
      %v5046 = vadd.f32 %v5014, 1.0
      %v5047 = vadd.f32 %v5015, 1.0
      %v5048 = vadd.f32 %v5016, 1.0
      %v5049 = vadd.f32 %v5017, 1.0
      %v5050 = vadd.f32 %v5018, 1.0
      %v5051 = vadd.f32 %v5019, 1.0
      %v5052 = vadd.f32 %v5020, 1.0
      %v5053 = vadd.f32 %v5021, 1.0
      %v5054 = vadd.f32 %v5022, 1.0
      %v5055 = vadd.f32 %v5023, 1.0
      %v5056 = vadd.f32 %v5024, 1.0
      %v5057 = vadd.f32 %v5025, 1.0
      %v5058 = vadd.f32 %v5026, 1.0
      %v5059 = vadd.f32 %v5027, 1.0
      %v5060 = vadd.f32 %v5028, 1.0
      %v5061 = vadd.f32 %v5029, 1.0
      %v5062 = vadd.f32 %v5030, 1.0
      %v5063 = vadd.f32 %v5031, 1.0
      %v5064 = vadd.f32 %v5032, 1.0
      %v5065 = vadd.f32 %v5033, 1.0
      %v5066 = vadd.f32 %v5034, 1.0
      %v5067 = vadd.f32 %v5035, 1.0
      %v5068 = vadd.f32 %v5036, 1.0
      %v5069 = vadd.f32 %v5037, 1.0
      %v5070 = vadd.f32 %v5038, 1.0
      %v5071 = vadd.f32 %v5039, 1.0
      %v5072 = vadd.f32 %v5040, 1.0
      %v5073 = vadd.f32 %v5041, 1.0
      %v5074 = vadd.f32 %v5042, 1.0
      %v5075 = vadd.f32 %v5043, 1.0
      %v5076 = vadd.f32 %v5044, 1.0
      %v5077 = vadd.f32 %v5045, 1.0
      %v5078 = vmul.f32 %v3830, %v5046
      %v5079 = vmul.f32 %v3831, %v5047
      %v5080 = vmul.f32 %v3832, %v5048
      %v5081 = vmul.f32 %v3833, %v5049
      %v5082 = vmul.f32 %v3834, %v5050
      %v5083 = vmul.f32 %v3835, %v5051
      %v5084 = vmul.f32 %v3836, %v5052
      %v5085 = vmul.f32 %v3837, %v5053
      %v5086 = vmul.f32 %v3838, %v5054
      %v5087 = vmul.f32 %v3839, %v5055
      %v5088 = vmul.f32 %v3840, %v5056
      %v5089 = vmul.f32 %v3841, %v5057
      %v5090 = vmul.f32 %v3842, %v5058
      %v5091 = vmul.f32 %v3843, %v5059
      %v5092 = vmul.f32 %v3844, %v5060
      %v5093 = vmul.f32 %v3845, %v5061
      %v5094 = vmul.f32 %v3846, %v5062
      %v5095 = vmul.f32 %v3847, %v5063
      %v5096 = vmul.f32 %v3848, %v5064
      %v5097 = vmul.f32 %v3849, %v5065
      %v5098 = vmul.f32 %v3850, %v5066
      %v5099 = vmul.f32 %v3851, %v5067
      %v5100 = vmul.f32 %v3852, %v5068
      %v5101 = vmul.f32 %v3853, %v5069
      %v5102 = vmul.f32 %v3854, %v5070
      %v5103 = vmul.f32 %v3855, %v5071
      %v5104 = vmul.f32 %v3856, %v5072
      %v5105 = vmul.f32 %v3857, %v5073
      %v5106 = vmul.f32 %v3858, %v5074
      %v5107 = vmul.f32 %v3859, %v5075
      %v5108 = vmul.f32 %v3860, %v5076
      %v5109 = vmul.f32 %v3861, %v5077
      %v5110 = vsel %vm373, %v5078, 0.0
      %v5111 = vsel %vm373, %v5079, 0.0
      %v5112 = vadd.f32 %v5110, %v5111
      %v5113 = vsel %vm373, %v5080, 0.0
      %v5114 = vadd.f32 %v5112, %v5113
      %v5115 = vsel %vm373, %v5081, 0.0
      %v5116 = vadd.f32 %v5114, %v5115
      %v5117 = vsel %vm373, %v5082, 0.0
      %v5118 = vadd.f32 %v5116, %v5117
      %v5119 = vsel %vm373, %v5083, 0.0
      %v5120 = vadd.f32 %v5118, %v5119
      %v5121 = vsel %vm373, %v5084, 0.0
      %v5122 = vadd.f32 %v5120, %v5121
      %v5123 = vsel %vm373, %v5085, 0.0
      %v5124 = vadd.f32 %v5122, %v5123
      %v5125 = vsel %vm373, %v5086, 0.0
      %v5126 = vadd.f32 %v5124, %v5125
      %v5127 = vsel %vm373, %v5087, 0.0
      %v5128 = vadd.f32 %v5126, %v5127
      %v5129 = vsel %vm373, %v5088, 0.0
      %v5130 = vadd.f32 %v5128, %v5129
      %v5131 = vsel %vm373, %v5089, 0.0
      %v5132 = vadd.f32 %v5130, %v5131
      %v5133 = vsel %vm373, %v5090, 0.0
      %v5134 = vadd.f32 %v5132, %v5133
      %v5135 = vsel %vm373, %v5091, 0.0
      %v5136 = vadd.f32 %v5134, %v5135
      %v5137 = vsel %vm373, %v5092, 0.0
      %v5138 = vadd.f32 %v5136, %v5137
      %v5139 = vsel %vm373, %v5093, 0.0
      %v5140 = vadd.f32 %v5138, %v5139
      %v5141 = vsel %vm373, %v5094, 0.0
      %v5142 = vadd.f32 %v5140, %v5141
      %v5143 = vsel %vm373, %v5095, 0.0
      %v5144 = vadd.f32 %v5142, %v5143
      %v5145 = vsel %vm373, %v5096, 0.0
      %v5146 = vadd.f32 %v5144, %v5145
      %v5147 = vsel %vm373, %v5097, 0.0
      %v5148 = vadd.f32 %v5146, %v5147
      %v5149 = vsel %vm373, %v5098, 0.0
      %v5150 = vadd.f32 %v5148, %v5149
      %v5151 = vsel %vm373, %v5099, 0.0
      %v5152 = vadd.f32 %v5150, %v5151
      %v5153 = vsel %vm373, %v5100, 0.0
      %v5154 = vadd.f32 %v5152, %v5153
      %v5155 = vsel %vm373, %v5101, 0.0
      %v5156 = vadd.f32 %v5154, %v5155
      %v5157 = vsel %vm373, %v5102, 0.0
      %v5158 = vadd.f32 %v5156, %v5157
      %v5159 = vsel %vm373, %v5103, 0.0
      %v5160 = vadd.f32 %v5158, %v5159
      %v5161 = vsel %vm373, %v5104, 0.0
      %v5162 = vadd.f32 %v5160, %v5161
      %v5163 = vsel %vm373, %v5105, 0.0
      %v5164 = vadd.f32 %v5162, %v5163
      %v5165 = vsel %vm373, %v5106, 0.0
      %v5166 = vadd.f32 %v5164, %v5165
      %v5167 = vsel %vm373, %v5107, 0.0
      %v5168 = vadd.f32 %v5166, %v5167
      %v5169 = vsel %vm373, %v5108, 0.0
      %v5170 = vadd.f32 %v5168, %v5169
      %v5171 = vsel %vm373, %v5109, 0.0
      %v5172 = vadd.f32 %v5170, %v5171
      %v5173 = vrot.slane %v5172, 4
      %v5174 = vadd.f32 %v5172, %v5173
      %v5175 = vrot.slane %v5174, 2
      %v5176 = vadd.f32 %v5174, %v5175
      %v5177 = vrot.slane %v5176, 1
      %v5178 = vadd.f32 %v5176, %v5177
      %v5179 = vrcp.pop 256.0
      %v5180 = vmul.f32 256.0, %v5179
      %v5181 = vsub.f32 1.0, %v5180
      %v5182 = vmul.f32 %v5179, %v5181
      %v5183 = vadd.f32 %v5179, %v5182
      %vm5184 = vweird.f32 %v5179
      %v5185 = vsel %vm5184, %v5179, %v5183
      %v5186 = vmul.f32 %v5178, %v5185
      %v5187 = vsub.f32 %v5078, %v5186
      %v5188 = vsub.f32 %v5079, %v5186
      %v5189 = vsub.f32 %v5080, %v5186
      %v5190 = vsub.f32 %v5081, %v5186
      %v5191 = vsub.f32 %v5082, %v5186
      %v5192 = vsub.f32 %v5083, %v5186
      %v5193 = vsub.f32 %v5084, %v5186
      %v5194 = vsub.f32 %v5085, %v5186
      %v5195 = vsub.f32 %v5086, %v5186
      %v5196 = vsub.f32 %v5087, %v5186
      %v5197 = vsub.f32 %v5088, %v5186
      %v5198 = vsub.f32 %v5089, %v5186
      %v5199 = vsub.f32 %v5090, %v5186
      %v5200 = vsub.f32 %v5091, %v5186
      %v5201 = vsub.f32 %v5092, %v5186
      %v5202 = vsub.f32 %v5093, %v5186
      %v5203 = vsub.f32 %v5094, %v5186
      %v5204 = vsub.f32 %v5095, %v5186
      %v5205 = vsub.f32 %v5096, %v5186
      %v5206 = vsub.f32 %v5097, %v5186
      %v5207 = vsub.f32 %v5098, %v5186
      %v5208 = vsub.f32 %v5099, %v5186
      %v5209 = vsub.f32 %v5100, %v5186
      %v5210 = vsub.f32 %v5101, %v5186
      %v5211 = vsub.f32 %v5102, %v5186
      %v5212 = vsub.f32 %v5103, %v5186
      %v5213 = vsub.f32 %v5104, %v5186
      %v5214 = vsub.f32 %v5105, %v5186
      %v5215 = vsub.f32 %v5106, %v5186
      %v5216 = vsub.f32 %v5107, %v5186
      %v5217 = vsub.f32 %v5108, %v5186
      %v5218 = vsub.f32 %v5109, %v5186
      %v5219 = vmul.f32 %v5187, %v5187
      %v5220 = vmul.f32 %v5188, %v5188
      %v5221 = vmul.f32 %v5189, %v5189
      %v5222 = vmul.f32 %v5190, %v5190
      %v5223 = vmul.f32 %v5191, %v5191
      %v5224 = vmul.f32 %v5192, %v5192
      %v5225 = vmul.f32 %v5193, %v5193
      %v5226 = vmul.f32 %v5194, %v5194
      %v5227 = vmul.f32 %v5195, %v5195
      %v5228 = vmul.f32 %v5196, %v5196
      %v5229 = vmul.f32 %v5197, %v5197
      %v5230 = vmul.f32 %v5198, %v5198
      %v5231 = vmul.f32 %v5199, %v5199
      %v5232 = vmul.f32 %v5200, %v5200
      %v5233 = vmul.f32 %v5201, %v5201
      %v5234 = vmul.f32 %v5202, %v5202
      %v5235 = vmul.f32 %v5203, %v5203
      %v5236 = vmul.f32 %v5204, %v5204
      %v5237 = vmul.f32 %v5205, %v5205
      %v5238 = vmul.f32 %v5206, %v5206
      %v5239 = vmul.f32 %v5207, %v5207
      %v5240 = vmul.f32 %v5208, %v5208
      %v5241 = vmul.f32 %v5209, %v5209
      %v5242 = vmul.f32 %v5210, %v5210
      %v5243 = vmul.f32 %v5211, %v5211
      %v5244 = vmul.f32 %v5212, %v5212
      %v5245 = vmul.f32 %v5213, %v5213
      %v5246 = vmul.f32 %v5214, %v5214
      %v5247 = vmul.f32 %v5215, %v5215
      %v5248 = vmul.f32 %v5216, %v5216
      %v5249 = vmul.f32 %v5217, %v5217
      %v5250 = vmul.f32 %v5218, %v5218
      %v5251 = vsel %vm373, %v5219, 0.0
      %v5252 = vsel %vm373, %v5220, 0.0
      %v5253 = vadd.f32 %v5251, %v5252
      %v5254 = vsel %vm373, %v5221, 0.0
      %v5255 = vadd.f32 %v5253, %v5254
      %v5256 = vsel %vm373, %v5222, 0.0
      %v5257 = vadd.f32 %v5255, %v5256
      %v5258 = vsel %vm373, %v5223, 0.0
      %v5259 = vadd.f32 %v5257, %v5258
      %v5260 = vsel %vm373, %v5224, 0.0
      %v5261 = vadd.f32 %v5259, %v5260
      %v5262 = vsel %vm373, %v5225, 0.0
      %v5263 = vadd.f32 %v5261, %v5262
      %v5264 = vsel %vm373, %v5226, 0.0
      %v5265 = vadd.f32 %v5263, %v5264
      %v5266 = vsel %vm373, %v5227, 0.0
      %v5267 = vadd.f32 %v5265, %v5266
      %v5268 = vsel %vm373, %v5228, 0.0
      %v5269 = vadd.f32 %v5267, %v5268
      %v5270 = vsel %vm373, %v5229, 0.0
      %v5271 = vadd.f32 %v5269, %v5270
      %v5272 = vsel %vm373, %v5230, 0.0
      %v5273 = vadd.f32 %v5271, %v5272
      %v5274 = vsel %vm373, %v5231, 0.0
      %v5275 = vadd.f32 %v5273, %v5274
      %v5276 = vsel %vm373, %v5232, 0.0
      %v5277 = vadd.f32 %v5275, %v5276
      %v5278 = vsel %vm373, %v5233, 0.0
      %v5279 = vadd.f32 %v5277, %v5278
      %v5280 = vsel %vm373, %v5234, 0.0
      %v5281 = vadd.f32 %v5279, %v5280
      %v5282 = vsel %vm373, %v5235, 0.0
      %v5283 = vadd.f32 %v5281, %v5282
      %v5284 = vsel %vm373, %v5236, 0.0
      %v5285 = vadd.f32 %v5283, %v5284
      %v5286 = vsel %vm373, %v5237, 0.0
      %v5287 = vadd.f32 %v5285, %v5286
      %v5288 = vsel %vm373, %v5238, 0.0
      %v5289 = vadd.f32 %v5287, %v5288
      %v5290 = vsel %vm373, %v5239, 0.0
      %v5291 = vadd.f32 %v5289, %v5290
      %v5292 = vsel %vm373, %v5240, 0.0
      %v5293 = vadd.f32 %v5291, %v5292
      %v5294 = vsel %vm373, %v5241, 0.0
      %v5295 = vadd.f32 %v5293, %v5294
      %v5296 = vsel %vm373, %v5242, 0.0
      %v5297 = vadd.f32 %v5295, %v5296
      %v5298 = vsel %vm373, %v5243, 0.0
      %v5299 = vadd.f32 %v5297, %v5298
      %v5300 = vsel %vm373, %v5244, 0.0
      %v5301 = vadd.f32 %v5299, %v5300
      %v5302 = vsel %vm373, %v5245, 0.0
      %v5303 = vadd.f32 %v5301, %v5302
      %v5304 = vsel %vm373, %v5246, 0.0
      %v5305 = vadd.f32 %v5303, %v5304
      %v5306 = vsel %vm373, %v5247, 0.0
      %v5307 = vadd.f32 %v5305, %v5306
      %v5308 = vsel %vm373, %v5248, 0.0
      %v5309 = vadd.f32 %v5307, %v5308
      %v5310 = vsel %vm373, %v5249, 0.0
      %v5311 = vadd.f32 %v5309, %v5310
      %v5312 = vsel %vm373, %v5250, 0.0
      %v5313 = vadd.f32 %v5311, %v5312
      %v5314 = vrot.slane %v5313, 4
      %v5315 = vadd.f32 %v5313, %v5314
      %v5316 = vrot.slane %v5315, 2
      %v5317 = vadd.f32 %v5315, %v5316
      %v5318 = vrot.slane %v5317, 1
      %v5319 = vadd.f32 %v5317, %v5318
      %v5320 = vmul.f32 %v5319, %v5185
      %v5321 = vadd.f32 %v5320, 1e-05
      %v5322 = vrsqrt.pop %v5321
      %v5323 = vmul.f32 %v5322, %v5321
      %v5324 = vmul.f32 %v5323, %v5322
      %v5325 = vmul.f32 0.5, %v5324
      %v5326 = vsub.f32 1.5, %v5325
      %v5327 = vmul.f32 %v5322, %v5326
      %vm5328 = vweird.f32 %v5321
      %vm5329 = vweird.f32 %v5322
      %vm5330 = vmor %vm5328, %vm5329
      %v5331 = vsel %vm5330, %v5322, %v5327
      %v5332 = vmul.f32 %v5187, %v5331
      %v5333 = vmul.f32 %v5188, %v5331
      %v5334 = vmul.f32 %v5189, %v5331
      %v5335 = vmul.f32 %v5190, %v5331
      %v5336 = vmul.f32 %v5191, %v5331
      %v5337 = vmul.f32 %v5192, %v5331
      %v5338 = vmul.f32 %v5193, %v5331
      %v5339 = vmul.f32 %v5194, %v5331
      %v5340 = vmul.f32 %v5195, %v5331
      %v5341 = vmul.f32 %v5196, %v5331
      %v5342 = vmul.f32 %v5197, %v5331
      %v5343 = vmul.f32 %v5198, %v5331
      %v5344 = vmul.f32 %v5199, %v5331
      %v5345 = vmul.f32 %v5200, %v5331
      %v5346 = vmul.f32 %v5201, %v5331
      %v5347 = vmul.f32 %v5202, %v5331
      %v5348 = vmul.f32 %v5203, %v5331
      %v5349 = vmul.f32 %v5204, %v5331
      %v5350 = vmul.f32 %v5205, %v5331
      %v5351 = vmul.f32 %v5206, %v5331
      %v5352 = vmul.f32 %v5207, %v5331
      %v5353 = vmul.f32 %v5208, %v5331
      %v5354 = vmul.f32 %v5209, %v5331
      %v5355 = vmul.f32 %v5210, %v5331
      %v5356 = vmul.f32 %v5211, %v5331
      %v5357 = vmul.f32 %v5212, %v5331
      %v5358 = vmul.f32 %v5213, %v5331
      %v5359 = vmul.f32 %v5214, %v5331
      %v5360 = vmul.f32 %v5215, %v5331
      %v5361 = vmul.f32 %v5216, %v5331
      %v5362 = vmul.f32 %v5217, %v5331
      %v5363 = vmul.f32 %v5218, %v5331
      %v5364 = vlaneseq
      %v5365 = vshrl.u32 %v5364, 7
      %v5366 = vadd.s32 %v5365, 8
      %v5367 = vadd.s32 %v5365, 16
      %v5368 = vadd.s32 %v5365, 24
      %v5369 = vadd.s32 %v5365, 32
      %v5370 = vadd.s32 %v5365, 40
      %v5371 = vadd.s32 %v5365, 48
      %v5372 = vadd.s32 %v5365, 56
      %v5373 = vadd.s32 %v5365, 64
      %v5374 = vadd.s32 %v5365, 72
      %v5375 = vadd.s32 %v5365, 80
      %v5376 = vadd.s32 %v5365, 88
      %v5377 = vadd.s32 %v5365, 96
      %v5378 = vadd.s32 %v5365, 104
      %v5379 = vadd.s32 %v5365, 112
      %v5380 = vadd.s32 %v5365, 120
      %v5381 = vadd.s32 %v5365, 128
      %v5382 = vadd.s32 %v5365, 136
      %v5383 = vadd.s32 %v5365, 144
      %v5384 = vadd.s32 %v5365, 152
      %v5385 = vadd.s32 %v5365, 160
      %v5386 = vadd.s32 %v5365, 168
      %v5387 = vadd.s32 %v5365, 176
      %v5388 = vadd.s32 %v5365, 184
      %v5389 = vadd.s32 %v5365, 192
      %v5390 = vadd.s32 %v5365, 200
      %v5391 = vadd.s32 %v5365, 208
      %v5392 = vadd.s32 %v5365, 216
      %v5393 = vadd.s32 %v5365, 224
      %v5394 = vadd.s32 %v5365, 232
      %v5395 = vadd.s32 %v5365, 240
      %v5396 = vadd.s32 %v5365, 248
      %v5397 = vand.u32 %v5365, 15
      %v5398 = vand.u32 %v5366, 15
      %v5399 = vand.u32 %v5367, 15
      %v5400 = vand.u32 %v5368, 15
      %v5401 = vand.u32 %v5369, 15
      %v5402 = vand.u32 %v5370, 15
      %v5403 = vand.u32 %v5371, 15
      %v5404 = vand.u32 %v5372, 15
      %v5405 = vand.u32 %v5373, 15
      %v5406 = vand.u32 %v5374, 15
      %v5407 = vand.u32 %v5375, 15
      %v5408 = vand.u32 %v5376, 15
      %v5409 = vand.u32 %v5377, 15
      %v5410 = vand.u32 %v5378, 15
      %v5411 = vand.u32 %v5379, 15
      %v5412 = vand.u32 %v5380, 15
      %v5413 = vand.u32 %v5381, 15
      %v5414 = vand.u32 %v5382, 15
      %v5415 = vand.u32 %v5383, 15
      %v5416 = vand.u32 %v5384, 15
      %v5417 = vand.u32 %v5385, 15
      %v5418 = vand.u32 %v5386, 15
      %v5419 = vand.u32 %v5387, 15
      %v5420 = vand.u32 %v5388, 15
      %v5421 = vand.u32 %v5389, 15
      %v5422 = vand.u32 %v5390, 15
      %v5423 = vand.u32 %v5391, 15
      %v5424 = vand.u32 %v5392, 15
      %v5425 = vand.u32 %v5393, 15
      %v5426 = vand.u32 %v5394, 15
      %v5427 = vand.u32 %v5395, 15
      %v5428 = vand.u32 %v5396, 15
      %vm5429 = vcmp.ge.s32.totalorder %v5397, 1
      %vm5430 = vcmp.ge.s32.totalorder %v5398, 1
      %vm5431 = vcmp.ge.s32.totalorder %v5399, 1
      %vm5432 = vcmp.ge.s32.totalorder %v5400, 1
      %vm5433 = vcmp.ge.s32.totalorder %v5401, 1
      %vm5434 = vcmp.ge.s32.totalorder %v5402, 1
      %vm5435 = vcmp.ge.s32.totalorder %v5403, 1
      %vm5436 = vcmp.ge.s32.totalorder %v5404, 1
      %vm5437 = vcmp.ge.s32.totalorder %v5405, 1
      %vm5438 = vcmp.ge.s32.totalorder %v5406, 1
      %vm5439 = vcmp.ge.s32.totalorder %v5407, 1
      %vm5440 = vcmp.ge.s32.totalorder %v5408, 1
      %vm5441 = vcmp.ge.s32.totalorder %v5409, 1
      %vm5442 = vcmp.ge.s32.totalorder %v5410, 1
      %vm5443 = vcmp.ge.s32.totalorder %v5411, 1
      %vm5444 = vcmp.ge.s32.totalorder %v5412, 1
      %vm5445 = vcmp.ge.s32.totalorder %v5413, 1
      %vm5446 = vcmp.ge.s32.totalorder %v5414, 1
      %vm5447 = vcmp.ge.s32.totalorder %v5415, 1
      %vm5448 = vcmp.ge.s32.totalorder %v5416, 1
      %vm5449 = vcmp.ge.s32.totalorder %v5417, 1
      %vm5450 = vcmp.ge.s32.totalorder %v5418, 1
      %vm5451 = vcmp.ge.s32.totalorder %v5419, 1
      %vm5452 = vcmp.ge.s32.totalorder %v5420, 1
      %vm5453 = vcmp.ge.s32.totalorder %v5421, 1
      %vm5454 = vcmp.ge.s32.totalorder %v5422, 1
      %vm5455 = vcmp.ge.s32.totalorder %v5423, 1
      %vm5456 = vcmp.ge.s32.totalorder %v5424, 1
      %vm5457 = vcmp.ge.s32.totalorder %v5425, 1
      %vm5458 = vcmp.ge.s32.totalorder %v5426, 1
      %vm5459 = vcmp.ge.s32.totalorder %v5427, 1
      %vm5460 = vcmp.ge.s32.totalorder %v5428, 1
      %v5493 = vrot.slane %v5332, 7
      %v5494 = vrot.slane %v5333, 7
      %v5495 = vsel %vm2197, %v5493, %v5494
      %v5496 = vrot.slane %v5334, 7
      %v5497 = vsel %vm2197, %v5494, %v5496
      %v5498 = vrot.slane %v5335, 7
      %v5499 = vsel %vm2197, %v5496, %v5498
      %v5500 = vrot.slane %v5336, 7
      %v5501 = vsel %vm2197, %v5498, %v5500
      %v5502 = vrot.slane %v5337, 7
      %v5503 = vsel %vm2197, %v5500, %v5502
      %v5504 = vrot.slane %v5338, 7
      %v5505 = vsel %vm2197, %v5502, %v5504
      %v5506 = vrot.slane %v5339, 7
      %v5507 = vsel %vm2197, %v5504, %v5506
      %v5508 = vrot.slane %v5340, 7
      %v5509 = vsel %vm2197, %v5506, %v5508
      %v5510 = vrot.slane %v5341, 7
      %v5511 = vsel %vm2197, %v5508, %v5510
      %v5512 = vrot.slane %v5342, 7
      %v5513 = vsel %vm2197, %v5510, %v5512
      %v5514 = vrot.slane %v5343, 7
      %v5515 = vsel %vm2197, %v5512, %v5514
      %v5516 = vrot.slane %v5344, 7
      %v5517 = vsel %vm2197, %v5514, %v5516
      %v5518 = vrot.slane %v5345, 7
      %v5519 = vsel %vm2197, %v5516, %v5518
      %v5520 = vrot.slane %v5346, 7
      %v5521 = vsel %vm2197, %v5518, %v5520
      %v5522 = vrot.slane %v5347, 7
      %v5523 = vsel %vm2197, %v5520, %v5522
      %v5524 = vrot.slane %v5348, 7
      %v5525 = vsel %vm2197, %v5522, %v5524
      %v5526 = vrot.slane %v5349, 7
      %v5527 = vsel %vm2197, %v5524, %v5526
      %v5528 = vrot.slane %v5350, 7
      %v5529 = vsel %vm2197, %v5526, %v5528
      %v5530 = vrot.slane %v5351, 7
      %v5531 = vsel %vm2197, %v5528, %v5530
      %v5532 = vrot.slane %v5352, 7
      %v5533 = vsel %vm2197, %v5530, %v5532
      %v5534 = vrot.slane %v5353, 7
      %v5535 = vsel %vm2197, %v5532, %v5534
      %v5536 = vrot.slane %v5354, 7
      %v5537 = vsel %vm2197, %v5534, %v5536
      %v5538 = vrot.slane %v5355, 7
      %v5539 = vsel %vm2197, %v5536, %v5538
      %v5540 = vrot.slane %v5356, 7
      %v5541 = vsel %vm2197, %v5538, %v5540
      %v5542 = vrot.slane %v5357, 7
      %v5543 = vsel %vm2197, %v5540, %v5542
      %v5544 = vrot.slane %v5358, 7
      %v5545 = vsel %vm2197, %v5542, %v5544
      %v5546 = vrot.slane %v5359, 7
      %v5547 = vsel %vm2197, %v5544, %v5546
      %v5548 = vrot.slane %v5360, 7
      %v5549 = vsel %vm2197, %v5546, %v5548
      %v5550 = vrot.slane %v5361, 7
      %v5551 = vsel %vm2197, %v5548, %v5550
      %v5552 = vrot.slane %v5362, 7
      %v5553 = vsel %vm2197, %v5550, %v5552
      %v5554 = vrot.slane %v5363, 7
      %v5555 = vsel %vm2197, %v5552, %v5554
      %v5588 = vsel %vm2197, 0.0, %v5493
      %v5589 = vsel %vm5429, 1, 0
      %v5590 = vsel %vm5430, 1, 0
      %v5591 = vsel %vm5431, 1, 0
      %v5592 = vsel %vm5432, 1, 0
      %v5593 = vsel %vm5433, 1, 0
      %v5594 = vsel %vm5434, 1, 0
      %v5595 = vsel %vm5435, 1, 0
      %v5596 = vsel %vm5436, 1, 0
      %v5597 = vsel %vm5437, 1, 0
      %v5598 = vsel %vm5438, 1, 0
      %v5599 = vsel %vm5439, 1, 0
      %v5600 = vsel %vm5440, 1, 0
      %v5601 = vsel %vm5441, 1, 0
      %v5602 = vsel %vm5442, 1, 0
      %v5603 = vsel %vm5443, 1, 0
      %v5604 = vsel %vm5444, 1, 0
      %v5605 = vsel %vm5445, 1, 0
      %v5606 = vsel %vm5446, 1, 0
      %v5607 = vsel %vm5447, 1, 0
      %v5608 = vsel %vm5448, 1, 0
      %v5609 = vsel %vm5449, 1, 0
      %v5610 = vsel %vm5450, 1, 0
      %v5611 = vsel %vm5451, 1, 0
      %v5612 = vsel %vm5452, 1, 0
      %v5613 = vsel %vm5453, 1, 0
      %v5614 = vsel %vm5454, 1, 0
      %v5615 = vsel %vm5455, 1, 0
      %v5616 = vsel %vm5456, 1, 0
      %v5617 = vsel %vm5457, 1, 0
      %v5618 = vsel %vm5458, 1, 0
      %v5619 = vsel %vm5459, 1, 0
      %v5620 = vsel %vm5460, 1, 0
      %vm5621 = vcmp.eq.s32.totalorder %v5589, 1
      %vm5622 = vcmp.eq.s32.totalorder %v5590, 1
      %vm5623 = vcmp.eq.s32.totalorder %v5591, 1
      %vm5624 = vcmp.eq.s32.totalorder %v5592, 1
      %vm5625 = vcmp.eq.s32.totalorder %v5593, 1
      %vm5626 = vcmp.eq.s32.totalorder %v5594, 1
      %vm5627 = vcmp.eq.s32.totalorder %v5595, 1
      %vm5628 = vcmp.eq.s32.totalorder %v5596, 1
      %vm5629 = vcmp.eq.s32.totalorder %v5597, 1
      %vm5630 = vcmp.eq.s32.totalorder %v5598, 1
      %vm5631 = vcmp.eq.s32.totalorder %v5599, 1
      %vm5632 = vcmp.eq.s32.totalorder %v5600, 1
      %vm5633 = vcmp.eq.s32.totalorder %v5601, 1
      %vm5634 = vcmp.eq.s32.totalorder %v5602, 1
      %vm5635 = vcmp.eq.s32.totalorder %v5603, 1
      %vm5636 = vcmp.eq.s32.totalorder %v5604, 1
      %vm5637 = vcmp.eq.s32.totalorder %v5605, 1
      %vm5638 = vcmp.eq.s32.totalorder %v5606, 1
      %vm5639 = vcmp.eq.s32.totalorder %v5607, 1
      %vm5640 = vcmp.eq.s32.totalorder %v5608, 1
      %vm5641 = vcmp.eq.s32.totalorder %v5609, 1
      %vm5642 = vcmp.eq.s32.totalorder %v5610, 1
      %vm5643 = vcmp.eq.s32.totalorder %v5611, 1
      %vm5644 = vcmp.eq.s32.totalorder %v5612, 1
      %vm5645 = vcmp.eq.s32.totalorder %v5613, 1
      %vm5646 = vcmp.eq.s32.totalorder %v5614, 1
      %vm5647 = vcmp.eq.s32.totalorder %v5615, 1
      %vm5648 = vcmp.eq.s32.totalorder %v5616, 1
      %vm5649 = vcmp.eq.s32.totalorder %v5617, 1
      %vm5650 = vcmp.eq.s32.totalorder %v5618, 1
      %vm5651 = vcmp.eq.s32.totalorder %v5619, 1
      %vm5652 = vcmp.eq.s32.totalorder %v5620, 1
      %v5653 = vsel %vm5621, %v5588, 0.0
      %v5654 = vsel %vm5622, %v5495, 0.0
      %v5655 = vsel %vm5623, %v5497, 0.0
      %v5656 = vsel %vm5624, %v5499, 0.0
      %v5657 = vsel %vm5625, %v5501, 0.0
      %v5658 = vsel %vm5626, %v5503, 0.0
      %v5659 = vsel %vm5627, %v5505, 0.0
      %v5660 = vsel %vm5628, %v5507, 0.0
      %v5661 = vsel %vm5629, %v5509, 0.0
      %v5662 = vsel %vm5630, %v5511, 0.0
      %v5663 = vsel %vm5631, %v5513, 0.0
      %v5664 = vsel %vm5632, %v5515, 0.0
      %v5665 = vsel %vm5633, %v5517, 0.0
      %v5666 = vsel %vm5634, %v5519, 0.0
      %v5667 = vsel %vm5635, %v5521, 0.0
      %v5668 = vsel %vm5636, %v5523, 0.0
      %v5669 = vsel %vm5637, %v5525, 0.0
      %v5670 = vsel %vm5638, %v5527, 0.0
      %v5671 = vsel %vm5639, %v5529, 0.0
      %v5672 = vsel %vm5640, %v5531, 0.0
      %v5673 = vsel %vm5641, %v5533, 0.0
      %v5674 = vsel %vm5642, %v5535, 0.0
      %v5675 = vsel %vm5643, %v5537, 0.0
      %v5676 = vsel %vm5644, %v5539, 0.0
      %v5677 = vsel %vm5645, %v5541, 0.0
      %v5678 = vsel %vm5646, %v5543, 0.0
      %v5679 = vsel %vm5647, %v5545, 0.0
      %v5680 = vsel %vm5648, %v5547, 0.0
      %v5681 = vsel %vm5649, %v5549, 0.0
      %v5682 = vsel %vm5650, %v5551, 0.0
      %v5683 = vsel %vm5651, %v5553, 0.0
      %v5684 = vsel %vm5652, %v5555, 0.0
      %vm5685 = vcmp.lt.s32.totalorder %v5397, 15
      %vm5686 = vcmp.lt.s32.totalorder %v5398, 15
      %vm5687 = vcmp.lt.s32.totalorder %v5399, 15
      %vm5688 = vcmp.lt.s32.totalorder %v5400, 15
      %vm5689 = vcmp.lt.s32.totalorder %v5401, 15
      %vm5690 = vcmp.lt.s32.totalorder %v5402, 15
      %vm5691 = vcmp.lt.s32.totalorder %v5403, 15
      %vm5692 = vcmp.lt.s32.totalorder %v5404, 15
      %vm5693 = vcmp.lt.s32.totalorder %v5405, 15
      %vm5694 = vcmp.lt.s32.totalorder %v5406, 15
      %vm5695 = vcmp.lt.s32.totalorder %v5407, 15
      %vm5696 = vcmp.lt.s32.totalorder %v5408, 15
      %vm5697 = vcmp.lt.s32.totalorder %v5409, 15
      %vm5698 = vcmp.lt.s32.totalorder %v5410, 15
      %vm5699 = vcmp.lt.s32.totalorder %v5411, 15
      %vm5700 = vcmp.lt.s32.totalorder %v5412, 15
      %vm5701 = vcmp.lt.s32.totalorder %v5413, 15
      %vm5702 = vcmp.lt.s32.totalorder %v5414, 15
      %vm5703 = vcmp.lt.s32.totalorder %v5415, 15
      %vm5704 = vcmp.lt.s32.totalorder %v5416, 15
      %vm5705 = vcmp.lt.s32.totalorder %v5417, 15
      %vm5706 = vcmp.lt.s32.totalorder %v5418, 15
      %vm5707 = vcmp.lt.s32.totalorder %v5419, 15
      %vm5708 = vcmp.lt.s32.totalorder %v5420, 15
      %vm5709 = vcmp.lt.s32.totalorder %v5421, 15
      %vm5710 = vcmp.lt.s32.totalorder %v5422, 15
      %vm5711 = vcmp.lt.s32.totalorder %v5423, 15
      %vm5712 = vcmp.lt.s32.totalorder %v5424, 15
      %vm5713 = vcmp.lt.s32.totalorder %v5425, 15
      %vm5714 = vcmp.lt.s32.totalorder %v5426, 15
      %vm5715 = vcmp.lt.s32.totalorder %v5427, 15
      %vm5716 = vcmp.lt.s32.totalorder %v5428, 15
      %v5717 = vrot.slane %v5332, 1
      %v5718 = vrot.slane %v5333, 1
      %v5719 = vsel %vm2294, %v5717, %v5718
      %v5720 = vrot.slane %v5334, 1
      %v5721 = vsel %vm2294, %v5718, %v5720
      %v5722 = vrot.slane %v5335, 1
      %v5723 = vsel %vm2294, %v5720, %v5722
      %v5724 = vrot.slane %v5336, 1
      %v5725 = vsel %vm2294, %v5722, %v5724
      %v5726 = vrot.slane %v5337, 1
      %v5727 = vsel %vm2294, %v5724, %v5726
      %v5728 = vrot.slane %v5338, 1
      %v5729 = vsel %vm2294, %v5726, %v5728
      %v5730 = vrot.slane %v5339, 1
      %v5731 = vsel %vm2294, %v5728, %v5730
      %v5732 = vrot.slane %v5340, 1
      %v5733 = vsel %vm2294, %v5730, %v5732
      %v5734 = vrot.slane %v5341, 1
      %v5735 = vsel %vm2294, %v5732, %v5734
      %v5736 = vrot.slane %v5342, 1
      %v5737 = vsel %vm2294, %v5734, %v5736
      %v5738 = vrot.slane %v5343, 1
      %v5739 = vsel %vm2294, %v5736, %v5738
      %v5740 = vrot.slane %v5344, 1
      %v5741 = vsel %vm2294, %v5738, %v5740
      %v5742 = vrot.slane %v5345, 1
      %v5743 = vsel %vm2294, %v5740, %v5742
      %v5744 = vrot.slane %v5346, 1
      %v5745 = vsel %vm2294, %v5742, %v5744
      %v5746 = vrot.slane %v5347, 1
      %v5747 = vsel %vm2294, %v5744, %v5746
      %v5748 = vrot.slane %v5348, 1
      %v5749 = vsel %vm2294, %v5746, %v5748
      %v5750 = vrot.slane %v5349, 1
      %v5751 = vsel %vm2294, %v5748, %v5750
      %v5752 = vrot.slane %v5350, 1
      %v5753 = vsel %vm2294, %v5750, %v5752
      %v5754 = vrot.slane %v5351, 1
      %v5755 = vsel %vm2294, %v5752, %v5754
      %v5756 = vrot.slane %v5352, 1
      %v5757 = vsel %vm2294, %v5754, %v5756
      %v5758 = vrot.slane %v5353, 1
      %v5759 = vsel %vm2294, %v5756, %v5758
      %v5760 = vrot.slane %v5354, 1
      %v5761 = vsel %vm2294, %v5758, %v5760
      %v5762 = vrot.slane %v5355, 1
      %v5763 = vsel %vm2294, %v5760, %v5762
      %v5764 = vrot.slane %v5356, 1
      %v5765 = vsel %vm2294, %v5762, %v5764
      %v5766 = vrot.slane %v5357, 1
      %v5767 = vsel %vm2294, %v5764, %v5766
      %v5768 = vrot.slane %v5358, 1
      %v5769 = vsel %vm2294, %v5766, %v5768
      %v5770 = vrot.slane %v5359, 1
      %v5771 = vsel %vm2294, %v5768, %v5770
      %v5772 = vrot.slane %v5360, 1
      %v5773 = vsel %vm2294, %v5770, %v5772
      %v5774 = vrot.slane %v5361, 1
      %v5775 = vsel %vm2294, %v5772, %v5774
      %v5776 = vrot.slane %v5362, 1
      %v5777 = vsel %vm2294, %v5774, %v5776
      %v5778 = vrot.slane %v5363, 1
      %v5779 = vsel %vm2294, %v5776, %v5778
      %v5812 = vsel %vm2294, %v5778, 0.0
      %v5813 = vsel %vm5685, 1, 0
      %v5814 = vsel %vm5686, 1, 0
      %v5815 = vsel %vm5687, 1, 0
      %v5816 = vsel %vm5688, 1, 0
      %v5817 = vsel %vm5689, 1, 0
      %v5818 = vsel %vm5690, 1, 0
      %v5819 = vsel %vm5691, 1, 0
      %v5820 = vsel %vm5692, 1, 0
      %v5821 = vsel %vm5693, 1, 0
      %v5822 = vsel %vm5694, 1, 0
      %v5823 = vsel %vm5695, 1, 0
      %v5824 = vsel %vm5696, 1, 0
      %v5825 = vsel %vm5697, 1, 0
      %v5826 = vsel %vm5698, 1, 0
      %v5827 = vsel %vm5699, 1, 0
      %v5828 = vsel %vm5700, 1, 0
      %v5829 = vsel %vm5701, 1, 0
      %v5830 = vsel %vm5702, 1, 0
      %v5831 = vsel %vm5703, 1, 0
      %v5832 = vsel %vm5704, 1, 0
      %v5833 = vsel %vm5705, 1, 0
      %v5834 = vsel %vm5706, 1, 0
      %v5835 = vsel %vm5707, 1, 0
      %v5836 = vsel %vm5708, 1, 0
      %v5837 = vsel %vm5709, 1, 0
      %v5838 = vsel %vm5710, 1, 0
      %v5839 = vsel %vm5711, 1, 0
      %v5840 = vsel %vm5712, 1, 0
      %v5841 = vsel %vm5713, 1, 0
      %v5842 = vsel %vm5714, 1, 0
      %v5843 = vsel %vm5715, 1, 0
      %v5844 = vsel %vm5716, 1, 0
      %vm5845 = vcmp.eq.s32.totalorder %v5813, 1
      %vm5846 = vcmp.eq.s32.totalorder %v5814, 1
      %vm5847 = vcmp.eq.s32.totalorder %v5815, 1
      %vm5848 = vcmp.eq.s32.totalorder %v5816, 1
      %vm5849 = vcmp.eq.s32.totalorder %v5817, 1
      %vm5850 = vcmp.eq.s32.totalorder %v5818, 1
      %vm5851 = vcmp.eq.s32.totalorder %v5819, 1
      %vm5852 = vcmp.eq.s32.totalorder %v5820, 1
      %vm5853 = vcmp.eq.s32.totalorder %v5821, 1
      %vm5854 = vcmp.eq.s32.totalorder %v5822, 1
      %vm5855 = vcmp.eq.s32.totalorder %v5823, 1
      %vm5856 = vcmp.eq.s32.totalorder %v5824, 1
      %vm5857 = vcmp.eq.s32.totalorder %v5825, 1
      %vm5858 = vcmp.eq.s32.totalorder %v5826, 1
      %vm5859 = vcmp.eq.s32.totalorder %v5827, 1
      %vm5860 = vcmp.eq.s32.totalorder %v5828, 1
      %vm5861 = vcmp.eq.s32.totalorder %v5829, 1
      %vm5862 = vcmp.eq.s32.totalorder %v5830, 1
      %vm5863 = vcmp.eq.s32.totalorder %v5831, 1
      %vm5864 = vcmp.eq.s32.totalorder %v5832, 1
      %vm5865 = vcmp.eq.s32.totalorder %v5833, 1
      %vm5866 = vcmp.eq.s32.totalorder %v5834, 1
      %vm5867 = vcmp.eq.s32.totalorder %v5835, 1
      %vm5868 = vcmp.eq.s32.totalorder %v5836, 1
      %vm5869 = vcmp.eq.s32.totalorder %v5837, 1
      %vm5870 = vcmp.eq.s32.totalorder %v5838, 1
      %vm5871 = vcmp.eq.s32.totalorder %v5839, 1
      %vm5872 = vcmp.eq.s32.totalorder %v5840, 1
      %vm5873 = vcmp.eq.s32.totalorder %v5841, 1
      %vm5874 = vcmp.eq.s32.totalorder %v5842, 1
      %vm5875 = vcmp.eq.s32.totalorder %v5843, 1
      %vm5876 = vcmp.eq.s32.totalorder %v5844, 1
      %v5877 = vsel %vm5845, %v5719, 0.0
      %v5878 = vsel %vm5846, %v5721, 0.0
      %v5879 = vsel %vm5847, %v5723, 0.0
      %v5880 = vsel %vm5848, %v5725, 0.0
      %v5881 = vsel %vm5849, %v5727, 0.0
      %v5882 = vsel %vm5850, %v5729, 0.0
      %v5883 = vsel %vm5851, %v5731, 0.0
      %v5884 = vsel %vm5852, %v5733, 0.0
      %v5885 = vsel %vm5853, %v5735, 0.0
      %v5886 = vsel %vm5854, %v5737, 0.0
      %v5887 = vsel %vm5855, %v5739, 0.0
      %v5888 = vsel %vm5856, %v5741, 0.0
      %v5889 = vsel %vm5857, %v5743, 0.0
      %v5890 = vsel %vm5858, %v5745, 0.0
      %v5891 = vsel %vm5859, %v5747, 0.0
      %v5892 = vsel %vm5860, %v5749, 0.0
      %v5893 = vsel %vm5861, %v5751, 0.0
      %v5894 = vsel %vm5862, %v5753, 0.0
      %v5895 = vsel %vm5863, %v5755, 0.0
      %v5896 = vsel %vm5864, %v5757, 0.0
      %v5897 = vsel %vm5865, %v5759, 0.0
      %v5898 = vsel %vm5866, %v5761, 0.0
      %v5899 = vsel %vm5867, %v5763, 0.0
      %v5900 = vsel %vm5868, %v5765, 0.0
      %v5901 = vsel %vm5869, %v5767, 0.0
      %v5902 = vsel %vm5870, %v5769, 0.0
      %v5903 = vsel %vm5871, %v5771, 0.0
      %v5904 = vsel %vm5872, %v5773, 0.0
      %v5905 = vsel %vm5873, %v5775, 0.0
      %v5906 = vsel %vm5874, %v5777, 0.0
      %v5907 = vsel %vm5875, %v5779, 0.0
      %v5908 = vsel %vm5876, %v5812, 0.0
      %v5909 = vld [vmem:[%s8] sm:$0x1]
      %v5910 = vperm.slane %v5909, 0
      %v5911 = vmul.f32 %v5910, %v5653
      %v5912 = vmul.f32 %v5910, %v5654
      %v5913 = vmul.f32 %v5910, %v5655
      %v5914 = vmul.f32 %v5910, %v5656
      %v5915 = vmul.f32 %v5910, %v5657
      %v5916 = vmul.f32 %v5910, %v5658
      %v5917 = vmul.f32 %v5910, %v5659
      %v5918 = vmul.f32 %v5910, %v5660
      %v5919 = vmul.f32 %v5910, %v5661
      %v5920 = vmul.f32 %v5910, %v5662
      %v5921 = vmul.f32 %v5910, %v5663
      %v5922 = vmul.f32 %v5910, %v5664
      %v5923 = vmul.f32 %v5910, %v5665
      %v5924 = vmul.f32 %v5910, %v5666
      %v5925 = vmul.f32 %v5910, %v5667
      %v5926 = vmul.f32 %v5910, %v5668
      %v5927 = vmul.f32 %v5910, %v5669
      %v5928 = vmul.f32 %v5910, %v5670
      %v5929 = vmul.f32 %v5910, %v5671
      %v5930 = vmul.f32 %v5910, %v5672
      %v5931 = vmul.f32 %v5910, %v5673
      %v5932 = vmul.f32 %v5910, %v5674
      %v5933 = vmul.f32 %v5910, %v5675
      %v5934 = vmul.f32 %v5910, %v5676
      %v5935 = vmul.f32 %v5910, %v5677
      %v5936 = vmul.f32 %v5910, %v5678
      %v5937 = vmul.f32 %v5910, %v5679
      %v5938 = vmul.f32 %v5910, %v5680
      %v5939 = vmul.f32 %v5910, %v5681
      %v5940 = vmul.f32 %v5910, %v5682
      %v5941 = vld [vmem:[%s8 + $0x1] sm:$0x1]
      %v5942 = vperm.slane %v5941, 0
      %v5943 = vmul.f32 %v5942, %v5332
      %v5944 = vmul.f32 %v5942, %v5333
      %v5945 = vmul.f32 %v5942, %v5334
      %v5946 = vmul.f32 %v5942, %v5335
      %v5947 = vmul.f32 %v5942, %v5336
      %v5948 = vmul.f32 %v5942, %v5337
      %v5949 = vmul.f32 %v5942, %v5338
      %v5950 = vmul.f32 %v5942, %v5339
      %v5951 = vmul.f32 %v5942, %v5340
      %v5952 = vmul.f32 %v5942, %v5341
      %v5953 = vmul.f32 %v5942, %v5342
      %v5954 = vmul.f32 %v5942, %v5343
      %v5955 = vmul.f32 %v5942, %v5344
      %v5956 = vmul.f32 %v5942, %v5345
      %v5957 = vmul.f32 %v5942, %v5346
      %v5958 = vmul.f32 %v5942, %v5347
      %v5959 = vmul.f32 %v5942, %v5348
      %v5960 = vmul.f32 %v5942, %v5349
      %v5961 = vmul.f32 %v5942, %v5350
      %v5962 = vmul.f32 %v5942, %v5351
      %v5963 = vmul.f32 %v5942, %v5352
      %v5964 = vmul.f32 %v5942, %v5353
      %v5965 = vmul.f32 %v5942, %v5354
      %v5966 = vmul.f32 %v5942, %v5355
      %v5967 = vmul.f32 %v5942, %v5356
      %v5968 = vmul.f32 %v5942, %v5357
      %v5969 = vmul.f32 %v5942, %v5358
      %v5970 = vmul.f32 %v5942, %v5359
      %v5971 = vmul.f32 %v5942, %v5360
      %v5972 = vmul.f32 %v5942, %v5361
      %v5973 = vadd.f32 %v5911, %v5943
      %v5974 = vadd.f32 %v5912, %v5944
      %v5975 = vadd.f32 %v5913, %v5945
      %v5976 = vadd.f32 %v5914, %v5946
      %v5977 = vadd.f32 %v5915, %v5947
      %v5978 = vadd.f32 %v5916, %v5948
      %v5979 = vadd.f32 %v5917, %v5949
      %v5980 = vadd.f32 %v5918, %v5950
      %v5981 = vadd.f32 %v5919, %v5951
      %v5982 = vadd.f32 %v5920, %v5952
      %v5983 = vadd.f32 %v5921, %v5953
      %v5984 = vadd.f32 %v5922, %v5954
      %v5985 = vadd.f32 %v5923, %v5955
      %v5986 = vadd.f32 %v5924, %v5956
      %v5987 = vadd.f32 %v5925, %v5957
      %v5988 = vadd.f32 %v5926, %v5958
      %v5989 = vadd.f32 %v5927, %v5959
      %v5990 = vadd.f32 %v5928, %v5960
      %v5991 = vadd.f32 %v5929, %v5961
      %v5992 = vadd.f32 %v5930, %v5962
      %v5993 = vadd.f32 %v5931, %v5963
      %v5994 = vadd.f32 %v5932, %v5964
      %v5995 = vadd.f32 %v5933, %v5965
      %v5996 = vadd.f32 %v5934, %v5966
      %v5997 = vadd.f32 %v5935, %v5967
      %v5998 = vadd.f32 %v5936, %v5968
      %v5999 = vadd.f32 %v5937, %v5969
      %v6000 = vadd.f32 %v5938, %v5970
      %v6001 = vadd.f32 %v5939, %v5971
      %v6002 = vadd.f32 %v5940, %v5972
      %v6003 = vld [vmem:[%s8 + $0x2] sm:$0x1]
      %v6004 = vperm.slane %v6003, 0
      %v6005 = vmul.f32 %v6004, %v5877
      %v6006 = vmul.f32 %v6004, %v5878
      %v6007 = vmul.f32 %v6004, %v5879
      %v6008 = vmul.f32 %v6004, %v5880
      %v6009 = vmul.f32 %v6004, %v5881
      %v6010 = vmul.f32 %v6004, %v5882
      %v6011 = vmul.f32 %v6004, %v5883
      %v6012 = vmul.f32 %v6004, %v5884
      %v6013 = vmul.f32 %v6004, %v5885
      %v6014 = vmul.f32 %v6004, %v5886
      %v6015 = vmul.f32 %v6004, %v5887
      %v6016 = vmul.f32 %v6004, %v5888
      %v6017 = vmul.f32 %v6004, %v5889
      %v6018 = vmul.f32 %v6004, %v5890
      %v6019 = vmul.f32 %v6004, %v5891
      %v6020 = vmul.f32 %v6004, %v5892
      %v6021 = vmul.f32 %v6004, %v5893
      %v6022 = vmul.f32 %v6004, %v5894
      %v6023 = vmul.f32 %v6004, %v5895
      %v6024 = vmul.f32 %v6004, %v5896
      %v6025 = vmul.f32 %v6004, %v5897
      %v6026 = vmul.f32 %v6004, %v5898
      %v6027 = vmul.f32 %v6004, %v5899
      %v6028 = vmul.f32 %v6004, %v5900
      %v6029 = vmul.f32 %v6004, %v5901
      %v6030 = vmul.f32 %v6004, %v5902
      %v6031 = vmul.f32 %v6004, %v5903
      %v6032 = vmul.f32 %v6004, %v5904
      %v6033 = vmul.f32 %v6004, %v5905
      %v6034 = vmul.f32 %v6004, %v5906
      %v6035 = vadd.f32 %v5973, %v6005
      %v6036 = vadd.f32 %v5974, %v6006
      %v6037 = vadd.f32 %v5975, %v6007
      %v6038 = vadd.f32 %v5976, %v6008
      %v6039 = vadd.f32 %v5977, %v6009
      %v6040 = vadd.f32 %v5978, %v6010
      %v6041 = vadd.f32 %v5979, %v6011
      %v6042 = vadd.f32 %v5980, %v6012
      %v6043 = vadd.f32 %v5981, %v6013
      %v6044 = vadd.f32 %v5982, %v6014
      %v6045 = vadd.f32 %v5983, %v6015
      %v6046 = vadd.f32 %v5984, %v6016
      %v6047 = vadd.f32 %v5985, %v6017
      %v6048 = vadd.f32 %v5986, %v6018
      %v6049 = vadd.f32 %v5987, %v6019
      %v6050 = vadd.f32 %v5988, %v6020
      %v6051 = vadd.f32 %v5989, %v6021
      %v6052 = vadd.f32 %v5990, %v6022
      %v6053 = vadd.f32 %v5991, %v6023
      %v6054 = vadd.f32 %v5992, %v6024
      %v6055 = vadd.f32 %v5993, %v6025
      %v6056 = vadd.f32 %v5994, %v6026
      %v6057 = vadd.f32 %v5995, %v6027
      %v6058 = vadd.f32 %v5996, %v6028
      %v6059 = vadd.f32 %v5997, %v6029
      %v6060 = vadd.f32 %v5998, %v6030
      %v6061 = vadd.f32 %v5999, %v6031
      %v6062 = vadd.f32 %v6000, %v6032
      %v6063 = vadd.f32 %v6001, %v6033
      %v6064 = vadd.f32 %v6002, %v6034
      %v6065 = vld [vmem:[%s8 + $0x3] sm:$0x1]
      %v6066 = vperm.slane %v6065, 0
      %v6067 = vmul.f32 %v6066, %v5653
      %v6068 = vmul.f32 %v6066, %v5654
      %v6069 = vmul.f32 %v6066, %v5655
      %v6070 = vmul.f32 %v6066, %v5656
      %v6071 = vmul.f32 %v6066, %v5657
      %v6072 = vmul.f32 %v6066, %v5658
      %v6073 = vmul.f32 %v6066, %v5659
      %v6074 = vmul.f32 %v6066, %v5660
      %v6075 = vmul.f32 %v6066, %v5661
      %v6076 = vmul.f32 %v6066, %v5662
      %v6077 = vmul.f32 %v6066, %v5663
      %v6078 = vmul.f32 %v6066, %v5664
      %v6079 = vmul.f32 %v6066, %v5665
      %v6080 = vmul.f32 %v6066, %v5666
      %v6081 = vmul.f32 %v6066, %v5667
      %v6082 = vmul.f32 %v6066, %v5668
      %v6083 = vmul.f32 %v6066, %v5669
      %v6084 = vmul.f32 %v6066, %v5670
      %v6085 = vmul.f32 %v6066, %v5671
      %v6086 = vmul.f32 %v6066, %v5672
      %v6087 = vmul.f32 %v6066, %v5673
      %v6088 = vmul.f32 %v6066, %v5674
      %v6089 = vmul.f32 %v6066, %v5675
      %v6090 = vmul.f32 %v6066, %v5676
      %v6091 = vmul.f32 %v6066, %v5677
      %v6092 = vmul.f32 %v6066, %v5678
      %v6093 = vmul.f32 %v6066, %v5679
      %v6094 = vmul.f32 %v6066, %v5680
      %v6095 = vmul.f32 %v6066, %v5681
      %v6096 = vmul.f32 %v6066, %v5682
      %v6097 = vmul.f32 %v6066, %v5683
      %v6098 = vmul.f32 %v6066, %v5684
      %v6099 = vld [vmem:[%s8 + $0x4] sm:$0x1]
      %v6100 = vperm.slane %v6099, 0
      %v6101 = vmul.f32 %v6100, %v5332
      %v6102 = vmul.f32 %v6100, %v5333
      %v6103 = vmul.f32 %v6100, %v5334
      %v6104 = vmul.f32 %v6100, %v5335
      %v6105 = vmul.f32 %v6100, %v5336
      %v6106 = vmul.f32 %v6100, %v5337
      %v6107 = vmul.f32 %v6100, %v5338
      %v6108 = vmul.f32 %v6100, %v5339
      %v6109 = vmul.f32 %v6100, %v5340
      %v6110 = vmul.f32 %v6100, %v5341
      %v6111 = vmul.f32 %v6100, %v5342
      %v6112 = vmul.f32 %v6100, %v5343
      %v6113 = vmul.f32 %v6100, %v5344
      %v6114 = vmul.f32 %v6100, %v5345
      %v6115 = vmul.f32 %v6100, %v5346
      %v6116 = vmul.f32 %v6100, %v5347
      %v6117 = vmul.f32 %v6100, %v5348
      %v6118 = vmul.f32 %v6100, %v5349
      %v6119 = vmul.f32 %v6100, %v5350
      %v6120 = vmul.f32 %v6100, %v5351
      %v6121 = vmul.f32 %v6100, %v5352
      %v6122 = vmul.f32 %v6100, %v5353
      %v6123 = vmul.f32 %v6100, %v5354
      %v6124 = vmul.f32 %v6100, %v5355
      %v6125 = vmul.f32 %v6100, %v5356
      %v6126 = vmul.f32 %v6100, %v5357
      %v6127 = vmul.f32 %v6100, %v5358
      %v6128 = vmul.f32 %v6100, %v5359
      %v6129 = vmul.f32 %v6100, %v5360
      %v6130 = vmul.f32 %v6100, %v5361
      %v6131 = vmul.f32 %v6100, %v5362
      %v6132 = vmul.f32 %v6100, %v5363
      %v6133 = vadd.f32 %v6067, %v6101
      %v6134 = vadd.f32 %v6068, %v6102
      %v6135 = vadd.f32 %v6069, %v6103
      %v6136 = vadd.f32 %v6070, %v6104
      %v6137 = vadd.f32 %v6071, %v6105
      %v6138 = vadd.f32 %v6072, %v6106
      %v6139 = vadd.f32 %v6073, %v6107
      %v6140 = vadd.f32 %v6074, %v6108
      %v6141 = vadd.f32 %v6075, %v6109
      %v6142 = vadd.f32 %v6076, %v6110
      %v6143 = vadd.f32 %v6077, %v6111
      %v6144 = vadd.f32 %v6078, %v6112
      %v6145 = vadd.f32 %v6079, %v6113
      %v6146 = vadd.f32 %v6080, %v6114
      %v6147 = vadd.f32 %v6081, %v6115
      %v6148 = vadd.f32 %v6082, %v6116
      %v6149 = vadd.f32 %v6083, %v6117
      %v6150 = vadd.f32 %v6084, %v6118
      %v6151 = vadd.f32 %v6085, %v6119
      %v6152 = vadd.f32 %v6086, %v6120
      %v6153 = vadd.f32 %v6087, %v6121
      %v6154 = vadd.f32 %v6088, %v6122
      %v6155 = vadd.f32 %v6089, %v6123
      %v6156 = vadd.f32 %v6090, %v6124
      %v6157 = vadd.f32 %v6091, %v6125
      %v6158 = vadd.f32 %v6092, %v6126
      %v6159 = vadd.f32 %v6093, %v6127
      %v6160 = vadd.f32 %v6094, %v6128
      %v6161 = vadd.f32 %v6095, %v6129
      %v6162 = vadd.f32 %v6096, %v6130
      %v6163 = vadd.f32 %v6097, %v6131
      %v6164 = vadd.f32 %v6098, %v6132
      %v6165 = vld [vmem:[%s8 + $0x5] sm:$0x1]
      %v6166 = vperm.slane %v6165, 0
      %v6167 = vmul.f32 %v6166, %v5877
      %v6168 = vmul.f32 %v6166, %v5878
      %v6169 = vmul.f32 %v6166, %v5879
      %v6170 = vmul.f32 %v6166, %v5880
      %v6171 = vmul.f32 %v6166, %v5881
      %v6172 = vmul.f32 %v6166, %v5882
      %v6173 = vmul.f32 %v6166, %v5883
      %v6174 = vmul.f32 %v6166, %v5884
      %v6175 = vmul.f32 %v6166, %v5885
      %v6176 = vmul.f32 %v6166, %v5886
      %v6177 = vmul.f32 %v6166, %v5887
      %v6178 = vmul.f32 %v6166, %v5888
      %v6179 = vmul.f32 %v6166, %v5889
      %v6180 = vmul.f32 %v6166, %v5890
      %v6181 = vmul.f32 %v6166, %v5891
      %v6182 = vmul.f32 %v6166, %v5892
      %v6183 = vmul.f32 %v6166, %v5893
      %v6184 = vmul.f32 %v6166, %v5894
      %v6185 = vmul.f32 %v6166, %v5895
      %v6186 = vmul.f32 %v6166, %v5896
      %v6187 = vmul.f32 %v6166, %v5897
      %v6188 = vmul.f32 %v6166, %v5898
      %v6189 = vmul.f32 %v6166, %v5899
      %v6190 = vmul.f32 %v6166, %v5900
      %v6191 = vmul.f32 %v6166, %v5901
      %v6192 = vmul.f32 %v6166, %v5902
      %v6193 = vmul.f32 %v6166, %v5903
      %v6194 = vmul.f32 %v6166, %v5904
      %v6195 = vmul.f32 %v6166, %v5905
      %v6196 = vmul.f32 %v6166, %v5906
      %v6197 = vmul.f32 %v6166, %v5907
      %v6198 = vmul.f32 %v6166, %v5908
      %v6199 = vadd.f32 %v6133, %v6167
      %v6200 = vadd.f32 %v6134, %v6168
      %v6201 = vadd.f32 %v6135, %v6169
      %v6202 = vadd.f32 %v6136, %v6170
      %v6203 = vadd.f32 %v6137, %v6171
      %v6204 = vadd.f32 %v6138, %v6172
      %v6205 = vadd.f32 %v6139, %v6173
      %v6206 = vadd.f32 %v6140, %v6174
      %v6207 = vadd.f32 %v6141, %v6175
      %v6208 = vadd.f32 %v6142, %v6176
      %v6209 = vadd.f32 %v6143, %v6177
      %v6210 = vadd.f32 %v6144, %v6178
      %v6211 = vadd.f32 %v6145, %v6179
      %v6212 = vadd.f32 %v6146, %v6180
      %v6213 = vadd.f32 %v6147, %v6181
      %v6214 = vadd.f32 %v6148, %v6182
      %v6215 = vadd.f32 %v6149, %v6183
      %v6216 = vadd.f32 %v6150, %v6184
      %v6217 = vadd.f32 %v6151, %v6185
      %v6218 = vadd.f32 %v6152, %v6186
      %v6219 = vadd.f32 %v6153, %v6187
      %v6220 = vadd.f32 %v6154, %v6188
      %v6221 = vadd.f32 %v6155, %v6189
      %v6222 = vadd.f32 %v6156, %v6190
      %v6223 = vadd.f32 %v6157, %v6191
      %v6224 = vadd.f32 %v6158, %v6192
      %v6225 = vadd.f32 %v6159, %v6193
      %v6226 = vadd.f32 %v6160, %v6194
      %v6227 = vadd.f32 %v6161, %v6195
      %v6228 = vadd.f32 %v6162, %v6196
      %v6229 = vadd.f32 %v6163, %v6197
      %v6230 = vadd.f32 %v6164, %v6198
      %v6231 = vld [vmem:[%s8 + $0x6] sm:$0x1]
      %v6232 = vperm.slane %v6231, 0
      %v6233 = vmul.f32 %v6232, %v5655
      %v6234 = vmul.f32 %v6232, %v5656
      %v6235 = vmul.f32 %v6232, %v5657
      %v6236 = vmul.f32 %v6232, %v5658
      %v6237 = vmul.f32 %v6232, %v5659
      %v6238 = vmul.f32 %v6232, %v5660
      %v6239 = vmul.f32 %v6232, %v5661
      %v6240 = vmul.f32 %v6232, %v5662
      %v6241 = vmul.f32 %v6232, %v5663
      %v6242 = vmul.f32 %v6232, %v5664
      %v6243 = vmul.f32 %v6232, %v5665
      %v6244 = vmul.f32 %v6232, %v5666
      %v6245 = vmul.f32 %v6232, %v5667
      %v6246 = vmul.f32 %v6232, %v5668
      %v6247 = vmul.f32 %v6232, %v5669
      %v6248 = vmul.f32 %v6232, %v5670
      %v6249 = vmul.f32 %v6232, %v5671
      %v6250 = vmul.f32 %v6232, %v5672
      %v6251 = vmul.f32 %v6232, %v5673
      %v6252 = vmul.f32 %v6232, %v5674
      %v6253 = vmul.f32 %v6232, %v5675
      %v6254 = vmul.f32 %v6232, %v5676
      %v6255 = vmul.f32 %v6232, %v5677
      %v6256 = vmul.f32 %v6232, %v5678
      %v6257 = vmul.f32 %v6232, %v5679
      %v6258 = vmul.f32 %v6232, %v5680
      %v6259 = vmul.f32 %v6232, %v5681
      %v6260 = vmul.f32 %v6232, %v5682
      %v6261 = vmul.f32 %v6232, %v5683
      %v6262 = vmul.f32 %v6232, %v5684
      %v6263 = vld [vmem:[%s8 + $0x7] sm:$0x1]
      %v6264 = vperm.slane %v6263, 0
      %v6265 = vmul.f32 %v6264, %v5334
      %v6266 = vmul.f32 %v6264, %v5335
      %v6267 = vmul.f32 %v6264, %v5336
      %v6268 = vmul.f32 %v6264, %v5337
      %v6269 = vmul.f32 %v6264, %v5338
      %v6270 = vmul.f32 %v6264, %v5339
      %v6271 = vmul.f32 %v6264, %v5340
      %v6272 = vmul.f32 %v6264, %v5341
      %v6273 = vmul.f32 %v6264, %v5342
      %v6274 = vmul.f32 %v6264, %v5343
      %v6275 = vmul.f32 %v6264, %v5344
      %v6276 = vmul.f32 %v6264, %v5345
      %v6277 = vmul.f32 %v6264, %v5346
      %v6278 = vmul.f32 %v6264, %v5347
      %v6279 = vmul.f32 %v6264, %v5348
      %v6280 = vmul.f32 %v6264, %v5349
      %v6281 = vmul.f32 %v6264, %v5350
      %v6282 = vmul.f32 %v6264, %v5351
      %v6283 = vmul.f32 %v6264, %v5352
      %v6284 = vmul.f32 %v6264, %v5353
      %v6285 = vmul.f32 %v6264, %v5354
      %v6286 = vmul.f32 %v6264, %v5355
      %v6287 = vmul.f32 %v6264, %v5356
      %v6288 = vmul.f32 %v6264, %v5357
      %v6289 = vmul.f32 %v6264, %v5358
      %v6290 = vmul.f32 %v6264, %v5359
      %v6291 = vmul.f32 %v6264, %v5360
      %v6292 = vmul.f32 %v6264, %v5361
      %v6293 = vmul.f32 %v6264, %v5362
      %v6294 = vmul.f32 %v6264, %v5363
      %v6295 = vadd.f32 %v6233, %v6265
      %v6296 = vadd.f32 %v6234, %v6266
      %v6297 = vadd.f32 %v6235, %v6267
      %v6298 = vadd.f32 %v6236, %v6268
      %v6299 = vadd.f32 %v6237, %v6269
      %v6300 = vadd.f32 %v6238, %v6270
      %v6301 = vadd.f32 %v6239, %v6271
      %v6302 = vadd.f32 %v6240, %v6272
      %v6303 = vadd.f32 %v6241, %v6273
      %v6304 = vadd.f32 %v6242, %v6274
      %v6305 = vadd.f32 %v6243, %v6275
      %v6306 = vadd.f32 %v6244, %v6276
      %v6307 = vadd.f32 %v6245, %v6277
      %v6308 = vadd.f32 %v6246, %v6278
      %v6309 = vadd.f32 %v6247, %v6279
      %v6310 = vadd.f32 %v6248, %v6280
      %v6311 = vadd.f32 %v6249, %v6281
      %v6312 = vadd.f32 %v6250, %v6282
      %v6313 = vadd.f32 %v6251, %v6283
      %v6314 = vadd.f32 %v6252, %v6284
      %v6315 = vadd.f32 %v6253, %v6285
      %v6316 = vadd.f32 %v6254, %v6286
      %v6317 = vadd.f32 %v6255, %v6287
      %v6318 = vadd.f32 %v6256, %v6288
      %v6319 = vadd.f32 %v6257, %v6289
      %v6320 = vadd.f32 %v6258, %v6290
      %v6321 = vadd.f32 %v6259, %v6291
      %v6322 = vadd.f32 %v6260, %v6292
      %v6323 = vadd.f32 %v6261, %v6293
      %v6324 = vadd.f32 %v6262, %v6294
      %v6325 = vld [vmem:[%s8 + $0x8] sm:$0x1]
      %v6326 = vperm.slane %v6325, 0
      %v6327 = vmul.f32 %v6326, %v5879
      %v6328 = vmul.f32 %v6326, %v5880
      %v6329 = vmul.f32 %v6326, %v5881
      %v6330 = vmul.f32 %v6326, %v5882
      %v6331 = vmul.f32 %v6326, %v5883
      %v6332 = vmul.f32 %v6326, %v5884
      %v6333 = vmul.f32 %v6326, %v5885
      %v6334 = vmul.f32 %v6326, %v5886
      %v6335 = vmul.f32 %v6326, %v5887
      %v6336 = vmul.f32 %v6326, %v5888
      %v6337 = vmul.f32 %v6326, %v5889
      %v6338 = vmul.f32 %v6326, %v5890
      %v6339 = vmul.f32 %v6326, %v5891
      %v6340 = vmul.f32 %v6326, %v5892
      %v6341 = vmul.f32 %v6326, %v5893
      %v6342 = vmul.f32 %v6326, %v5894
      %v6343 = vmul.f32 %v6326, %v5895
      %v6344 = vmul.f32 %v6326, %v5896
      %v6345 = vmul.f32 %v6326, %v5897
      %v6346 = vmul.f32 %v6326, %v5898
      %v6347 = vmul.f32 %v6326, %v5899
      %v6348 = vmul.f32 %v6326, %v5900
      %v6349 = vmul.f32 %v6326, %v5901
      %v6350 = vmul.f32 %v6326, %v5902
      %v6351 = vmul.f32 %v6326, %v5903
      %v6352 = vmul.f32 %v6326, %v5904
      %v6353 = vmul.f32 %v6326, %v5905
      %v6354 = vmul.f32 %v6326, %v5906
      %v6355 = vmul.f32 %v6326, %v5907
      %v6356 = vmul.f32 %v6326, %v5908
      %v6357 = vadd.f32 %v6295, %v6327
      %v6358 = vadd.f32 %v6296, %v6328
      %v6359 = vadd.f32 %v6297, %v6329
      %v6360 = vadd.f32 %v6298, %v6330
      %v6361 = vadd.f32 %v6299, %v6331
      %v6362 = vadd.f32 %v6300, %v6332
      %v6363 = vadd.f32 %v6301, %v6333
      %v6364 = vadd.f32 %v6302, %v6334
      %v6365 = vadd.f32 %v6303, %v6335
      %v6366 = vadd.f32 %v6304, %v6336
      %v6367 = vadd.f32 %v6305, %v6337
      %v6368 = vadd.f32 %v6306, %v6338
      %v6369 = vadd.f32 %v6307, %v6339
      %v6370 = vadd.f32 %v6308, %v6340
      %v6371 = vadd.f32 %v6309, %v6341
      %v6372 = vadd.f32 %v6310, %v6342
      %v6373 = vadd.f32 %v6311, %v6343
      %v6374 = vadd.f32 %v6312, %v6344
      %v6375 = vadd.f32 %v6313, %v6345
      %v6376 = vadd.f32 %v6314, %v6346
      %v6377 = vadd.f32 %v6315, %v6347
      %v6378 = vadd.f32 %v6316, %v6348
      %v6379 = vadd.f32 %v6317, %v6349
      %v6380 = vadd.f32 %v6318, %v6350
      %v6381 = vadd.f32 %v6319, %v6351
      %v6382 = vadd.f32 %v6320, %v6352
      %v6383 = vadd.f32 %v6321, %v6353
      %v6384 = vadd.f32 %v6322, %v6354
      %v6385 = vadd.f32 %v6323, %v6355
      %v6386 = vadd.f32 %v6324, %v6356
      %v6387 = vld [vmem:[%s8 + $0x9] sm:$0x1]
      %v6388 = vperm.slane %v6387, 0
      %v6389 = vadd.f32 %v6199, %v6388
      %v6390 = vadd.f32 %v6200, %v6388
      %v6391 = vadd.f32 %v6201, %v6388
      %v6392 = vadd.f32 %v6202, %v6388
      %v6393 = vadd.f32 %v6203, %v6388
      %v6394 = vadd.f32 %v6204, %v6388
      %v6395 = vadd.f32 %v6205, %v6388
      %v6396 = vadd.f32 %v6206, %v6388
      %v6397 = vadd.f32 %v6207, %v6388
      %v6398 = vadd.f32 %v6208, %v6388
      %v6399 = vadd.f32 %v6209, %v6388
      %v6400 = vadd.f32 %v6210, %v6388
      %v6401 = vadd.f32 %v6211, %v6388
      %v6402 = vadd.f32 %v6212, %v6388
      %v6403 = vadd.f32 %v6213, %v6388
      %v6404 = vadd.f32 %v6214, %v6388
      %v6405 = vadd.f32 %v6215, %v6388
      %v6406 = vadd.f32 %v6216, %v6388
      %v6407 = vadd.f32 %v6217, %v6388
      %v6408 = vadd.f32 %v6218, %v6388
      %v6409 = vadd.f32 %v6219, %v6388
      %v6410 = vadd.f32 %v6220, %v6388
      %v6411 = vadd.f32 %v6221, %v6388
      %v6412 = vadd.f32 %v6222, %v6388
      %v6413 = vadd.f32 %v6223, %v6388
      %v6414 = vadd.f32 %v6224, %v6388
      %v6415 = vadd.f32 %v6225, %v6388
      %v6416 = vadd.f32 %v6226, %v6388
      %v6417 = vadd.f32 %v6227, %v6388
      %v6418 = vadd.f32 %v6228, %v6388
      %v6419 = vadd.f32 %v6229, %v6388
      %v6420 = vadd.f32 %v6230, %v6388
      %v6421 = vadd.f32 %v6389, 0.0
      %v6422 = vadd.f32 %v6390, 0.0
      %v6423 = vadd.f32 %v6391, %v6035
      %v6424 = vadd.f32 %v6392, %v6036
      %v6425 = vadd.f32 %v6393, %v6037
      %v6426 = vadd.f32 %v6394, %v6038
      %v6427 = vadd.f32 %v6395, %v6039
      %v6428 = vadd.f32 %v6396, %v6040
      %v6429 = vadd.f32 %v6397, %v6041
      %v6430 = vadd.f32 %v6398, %v6042
      %v6431 = vadd.f32 %v6399, %v6043
      %v6432 = vadd.f32 %v6400, %v6044
      %v6433 = vadd.f32 %v6401, %v6045
      %v6434 = vadd.f32 %v6402, %v6046
      %v6435 = vadd.f32 %v6403, %v6047
      %v6436 = vadd.f32 %v6404, %v6048
      %v6437 = vadd.f32 %v6405, %v6049
      %v6438 = vadd.f32 %v6406, %v6050
      %v6439 = vadd.f32 %v6407, %v6051
      %v6440 = vadd.f32 %v6408, %v6052
      %v6441 = vadd.f32 %v6409, %v6053
      %v6442 = vadd.f32 %v6410, %v6054
      %v6443 = vadd.f32 %v6411, %v6055
      %v6444 = vadd.f32 %v6412, %v6056
      %v6445 = vadd.f32 %v6413, %v6057
      %v6446 = vadd.f32 %v6414, %v6058
      %v6447 = vadd.f32 %v6415, %v6059
      %v6448 = vadd.f32 %v6416, %v6060
      %v6449 = vadd.f32 %v6417, %v6061
      %v6450 = vadd.f32 %v6418, %v6062
      %v6451 = vadd.f32 %v6419, %v6063
      %v6452 = vadd.f32 %v6420, %v6064
      %v6453 = vadd.f32 %v6421, %v6357
      %v6454 = vadd.f32 %v6422, %v6358
      %v6455 = vadd.f32 %v6423, %v6359
      %v6456 = vadd.f32 %v6424, %v6360
      %v6457 = vadd.f32 %v6425, %v6361
      %v6458 = vadd.f32 %v6426, %v6362
      %v6459 = vadd.f32 %v6427, %v6363
      %v6460 = vadd.f32 %v6428, %v6364
      %v6461 = vadd.f32 %v6429, %v6365
      %v6462 = vadd.f32 %v6430, %v6366
      %v6463 = vadd.f32 %v6431, %v6367
      %v6464 = vadd.f32 %v6432, %v6368
      %v6465 = vadd.f32 %v6433, %v6369
      %v6466 = vadd.f32 %v6434, %v6370
      %v6467 = vadd.f32 %v6435, %v6371
      %v6468 = vadd.f32 %v6436, %v6372
      %v6469 = vadd.f32 %v6437, %v6373
      %v6470 = vadd.f32 %v6438, %v6374
      %v6471 = vadd.f32 %v6439, %v6375
      %v6472 = vadd.f32 %v6440, %v6376
      %v6473 = vadd.f32 %v6441, %v6377
      %v6474 = vadd.f32 %v6442, %v6378
      %v6475 = vadd.f32 %v6443, %v6379
      %v6476 = vadd.f32 %v6444, %v6380
      %v6477 = vadd.f32 %v6445, %v6381
      %v6478 = vadd.f32 %v6446, %v6382
      %v6479 = vadd.f32 %v6447, %v6383
      %v6480 = vadd.f32 %v6448, %v6384
      %v6481 = vadd.f32 %v6449, %v6385
      %v6482 = vadd.f32 %v6450, %v6386
      %v6483 = vadd.f32 %v6451, 0.0
      %v6484 = vadd.f32 %v6452, 0.0
      %6485 = vst.msk [vmem:[%s332] sm:$0xff] %vm373, %v6453
      %6486 = vst.msk [vmem:[%s332 + $0x8] sm:$0xff] %vm373, %v6454
      %6487 = vst.msk [vmem:[%s332 + $0x10] sm:$0xff] %vm373, %v6455
      %6488 = vst.msk [vmem:[%s332 + $0x18] sm:$0xff] %vm373, %v6456
      %6489 = vst.msk [vmem:[%s332 + $0x20] sm:$0xff] %vm373, %v6457
      %6490 = vst.msk [vmem:[%s332 + $0x28] sm:$0xff] %vm373, %v6458
      %6491 = vst.msk [vmem:[%s332 + $0x30] sm:$0xff] %vm373, %v6459
      %6492 = vst.msk [vmem:[%s332 + $0x38] sm:$0xff] %vm373, %v6460
      %6493 = vst.msk [vmem:[%s332 + $0x40] sm:$0xff] %vm373, %v6461
      %6494 = vst.msk [vmem:[%s332 + $0x48] sm:$0xff] %vm373, %v6462
      %6495 = vst.msk [vmem:[%s332 + $0x50] sm:$0xff] %vm373, %v6463
      %6496 = vst.msk [vmem:[%s332 + $0x58] sm:$0xff] %vm373, %v6464
      %6497 = vst.msk [vmem:[%s332 + $0x60] sm:$0xff] %vm373, %v6465
      %6498 = vst.msk [vmem:[%s332 + $0x68] sm:$0xff] %vm373, %v6466
      %6499 = vst.msk [vmem:[%s332 + $0x70] sm:$0xff] %vm373, %v6467
      %6500 = vst.msk [vmem:[%s332 + $0x78] sm:$0xff] %vm373, %v6468
      %6501 = vst.msk [vmem:[%s332 + $0x80] sm:$0xff] %vm373, %v6469
      %6502 = vst.msk [vmem:[%s332 + $0x88] sm:$0xff] %vm373, %v6470
      %6503 = vst.msk [vmem:[%s332 + $0x90] sm:$0xff] %vm373, %v6471
      %6504 = vst.msk [vmem:[%s332 + $0x98] sm:$0xff] %vm373, %v6472
      %6505 = vst.msk [vmem:[%s332 + $0xa0] sm:$0xff] %vm373, %v6473
      %6506 = vst.msk [vmem:[%s332 + $0xa8] sm:$0xff] %vm373, %v6474
      %6507 = vst.msk [vmem:[%s332 + $0xb0] sm:$0xff] %vm373, %v6475
      %6508 = vst.msk [vmem:[%s332 + $0xb8] sm:$0xff] %vm373, %v6476
      %6509 = vst.msk [vmem:[%s332 + $0xc0] sm:$0xff] %vm373, %v6477
      %6510 = vst.msk [vmem:[%s332 + $0xc8] sm:$0xff] %vm373, %v6478
      %6511 = vst.msk [vmem:[%s332 + $0xd0] sm:$0xff] %vm373, %v6479
      %6512 = vst.msk [vmem:[%s332 + $0xd8] sm:$0xff] %vm373, %v6480
      %6513 = vst.msk [vmem:[%s332 + $0xe0] sm:$0xff] %vm373, %v6481
      %6514 = vst.msk [vmem:[%s332 + $0xe8] sm:$0xff] %vm373, %v6482
      %6515 = vst.msk [vmem:[%s332 + $0xf0] sm:$0xff] %vm373, %v6483
      %6516 = vst.msk [vmem:[%s332 + $0xf8] sm:$0xff] %vm373, %v6484
      %p6517 = scmp.lt.s32.totalorder %s20, 1
      %s6518 = scalar_select %p6517, %s20, 1
      %s6519 = smul.addr %s6518, 32
      %s6520 = smul.addr %s6519, 8
      %s6521 = scalar_lea.vmem %s9, %s6520
      // Predicated region
      $region64: #{local_global_feature_mixing.1} parent=55 // pred_check
        %p6522 = pneg %p232
      $region65: #{local_global_feature_mixing.1} parent=55 // pred_check_branch
        %6524 = sbr.rel (%p6522) target = $region67
      $region66: #{local_global_feature_mixing.1} parent=55 // pred_region
        _
      $region67: #{local_global_feature_mixing.1} parent=55 // pred_fallthru
        _
    $region56: #{local_global_feature_mixing.1} parent=5 // pred_fallthru
      _
    %p6525 = scmp.le.s32.totalorder 2, %s15
    // Predicated region
    $region68: #{local_global_feature_mixing.1} parent=5 // pred_check
      %p6526 = pneg %p6525
    $region69: #{local_global_feature_mixing.1} parent=5 // pred_check_branch
      %6528 = sbr.rel (%p6526) target = $region71
    $region70: #{local_global_feature_mixing.1} parent=5 // pred_region
      %s6529 = ssub.s32 %s15, 2
      // Predicated region
      $region72: #{local_global_feature_mixing.1} parent=70 // pred_check
        %p6530 = pneg %p238
      $region73: #{local_global_feature_mixing.1} parent=70 // pred_check_branch
        %6532 = sbr.rel (%p6530) target = $region75
      $region74: #{local_global_feature_mixing.1} parent=70 // pred_region
        %p6533 = scmp.lt.s32.totalorder %s21, 1
        %s6534 = scalar_select %p6533, %s21, 1
        %s6535 = smul.addr %s6534, 32
        %s6536 = smul.addr %s6535, 8
        %s6537 = scalar_lea.vmem %s9, %s6536
      $region75: #{local_global_feature_mixing.1} parent=70 // pred_fallthru
        _
    $region71: #{local_global_feature_mixing.1} parent=5 // pred_fallthru
      _
  $region6: #{local_global_feature_mixing.1} parent=0 // loop_footer
    %s19 = sadd.s32 1, %s15
  $region7: #{local_global_feature_mixing.1} parent=0 // loop_footer_branch
    %14 = sbr.rel target = $region3
  $region8: #{local_global_feature_mixing.1} parent=0 // loop_exit
    _

</llo_original>
